<compile_context>
chip_gen: v7x
topology: tpu7x:2x2x1
jax: 0.10.0
libtpu: 0.0.40
codegen_flags: <defaults>
</compile_context>

<pallas_src>
import jax
import jax.numpy as jnp
from jax import lax
from jax.experimental import pallas as pl
from jax.experimental.pallas import tpu as pltpu

EPS = 1e-5
_VMEM_LIMIT = 32 * 1024 * 1024   # explicit scoped-VMEM budget; safe on v5e/v6e/v7x
_MAX_TILE_ROWS = 2048            # cap on flattened output rows per grid step


def _pick_tile(rows_out, max_tile=_MAX_TILE_ROWS):
    if rows_out <= max_tile:
        return rows_out
    for t in range(max_tile, 7, -1):
        if rows_out % t == 0 and t % 8 == 0:
            return t
    return rows_out


# --------------------------------------------------------------------------
# Pallas kernel: fused (sum of row-shifted matmuls) + BN-shift + ReLU
# --------------------------------------------------------------------------
def _fused_shifted_matmul_bn_relu(a, wk, shift, *, offsets, rows_out, out_dtype):
    """a: (N, Mp, K) bf16; wk: (T, K, Cout) bf16; shift: (1, Cout) f32.
       y[n, m, :] = relu(sum_t a[n, m + offsets[t], :] @ wk[t] + shift), m in [0, rows_out)."""
    N, Mp, K = a.shape
    T, K2, Cout = wk.shape
    assert K2 == K and T == len(offsets)
    tm = _pick_tile(rows_out)
    assert rows_out % tm == 0
    grid = (N, rows_out // tm)
    aligned = (tm % 8 == 0) and all(o % 8 == 0 for o in offsets)

    def kernel(x_ref, w_ref, s_ref, o_ref):
        base = pl.program_id(1) * tm
        acc = jnp.zeros((tm, Cout), jnp.float32)
        for t in range(T):                               # static, unrolled tap loop
            start = base + offsets[t]
            if aligned:
                start = pl.multiple_of(start, 8)
            blk = x_ref[0, pl.ds(start, tm), :]          # (tm, K) bf16, aligned slice
            acc = acc + jnp.dot(blk, w_ref[t],
                                preferred_element_type=jnp.float32)  # MXU, f32 acc
        y = jnp.maximum(acc + s_ref[...], 0.0)           # fused BN shift + ReLU (f32)
        o_ref[0] = y.astype(o_ref.dtype)

    return pl.pallas_call(
        kernel,
        out_shape=jax.ShapeDtypeStruct((N, rows_out, Cout), out_dtype),
        grid=grid,
        in_specs=[
            pl.BlockSpec((1, Mp, K), lambda n, i: (n, 0, 0)),    # row-padded image resident in VMEM
            pl.BlockSpec((T, K, Cout), lambda n, i: (0, 0, 0)),  # folded (scale*W) bf16 weights
            pl.BlockSpec((1, Cout), lambda n, i: (0, 0)),        # fused BN shift (f32)
        ],
        out_specs=pl.BlockSpec((1, tm, Cout), lambda n, i: (n, i, 0)),
        compiler_params=pltpu.CompilerParams(
            dimension_semantics=("parallel", "arbitrary"),
            vmem_limit_bytes=_VMEM_LIMIT,
        ),
    )(a, wk, shift)


# --------------------------------------------------------------------------
# Conv-BN-ReLU glue (host-side prep: pad + 3x width gather, BN folding)
# --------------------------------------------------------------------------
def _conv3x3_bn_relu(x_nhwc, w_oihw, bias, gamma, beta, mean, var, *, stride, out_dtype):
    N, H, W, C = x_nhwc.shape
    Cout = w_oihw.shape[0]

    scale = gamma * lax.rsqrt(var + EPS)
    shift = (beta + (bias - mean) * scale).reshape(1, Cout).astype(jnp.float32)
    wk = jnp.transpose(w_oihw, (2, 3, 1, 0)) * scale[None, None, None, :]  # (kh,kw,Cin,Cout), BN scale folded

    xp = jnp.pad(x_nhwc, ((0, 0), (1, 1), (1, 1), (0, 0)))                 # 1px zero border

    if stride == 1:
        # host: 3x width (kw) gather ; kernel: row (kh) gather via aligned pl.ds
        wg = jnp.concatenate([xp[:, :, kw:kw + W, :] for kw in range(3)], axis=-1)   # (N,H+2,W,3C)
        a = wg.reshape(N, (H + 2) * W, 3 * C).astype(jnp.bfloat16)
        wk = wk.reshape(3, 3 * C, Cout).astype(jnp.bfloat16)
        offsets = (0, W, 2 * W)
        rows_out, out_hw = H * W, (H, W)
    else:
        assert stride == 2 and H % 2 == 0 and W % 2 == 0
        H2, W2 = H // 2, W // 2
        # gather only the taps the stride-2 output actually needs (4x fewer pixels)
        wg = jnp.concatenate([xp[:, :, kw:kw + W - 1:2, :] for kw in range(3)], axis=-1)  # (N,H+2,W2,3C)
        a = jnp.concatenate([wg[:, kh:kh + H - 1:2, :, :] for kh in range(3)], axis=-1)   # (N,H2,W2,9C)
        a = a.reshape(N, H2 * W2, 9 * C).astype(jnp.bfloat16)
        wk = wk.reshape(1, 9 * C, Cout).astype(jnp.bfloat16)
        offsets = (0,)
        rows_out, out_hw = H2 * W2, (H2, W2)

    y = _fused_shifted_matmul_bn_relu(a, wk, shift, offsets=offsets,
                                      rows_out=rows_out, out_dtype=out_dtype)
    return y.reshape(N, out_hw[0], out_hw[1], Cout)


def downsample_layer_forward(x_nchw, p):
    """DownsampleLayer.forward: returns (out, out_2), both NCHW float32."""
    x = jnp.transpose(x_nchw, (0, 2, 3, 1))  # NHWC: channels in the lane dim

    h1 = _conv3x3_bn_relu(x, p["w1"], p["b1"], p["g1"], p["be1"], p["m1"], p["v1"],
                          stride=1, out_dtype=jnp.bfloat16)     # internal only -> bf16
    out = _conv3x3_bn_relu(h1, p["w2"], p["b2"], p["g2"], p["be2"], p["m2"], p["v2"],
                           stride=1, out_dtype=jnp.float32)     # returned
    out2 = _conv3x3_bn_relu(out, p["w3"], p["b3"], p["g3"], p["be3"], p["m3"], p["v3"],
                            stride=2, out_dtype=jnp.float32)    # returned

    return (jnp.transpose(out, (0, 3, 1, 2)),
            jnp.transpose(out2, (0, 3, 1, 2)))


# --------------------------------------------------------------------------
# Pure-JAX (XLA conv) reference with matching bf16 numerics
# --------------------------------------------------------------------------
def _ref_cbr(x_nchw, w, b, g, be, m, v, stride):
    s = g * lax.rsqrt(v + EPS)
    wf = (w * s[:, None, None, None]).astype(jnp.bfloat16)
    shift = be + (b - m) * s
    y = lax.conv_general_dilated(
        x_nchw.astype(jnp.bfloat16), wf,
        window_strides=(stride, stride), padding=((1, 1), (1, 1)),
        dimension_numbers=("NCHW", "OIHW", "NCHW"),
        preferred_element_type=jnp.float32)
    return jnp.maximum(y + shift[None, :, None, None], 0.0)


def ref_forward(x, p):
    h = _ref_cbr(x, p["w1"], p["b1"], p["g1"], p["be1"], p["m1"], p["v1"], 1)
    h = h.astype(jnp.bfloat16).astype(jnp.float32)   # mirror bf16 storage of h1
    out = _ref_cbr(h, p["w2"], p["b2"], p["g2"], p["be2"], p["m2"], p["v2"], 1)
    out2 = _ref_cbr(out, p["w3"], p["b3"], p["g3"], p["be3"], p["m3"], p["v3"], 2)
    return out, out2


# --------------------------------------------------------------------------
def make_params(key, in_ch, out_ch):
    ks = jax.random.split(key, 9)

    def bn(k, c):
        k1, k2, k3, k4 = jax.random.split(k, 4)
        return (1.0 + 0.1 * jax.random.normal(k1, (c,)),
                0.1 * jax.random.normal(k2, (c,)),
                0.1 * jax.random.normal(k3, (c,)),
                0.5 + jax.random.uniform(k4, (c,)))

    g1, be1, m1, v1 = bn(ks[2], out_ch)
    g2, be2, m2, v2 = bn(ks[5], out_ch)
    g3, be3, m3, v3 = bn(ks[8], out_ch)
    return dict(
        w1=0.2 * jax.random.normal(ks[0], (out_ch, in_ch, 3, 3), jnp.float32),
        b1=0.1 * jax.random.normal(ks[1], (out_ch,), jnp.float32),
        g1=g1, be1=be1, m1=m1, v1=v1,
        w2=0.2 * jax.random.normal(ks[3], (out_ch, out_ch, 3, 3), jnp.float32),
        b2=0.1 * jax.random.normal(ks[4], (out_ch,), jnp.float32),
        g2=g2, be2=be2, m2=m2, v2=v2,
        w3=0.2 * jax.random.normal(ks[6], (out_ch, out_ch, 3, 3), jnp.float32),
        b3=0.1 * jax.random.normal(ks[7], (out_ch,), jnp.float32),
        g3=g3, be3=be3, m3=m3, v3=v3,
    )


if __name__ == "__main__":
    key = jax.random.PRNGKey(0)
    kx, kp = jax.random.split(key)

    N, in_ch, out_ch, H, W = 2, 4, 8, 16, 16
    x = jax.random.normal(kx, (N, in_ch, H, W), jnp.float32)   # NCHW
    params = make_params(kp, in_ch, out_ch)

    fwd = jax.jit(downsample_layer_forward)
    out, out2 = jax.block_until_ready(fwd(x, params))
    assert out.shape == (N, out_ch, H, W), out.shape
    assert out2.shape == (N, out_ch, H // 2, W // 2), out2.shape

    out_ref, out2_ref = ref_forward(x, params)
    err1 = float(jnp.max(jnp.abs(out - out_ref)))
    err2 = float(jnp.max(jnp.abs(out2 - out2_ref)))
    assert jnp.allclose(out, out_ref, atol=2e-2, rtol=2e-2), err1
    assert jnp.allclose(out2, out2_ref, atol=2e-2, rtol=2e-2), err2

    print("KERNEL_OK")
</pallas_src>

<mosaic_0001>
module attributes {stable_mosaic.version = 11 : i64} {
  func.func @kernel(%arg0: i32, %arg1: i32, %arg2: memref<1x288x12xbf16, #tpu.memory_space<vmem>>, %arg3: memref<3x12x8xbf16, #tpu.memory_space<vmem>>, %arg4: memref<1x8xf32, #tpu.memory_space<vmem>>, %arg5: memref<1x256x8xbf16, #tpu.memory_space<vmem>>) attributes {dimension_semantics = [#tpu.dimension_semantics<parallel>, #tpu.dimension_semantics<arbitrary>], iteration_bounds = array<i64: 2, 1>, scalar_prefetch = 0 : i64, scratch_operands = 0 : i64, tpu.core_type = #tpu.core_type<tc>, window_params = [{transform_indices = @transform_0, window_bounds = array<i64: 1, 288, 12>}, {pipeline_mode = #tpu.pipeline_mode<synchronous>, transform_indices = @transform_1, window_bounds = array<i64: 3, 12, 8>}, {pipeline_mode = #tpu.pipeline_mode<synchronous>, transform_indices = @transform_2, window_bounds = array<i64: 1, 8>}, {transform_indices = @transform_3, window_bounds = array<i64: 1, 256, 8>}]} {
    %c256_i32 = arith.constant 256 : i32
    %0 = arith.muli %arg1, %c256_i32 : i32
    %cst = arith.constant 0.000000e+00 : f32
    %1 = vector.broadcast %cst : f32 to vector<256x8xf32>
    %c0_i32 = arith.constant 0 : i32
    %2 = arith.addi %0, %c0_i32 : i32
    %3 = tpu.assume_multiple %2, 8 : i32
    %c0 = arith.constant 0 : index
    %4 = arith.index_cast %3 : i32 to index
    %c0_0 = arith.constant 0 : index
    %5 = vector.load %arg2[%c0, %4, %c0_0] : memref<1x288x12xbf16, #tpu.memory_space<vmem>>, vector<1x256x12xbf16>
    %6 = vector.shape_cast %5 : vector<1x256x12xbf16> to vector<256x12xbf16>
    %c0_1 = arith.constant 0 : index
    %c0_2 = arith.constant 0 : index
    %c0_3 = arith.constant 0 : index
    %7 = vector.load %arg3[%c0_1, %c0_2, %c0_3] : memref<3x12x8xbf16, #tpu.memory_space<vmem>>, vector<1x12x8xbf16>
    %8 = vector.shape_cast %7 : vector<1x12x8xbf16> to vector<12x8xbf16>
    %cst_4 = arith.constant dense<0.000000e+00> : vector<256x8xf32>
    %9 = tpu.matmul %6, %8, %cst_4 {dimension_numbers = #tpu.dot_dimension_numbers<[1], [0], [0], [1], [0, 0, 1, 1], [], []>} : vector<256x12xbf16>, vector<12x8xbf16>, vector<256x8xf32> -> vector<256x8xf32>
    %10 = arith.addf %1, %9 : vector<256x8xf32>
    %c16_i32 = arith.constant 16 : i32
    %11 = arith.addi %0, %c16_i32 : i32
    %12 = tpu.assume_multiple %11, 8 : i32
    %c0_5 = arith.constant 0 : index
    %13 = arith.index_cast %12 : i32 to index
    %c0_6 = arith.constant 0 : index
    %14 = vector.load %arg2[%c0_5, %13, %c0_6] : memref<1x288x12xbf16, #tpu.memory_space<vmem>>, vector<1x256x12xbf16>
    %15 = vector.shape_cast %14 : vector<1x256x12xbf16> to vector<256x12xbf16>
    %c1 = arith.constant 1 : index
    %c0_7 = arith.constant 0 : index
    %c0_8 = arith.constant 0 : index
    %16 = vector.load %arg3[%c1, %c0_7, %c0_8] : memref<3x12x8xbf16, #tpu.memory_space<vmem>>, vector<1x12x8xbf16>
    %17 = vector.shape_cast %16 : vector<1x12x8xbf16> to vector<12x8xbf16>
    %cst_9 = arith.constant dense<0.000000e+00> : vector<256x8xf32>
    %18 = tpu.matmul %15, %17, %cst_9 {dimension_numbers = #tpu.dot_dimension_numbers<[1], [0], [0], [1], [0, 0, 1, 1], [], []>} : vector<256x12xbf16>, vector<12x8xbf16>, vector<256x8xf32> -> vector<256x8xf32>
    %19 = arith.addf %10, %18 : vector<256x8xf32>
    %c32_i32 = arith.constant 32 : i32
    %20 = arith.addi %0, %c32_i32 : i32
    %21 = tpu.assume_multiple %20, 8 : i32
    %c0_10 = arith.constant 0 : index
    %22 = arith.index_cast %21 : i32 to index
    %c0_11 = arith.constant 0 : index
    %23 = vector.load %arg2[%c0_10, %22, %c0_11] : memref<1x288x12xbf16, #tpu.memory_space<vmem>>, vector<1x256x12xbf16>
    %24 = vector.shape_cast %23 : vector<1x256x12xbf16> to vector<256x12xbf16>
    %c2 = arith.constant 2 : index
    %c0_12 = arith.constant 0 : index
    %c0_13 = arith.constant 0 : index
    %25 = vector.load %arg3[%c2, %c0_12, %c0_13] : memref<3x12x8xbf16, #tpu.memory_space<vmem>>, vector<1x12x8xbf16>
    %26 = vector.shape_cast %25 : vector<1x12x8xbf16> to vector<12x8xbf16>
    %cst_14 = arith.constant dense<0.000000e+00> : vector<256x8xf32>
    %27 = tpu.matmul %24, %26, %cst_14 {dimension_numbers = #tpu.dot_dimension_numbers<[1], [0], [0], [1], [0, 0, 1, 1], [], []>} : vector<256x12xbf16>, vector<12x8xbf16>, vector<256x8xf32> -> vector<256x8xf32>
    %28 = arith.addf %19, %27 : vector<256x8xf32>
    %c0_15 = arith.constant 0 : index
    %c0_16 = arith.constant 0 : index
    %29 = vector.load %arg4[%c0_15, %c0_16] : memref<1x8xf32, #tpu.memory_space<vmem>>, vector<1x8xf32>
    %30 = vector.broadcast %29 : vector<1x8xf32> to vector<256x8xf32>
    %31 = arith.addf %28, %30 : vector<256x8xf32>
    %cst_17 = arith.constant 0.000000e+00 : f32
    %32 = vector.broadcast %cst_17 : f32 to vector<256x8xf32>
    %33 = arith.maximumf %31, %32 : vector<256x8xf32>
    %34 = arith.truncf %33 : vector<256x8xf32> to vector<256x8xbf16>
    %c0_18 = arith.constant 0 : index
    %c0_19 = arith.constant 0 : index
    %c0_20 = arith.constant 0 : index
    %35 = vector.load %arg5[%c0_18, %c0_19, %c0_20] : memref<1x256x8xbf16, #tpu.memory_space<vmem>>, vector<1x256x8xbf16>
    %36 = vector.shape_cast %35 : vector<1x256x8xbf16> to vector<256x8xbf16>
    %37 = vector.shape_cast %34 : vector<256x8xbf16> to vector<1x256x8xbf16>
    tpu.vector_store %arg5[%c0_18, %c0_19, %c0_20], %37 {strides = array<i32>} : memref<1x256x8xbf16, #tpu.memory_space<vmem>>, vector<1x256x8xbf16>,
    return
  }
  func.func @transform_0(%arg0: i32, %arg1: i32) -> (i32, i32, i32) {
    %c0_i32 = arith.constant 0 : i32
    %c0_i32_0 = arith.constant 0 : i32
    %c0_i32_1 = arith.constant 0 : i32
    return %arg0, %c0_i32, %c0_i32_0 : i32, i32, i32
  }
  func.func @transform_1(%arg0: i32, %arg1: i32) -> (i32, i32, i32) {
    %c0_i32 = arith.constant 0 : i32
    %c0_i32_0 = arith.constant 0 : i32
    %c0_i32_1 = arith.constant 0 : i32
    %c0_i32_2 = arith.constant 0 : i32
    return %c0_i32, %c0_i32_0, %c0_i32_1 : i32, i32, i32
  }
  func.func @transform_2(%arg0: i32, %arg1: i32) -> (i32, i32) {
    %c0_i32 = arith.constant 0 : i32
    %c0_i32_0 = arith.constant 0 : i32
    %c0_i32_1 = arith.constant 0 : i32
    return %c0_i32, %c0_i32_0 : i32, i32
  }
  func.func @transform_3(%arg0: i32, %arg1: i32) -> (i32, i32, i32) {
    %c0_i32 = arith.constant 0 : i32
    %c0_i32_0 = arith.constant 0 : i32
    return %arg0, %arg1, %c0_i32 : i32, i32, i32
  }
}

module attributes {stable_mosaic.version = 11 : i64} {
  func.func @kernel(%arg0: i32, %arg1: i32, %arg2: memref<1x288x24xbf16, #tpu.memory_space<vmem>>, %arg3: memref<3x24x8xbf16, #tpu.memory_space<vmem>>, %arg4: memref<1x8xf32, #tpu.memory_space<vmem>>, %arg5: memref<1x256x8xf32, #tpu.memory_space<vmem>>) attributes {dimension_semantics = [#tpu.dimension_semantics<parallel>, #tpu.dimension_semantics<arbitrary>], iteration_bounds = array<i64: 2, 1>, scalar_prefetch = 0 : i64, scratch_operands = 0 : i64, tpu.core_type = #tpu.core_type<tc>, window_params = [{transform_indices = @transform_0, window_bounds = array<i64: 1, 288, 24>}, {pipeline_mode = #tpu.pipeline_mode<synchronous>, transform_indices = @transform_1, window_bounds = array<i64: 3, 24, 8>}, {pipeline_mode = #tpu.pipeline_mode<synchronous>, transform_indices = @transform_2, window_bounds = array<i64: 1, 8>}, {transform_indices = @transform_3, window_bounds = array<i64: 1, 256, 8>}]} {
    %c256_i32 = arith.constant 256 : i32
    %0 = arith.muli %arg1, %c256_i32 : i32
    %cst = arith.constant 0.000000e+00 : f32
    %1 = vector.broadcast %cst : f32 to vector<256x8xf32>
    %c0_i32 = arith.constant 0 : i32
    %2 = arith.addi %0, %c0_i32 : i32
    %3 = tpu.assume_multiple %2, 8 : i32
    %c0 = arith.constant 0 : index
    %4 = arith.index_cast %3 : i32 to index
    %c0_0 = arith.constant 0 : index
    %5 = vector.load %arg2[%c0, %4, %c0_0] : memref<1x288x24xbf16, #tpu.memory_space<vmem>>, vector<1x256x24xbf16>
    %6 = vector.shape_cast %5 : vector<1x256x24xbf16> to vector<256x24xbf16>
    %c0_1 = arith.constant 0 : index
    %c0_2 = arith.constant 0 : index
    %c0_3 = arith.constant 0 : index
    %7 = vector.load %arg3[%c0_1, %c0_2, %c0_3] : memref<3x24x8xbf16, #tpu.memory_space<vmem>>, vector<1x24x8xbf16>
    %8 = vector.shape_cast %7 : vector<1x24x8xbf16> to vector<24x8xbf16>
    %cst_4 = arith.constant dense<0.000000e+00> : vector<256x8xf32>
    %9 = tpu.matmul %6, %8, %cst_4 {dimension_numbers = #tpu.dot_dimension_numbers<[1], [0], [0], [1], [0, 0, 1, 1], [], []>} : vector<256x24xbf16>, vector<24x8xbf16>, vector<256x8xf32> -> vector<256x8xf32>
    %10 = arith.addf %1, %9 : vector<256x8xf32>
    %c16_i32 = arith.constant 16 : i32
    %11 = arith.addi %0, %c16_i32 : i32
    %12 = tpu.assume_multiple %11, 8 : i32
    %c0_5 = arith.constant 0 : index
    %13 = arith.index_cast %12 : i32 to index
    %c0_6 = arith.constant 0 : index
    %14 = vector.load %arg2[%c0_5, %13, %c0_6] : memref<1x288x24xbf16, #tpu.memory_space<vmem>>, vector<1x256x24xbf16>
    %15 = vector.shape_cast %14 : vector<1x256x24xbf16> to vector<256x24xbf16>
    %c1 = arith.constant 1 : index
    %c0_7 = arith.constant 0 : index
    %c0_8 = arith.constant 0 : index
    %16 = vector.load %arg3[%c1, %c0_7, %c0_8] : memref<3x24x8xbf16, #tpu.memory_space<vmem>>, vector<1x24x8xbf16>
    %17 = vector.shape_cast %16 : vector<1x24x8xbf16> to vector<24x8xbf16>
    %cst_9 = arith.constant dense<0.000000e+00> : vector<256x8xf32>
    %18 = tpu.matmul %15, %17, %cst_9 {dimension_numbers = #tpu.dot_dimension_numbers<[1], [0], [0], [1], [0, 0, 1, 1], [], []>} : vector<256x24xbf16>, vector<24x8xbf16>, vector<256x8xf32> -> vector<256x8xf32>
    %19 = arith.addf %10, %18 : vector<256x8xf32>
    %c32_i32 = arith.constant 32 : i32
    %20 = arith.addi %0, %c32_i32 : i32
    %21 = tpu.assume_multiple %20, 8 : i32
    %c0_10 = arith.constant 0 : index
    %22 = arith.index_cast %21 : i32 to index
    %c0_11 = arith.constant 0 : index
    %23 = vector.load %arg2[%c0_10, %22, %c0_11] : memref<1x288x24xbf16, #tpu.memory_space<vmem>>, vector<1x256x24xbf16>
    %24 = vector.shape_cast %23 : vector<1x256x24xbf16> to vector<256x24xbf16>
    %c2 = arith.constant 2 : index
    %c0_12 = arith.constant 0 : index
    %c0_13 = arith.constant 0 : index
    %25 = vector.load %arg3[%c2, %c0_12, %c0_13] : memref<3x24x8xbf16, #tpu.memory_space<vmem>>, vector<1x24x8xbf16>
    %26 = vector.shape_cast %25 : vector<1x24x8xbf16> to vector<24x8xbf16>
    %cst_14 = arith.constant dense<0.000000e+00> : vector<256x8xf32>
    %27 = tpu.matmul %24, %26, %cst_14 {dimension_numbers = #tpu.dot_dimension_numbers<[1], [0], [0], [1], [0, 0, 1, 1], [], []>} : vector<256x24xbf16>, vector<24x8xbf16>, vector<256x8xf32> -> vector<256x8xf32>
    %28 = arith.addf %19, %27 : vector<256x8xf32>
    %c0_15 = arith.constant 0 : index
    %c0_16 = arith.constant 0 : index
    %29 = vector.load %arg4[%c0_15, %c0_16] : memref<1x8xf32, #tpu.memory_space<vmem>>, vector<1x8xf32>
    %30 = vector.broadcast %29 : vector<1x8xf32> to vector<256x8xf32>
    %31 = arith.addf %28, %30 : vector<256x8xf32>
    %cst_17 = arith.constant 0.000000e+00 : f32
    %32 = vector.broadcast %cst_17 : f32 to vector<256x8xf32>
    %33 = arith.maximumf %31, %32 : vector<256x8xf32>
    %c0_18 = arith.constant 0 : index
    %c0_19 = arith.constant 0 : index
    %c0_20 = arith.constant 0 : index
    %34 = vector.load %arg5[%c0_18, %c0_19, %c0_20] : memref<1x256x8xf32, #tpu.memory_space<vmem>>, vector<1x256x8xf32>
    %35 = vector.shape_cast %34 : vector<1x256x8xf32> to vector<256x8xf32>
    %36 = vector.shape_cast %33 : vector<256x8xf32> to vector<1x256x8xf32>
    tpu.vector_store %arg5[%c0_18, %c0_19, %c0_20], %36 {strides = array<i32>} : memref<1x256x8xf32, #tpu.memory_space<vmem>>, vector<1x256x8xf32>,
    return
  }
  func.func @transform_0(%arg0: i32, %arg1: i32) -> (i32, i32, i32) {
    %c0_i32 = arith.constant 0 : i32
    %c0_i32_0 = arith.constant 0 : i32
    %c0_i32_1 = arith.constant 0 : i32
    return %arg0, %c0_i32, %c0_i32_0 : i32, i32, i32
  }
  func.func @transform_1(%arg0: i32, %arg1: i32) -> (i32, i32, i32) {
    %c0_i32 = arith.constant 0 : i32
    %c0_i32_0 = arith.constant 0 : i32
    %c0_i32_1 = arith.constant 0 : i32
    %c0_i32_2 = arith.constant 0 : i32
    return %c0_i32, %c0_i32_0, %c0_i32_1 : i32, i32, i32
  }
  func.func @transform_2(%arg0: i32, %arg1: i32) -> (i32, i32) {
    %c0_i32 = arith.constant 0 : i32
    %c0_i32_0 = arith.constant 0 : i32
    %c0_i32_1 = arith.constant 0 : i32
    return %c0_i32, %c0_i32_0 : i32, i32
  }
  func.func @transform_3(%arg0: i32, %arg1: i32) -> (i32, i32, i32) {
    %c0_i32 = arith.constant 0 : i32
    %c0_i32_0 = arith.constant 0 : i32
    return %arg0, %arg1, %c0_i32 : i32, i32, i32
  }
}

module attributes {stable_mosaic.version = 11 : i64} {
  func.func @kernel(%arg0: i32, %arg1: i32, %arg2: memref<1x64x72xbf16, #tpu.memory_space<vmem>>, %arg3: memref<1x72x8xbf16, #tpu.memory_space<vmem>>, %arg4: memref<1x8xf32, #tpu.memory_space<vmem>>, %arg5: memref<1x64x8xf32, #tpu.memory_space<vmem>>) attributes {dimension_semantics = [#tpu.dimension_semantics<parallel>, #tpu.dimension_semantics<arbitrary>], iteration_bounds = array<i64: 2, 1>, scalar_prefetch = 0 : i64, scratch_operands = 0 : i64, tpu.core_type = #tpu.core_type<tc>, window_params = [{transform_indices = @transform_0, window_bounds = array<i64: 1, 64, 72>}, {pipeline_mode = #tpu.pipeline_mode<synchronous>, transform_indices = @transform_1, window_bounds = array<i64: 1, 72, 8>}, {pipeline_mode = #tpu.pipeline_mode<synchronous>, transform_indices = @transform_2, window_bounds = array<i64: 1, 8>}, {transform_indices = @transform_3, window_bounds = array<i64: 1, 64, 8>}]} {
    %c64_i32 = arith.constant 64 : i32
    %0 = arith.muli %arg1, %c64_i32 : i32
    %cst = arith.constant 0.000000e+00 : f32
    %1 = vector.broadcast %cst : f32 to vector<64x8xf32>
    %c0_i32 = arith.constant 0 : i32
    %2 = arith.addi %0, %c0_i32 : i32
    %3 = tpu.assume_multiple %2, 8 : i32
    %c0 = arith.constant 0 : index
    %4 = arith.index_cast %3 : i32 to index
    %c0_0 = arith.constant 0 : index
    %5 = vector.load %arg2[%c0, %4, %c0_0] : memref<1x64x72xbf16, #tpu.memory_space<vmem>>, vector<1x64x72xbf16>
    %6 = vector.shape_cast %5 : vector<1x64x72xbf16> to vector<64x72xbf16>
    %c0_1 = arith.constant 0 : index
    %c0_2 = arith.constant 0 : index
    %c0_3 = arith.constant 0 : index
    %7 = vector.load %arg3[%c0_1, %c0_2, %c0_3] : memref<1x72x8xbf16, #tpu.memory_space<vmem>>, vector<1x72x8xbf16>
    %8 = vector.shape_cast %7 : vector<1x72x8xbf16> to vector<72x8xbf16>
    %cst_4 = arith.constant dense<0.000000e+00> : vector<64x8xf32>
    %9 = tpu.matmul %6, %8, %cst_4 {dimension_numbers = #tpu.dot_dimension_numbers<[1], [0], [0], [1], [0, 0, 1, 1], [], []>} : vector<64x72xbf16>, vector<72x8xbf16>, vector<64x8xf32> -> vector<64x8xf32>
    %10 = arith.addf %1, %9 : vector<64x8xf32>
    %c0_5 = arith.constant 0 : index
    %c0_6 = arith.constant 0 : index
    %11 = vector.load %arg4[%c0_5, %c0_6] : memref<1x8xf32, #tpu.memory_space<vmem>>, vector<1x8xf32>
    %12 = vector.broadcast %11 : vector<1x8xf32> to vector<64x8xf32>
    %13 = arith.addf %10, %12 : vector<64x8xf32>
    %cst_7 = arith.constant 0.000000e+00 : f32
    %14 = vector.broadcast %cst_7 : f32 to vector<64x8xf32>
    %15 = arith.maximumf %13, %14 : vector<64x8xf32>
    %c0_8 = arith.constant 0 : index
    %c0_9 = arith.constant 0 : index
    %c0_10 = arith.constant 0 : index
    %16 = vector.load %arg5[%c0_8, %c0_9, %c0_10] : memref<1x64x8xf32, #tpu.memory_space<vmem>>, vector<1x64x8xf32>
    %17 = vector.shape_cast %16 : vector<1x64x8xf32> to vector<64x8xf32>
    %18 = vector.shape_cast %15 : vector<64x8xf32> to vector<1x64x8xf32>
    tpu.vector_store %arg5[%c0_8, %c0_9, %c0_10], %18 {strides = array<i32>} : memref<1x64x8xf32, #tpu.memory_space<vmem>>, vector<1x64x8xf32>,
    return
  }
  func.func @transform_0(%arg0: i32, %arg1: i32) -> (i32, i32, i32) {
    %c0_i32 = arith.constant 0 : i32
    %c0_i32_0 = arith.constant 0 : i32
    %c0_i32_1 = arith.constant 0 : i32
    return %arg0, %c0_i32, %c0_i32_0 : i32, i32, i32
  }
  func.func @transform_1(%arg0: i32, %arg1: i32) -> (i32, i32, i32) {
    %c0_i32 = arith.constant 0 : i32
    %c0_i32_0 = arith.constant 0 : i32
    %c0_i32_1 = arith.constant 0 : i32
    %c0_i32_2 = arith.constant 0 : i32
    return %c0_i32, %c0_i32_0, %c0_i32_1 : i32, i32, i32
  }
  func.func @transform_2(%arg0: i32, %arg1: i32) -> (i32, i32) {
    %c0_i32 = arith.constant 0 : i32
    %c0_i32_0 = arith.constant 0 : i32
    %c0_i32_1 = arith.constant 0 : i32
    return %c0_i32, %c0_i32_0 : i32, i32
  }
  func.func @transform_3(%arg0: i32, %arg1: i32) -> (i32, i32, i32) {
    %c0_i32 = arith.constant 0 : i32
    %c0_i32_0 = arith.constant 0 : i32
    return %arg0, %arg1, %c0_i32 : i32, i32, i32
  }
}

</mosaic_0001>

<llo_original>
// kernel: downsample_layer_forward.3
$region0: #{downsample_layer_forward.3}
  #allocation0 [shape = 'u32[]', space=smem, size = 0x4, offset = 0x4, fixed_abs, tag = 'smem constant byte address 0x4 - core index']
  #allocation1 [shape = 'u32[144,128]{1,0:T(1,128)}', space=vmem, size = 0x12000, scoped, tag = 'internal scratch']
  %s0 = inlined_call_operand.vmem [shape: bf16[2,288,12], index: 0, kind: input, shape index: {}]
  %s1 = inlined_call_operand.vmem [shape: bf16[3,12,8], index: 1, kind: input, shape index: {}]
  %s2 = inlined_call_operand.vmem [shape: f32[1,8], index: 2, kind: input, shape index: {}]
  %s3 = inlined_call_operand.vmem [shape: bf16[2,256,8], index: 3, kind: output, shape index: {}]
  %s4 = sld [smem:[#allocation0]]
  $region45: #{downsample_layer_forward.3} parent=0
    _
  %s6 = ssub.s32 1, %s4
  %s7 = scalar_select 0, %s6, %s4
  loop: start=0, step=1, limit=4
  $region2: #{downsample_layer_forward.3} parent=0 // loop_pre_header
    _
  $region3: #{downsample_layer_forward.3} parent=0 // loop_header
    %s9 = sphi 0, %s13
    %p10 = scmp.ge.s32.totalorder %s9, 4
    %s16 = sphi 0, %s28
    %s17 = sphi 0, %s24
    %s18 = sphi 0, %s16
    %s19 = sphi 0, %s17
    %s20 = sphi 0, %s18
    %s21 = sphi 0, %s19
    %s31 = sphi 0, %s33
    %s34 = sphi 0, %s31
    %s35 = sphi 0, %s34
    %s51 = sphi 0, %s35
    %s55 = sphi 0, %s55
    %s57 = sphi 0, %s55
    %s58 = sphi 0, %s57
    %s72 = sphi 0, %s58
    %s76 = sphi 0, %s76
    %s78 = sphi 0, %s76
    %s79 = sphi 0, %s78
    %s93 = sphi 0, %s79
    %s101 = sphi 0, %s103
    %s104 = sphi 0, %s101
    %s105 = sphi 0, %s104
    %s121 = sphi 0, %s105
  $region4: #{downsample_layer_forward.3} parent=0 // loop_header_branch
    %12 = sbr.rel (%p10) target = $region8
  $region5: #{downsample_layer_forward.3} parent=0 // loop_body
    %s14 = ssub.s32 %s9, 1
    %s15 = ssub.s32 %s9, 2
    %s22 = sadd.s32 1, %s17
    %p23 = scmp.ge.s32.totalorder %s22, 1
    %s24 = scalar_select %p23, 0, %s22
    %s25 = sadd.s32 1, %s16
    %s26 = scalar_select %p23, %s25, %s16
    %p27 = scmp.ge.s32.totalorder %s26, 2
    %s28 = scalar_select %p27, 0, %s26
    %s29 = ssub.s32 %s16, %s28
    %p30 = scmp.eq.s32.totalorder %s29, 0
    %s32 = sadd.s32 %s31, 1
    %s33 = scalar_select %p30, %s31, %s32
    %p36 = pneg %p30
    %p37 = scmp.eq.s32.totalorder %s9, 1
    %p38 = por %p36, %p37
    %p39 = scmp.ne.s32.totalorder %s31, %s34
    %p40 = scmp.eq.s32.totalorder %s9, 0
    %p41 = por %p39, %p40
    %p42 = scmp.ne.s32.totalorder %s31, %s34
    %p43 = scmp.eq.s32.totalorder %s14, 1
    %p44 = por %p42, %p43
    %p45 = scmp.ne.s32.totalorder %s34, %s35
    %p46 = scmp.eq.s32.totalorder %s14, 0
    %p47 = por %p45, %p46
    %p48 = scmp.ne.s32.totalorder %s34, %s35
    %p49 = scmp.eq.s32.totalorder %s15, 1
    %p50 = por %p48, %p49
    %p52 = scmp.ne.s32.totalorder %s35, %s51
    %p53 = scmp.eq.s32.totalorder %s15, 0
    %p54 = por %p52, %p53
    %s56 = sadd.s32 %s55, 1
    %p59 = scmp.eq.s32.totalorder %s9, 1
    %p60 = scmp.ne.s32.totalorder %s55, %s57
    %p61 = scmp.eq.s32.totalorder %s9, 0
    %p62 = por %p60, %p61
    %p63 = scmp.ne.s32.totalorder %s55, %s57
    %p64 = scmp.eq.s32.totalorder %s14, 1
    %p65 = por %p63, %p64
    %p66 = scmp.ne.s32.totalorder %s57, %s58
    %p67 = scmp.eq.s32.totalorder %s14, 0
    %p68 = por %p66, %p67
    %p69 = scmp.ne.s32.totalorder %s57, %s58
    %p70 = scmp.eq.s32.totalorder %s15, 1
    %p71 = por %p69, %p70
    %p73 = scmp.ne.s32.totalorder %s58, %s72
    %p74 = scmp.eq.s32.totalorder %s15, 0
    %p75 = por %p73, %p74
    %s77 = sadd.s32 %s76, 1
    %p80 = scmp.eq.s32.totalorder %s9, 1
    %p81 = scmp.ne.s32.totalorder %s76, %s78
    %p82 = scmp.eq.s32.totalorder %s9, 0
    %p83 = por %p81, %p82
    %p84 = scmp.ne.s32.totalorder %s76, %s78
    %p85 = scmp.eq.s32.totalorder %s14, 1
    %p86 = por %p84, %p85
    %p87 = scmp.ne.s32.totalorder %s78, %s79
    %p88 = scmp.eq.s32.totalorder %s14, 0
    %p89 = por %p87, %p88
    %p90 = scmp.ne.s32.totalorder %s78, %s79
    %p91 = scmp.eq.s32.totalorder %s15, 1
    %p92 = por %p90, %p91
    %p94 = scmp.ne.s32.totalorder %s79, %s93
    %p95 = scmp.eq.s32.totalorder %s15, 0
    %p96 = por %p94, %p95
    %s97 = ssub.s32 %s16, %s28
    %s98 = ssub.s32 %s17, %s24
    %s99 = sor.u32 %s97, %s98
    %p100 = scmp.eq.s32.totalorder %s99, 0
    %s102 = sadd.s32 %s101, 1
    %s103 = scalar_select %p100, %s101, %s102
    %p106 = pneg %p100
    %p107 = scmp.eq.s32.totalorder %s9, 1
    %p108 = por %p106, %p107
    %p109 = scmp.ne.s32.totalorder %s101, %s104
    %p110 = scmp.eq.s32.totalorder %s9, 0
    %p111 = por %p109, %p110
    %p112 = scmp.ne.s32.totalorder %s101, %s104
    %p113 = scmp.eq.s32.totalorder %s14, 1
    %p114 = por %p112, %p113
    %p115 = scmp.ne.s32.totalorder %s104, %s105
    %p116 = scmp.eq.s32.totalorder %s14, 0
    %p117 = por %p115, %p116
    %p118 = scmp.ne.s32.totalorder %s104, %s105
    %p119 = scmp.eq.s32.totalorder %s15, 1
    %p120 = por %p118, %p119
    %p122 = scmp.ne.s32.totalorder %s105, %s121
    %p123 = scmp.eq.s32.totalorder %s15, 0
    %p124 = por %p122, %p123
    %p125 = scmp.le.s32.totalorder 1, %s9
    %p126 = scmp.lt.s32.totalorder %s9, 3
    %p127 = pnand %p125, %p126
    %p128 = pneg %p127
    // Predicated region
    $region9: #{downsample_layer_forward.3} parent=5 // pred_check
      _
    $region10: #{downsample_layer_forward.3} parent=5 // pred_check_branch
      %130 = sbr.rel (%p127) target = $region12
    $region11: #{downsample_layer_forward.3} parent=5 // pred_region
      %s131 = ssub.s32 %s9, 1
      // Predicated region
      $region13: #{downsample_layer_forward.3} parent=11 // pred_check
        %p132 = pneg %p68
      $region14: #{downsample_layer_forward.3} parent=11 // pred_check_branch
        %134 = sbr.rel (%p132) target = $region16
      $region15: #{downsample_layer_forward.3} parent=11 // pred_region
        _
      $region16: #{downsample_layer_forward.3} parent=11 // pred_fallthru
        _
      // Predicated region
      $region17: #{downsample_layer_forward.3} parent=11 // pred_check
        %p135 = pneg %p89
      $region18: #{downsample_layer_forward.3} parent=11 // pred_check_branch
        %137 = sbr.rel (%p135) target = $region20
      $region19: #{downsample_layer_forward.3} parent=11 // pred_region
        _
      $region20: #{downsample_layer_forward.3} parent=11 // pred_fallthru
        _
    $region12: #{downsample_layer_forward.3} parent=5 // pred_fallthru
      _
    %p138 = scmp.lt.s32.totalorder %s9, 2
    // Predicated region
    $region21: #{downsample_layer_forward.3} parent=5 // pred_check
      %p139 = pneg %p138
    $region22: #{downsample_layer_forward.3} parent=5 // pred_check_branch
      %141 = sbr.rel (%p139) target = $region24
    $region23: #{downsample_layer_forward.3} parent=5 // pred_region
      // Predicated region
      $region25: #{downsample_layer_forward.3} parent=23 // pred_check
        %p142 = pneg %p41
      $region26: #{downsample_layer_forward.3} parent=23 // pred_check_branch
        %144 = sbr.rel (%p142) target = $region28
      $region27: #{downsample_layer_forward.3} parent=23 // pred_region
        %p145 = scmp.lt.s32.totalorder %s16, 1
        %s146 = scalar_select %p145, %s16, 1
        %s147 = smul.addr %s146, 36
        %s148 = smul.addr %s147, 4
        %s149 = scalar_lea.vmem %s0, %s148
      $region28: #{downsample_layer_forward.3} parent=23 // pred_fallthru
        _
    $region24: #{downsample_layer_forward.3} parent=5 // pred_fallthru
      _
    %p150 = scmp.le.s32.totalorder 1, %s9
    %p151 = scmp.lt.s32.totalorder %s9, 3
    %p152 = pnand %p150, %p151
    %p153 = pneg %p152
    // Predicated region
    $region29: #{downsample_layer_forward.3} parent=5 // pred_check
      _
    $region30: #{downsample_layer_forward.3} parent=5 // pred_check_branch
      %155 = sbr.rel (%p152) target = $region32
    $region31: #{downsample_layer_forward.3} parent=5 // pred_region
      %s156 = ssub.s32 %s9, 1
      %p157 = scmp.lt.s32.totalorder %s18, 1
      %s158 = scalar_select %p157, %s18, 1
      %s159 = smul.addr %s158, 36
      %s160 = smul.addr %s159, 4
      %s161 = scalar_lea.vmem %s0, %s160
      %p162 = pneg %p47
      %p163 = pneg %p44
      %p164 = pneg %p68
      %p165 = pneg %p65
      %p166 = pneg %p89
      %p167 = pneg %p86
      %p168 = pneg %p117
      %p169 = pneg %p114
      %s170 = smul.u32 32, %s19
      %p171 = scmp.lt.s32.totalorder %s18, 1
      %s172 = scalar_select %p171, %s18, 1
      %p173 = scmp.lt.s32.totalorder %s170, 31
      %s174 = scalar_select %p173, %s170, 31
      %s175 = smul.addr %s172, 32
      %s176 = sadd.s32 %s174, %s175
      %s177 = smul.addr %s176, 4
      %s178 = scalar_lea.vmem %s3, %s177
      %p179 = scmp.lt.s32.totalorder %s18, 1
      %s180 = scalar_select %p179, %s18, 1
      %s181 = smul.addr %s180, 36
      %s182 = smul.addr %s181, 4
      %s183 = scalar_lea.vmem %s0, %s182
      %s184 = smul.u32 32, %s19
      %p185 = scmp.lt.s32.totalorder %s18, 1
      %s186 = scalar_select %p185, %s18, 1
      %p187 = scmp.lt.s32.totalorder %s184, 31
      %s188 = scalar_select %p187, %s184, 31
      %s189 = smul.addr %s186, 32
      %s190 = sadd.s32 %s188, %s189
      %s191 = smul.addr %s190, 4
      %s192 = scalar_lea.vmem %s3, %s191
      %s193 = smul.u32 32, %s19
      %s195 = smul.u32 %s19, 256
      %s196 = sshra.s32 %s195, 3
      %s197 = sand.u32 %s195, 7
      %s198 = smul.addr %s196, 4
      %s199 = scalar_lea.vmem %s183, %s198
      %v200 = vld [vmem:[%s199] sm:$0xf]
      %v201 = vld [vmem:[%s199 + $0x4] sm:$0xf]
      %v202 = vld [vmem:[%s199 + $0x8] sm:$0xf]
      %v203 = vld [vmem:[%s199 + $0xc] sm:$0xf]
      %v204 = vld [vmem:[%s199 + $0x10] sm:$0xf]
      %v205 = vld [vmem:[%s199 + $0x14] sm:$0xf]
      %v206 = vld [vmem:[%s199 + $0x18] sm:$0xf]
      %v207 = vld [vmem:[%s199 + $0x1c] sm:$0xf]
      %v208 = vld [vmem:[%s199 + $0x20] sm:$0xf]
      %v209 = vld [vmem:[%s199 + $0x24] sm:$0xf]
      %v210 = vld [vmem:[%s199 + $0x28] sm:$0xf]
      %v211 = vld [vmem:[%s199 + $0x2c] sm:$0xf]
      %v212 = vld [vmem:[%s199 + $0x30] sm:$0xf]
      %v213 = vld [vmem:[%s199 + $0x34] sm:$0xf]
      %v214 = vld [vmem:[%s199 + $0x38] sm:$0xf]
      %v215 = vld [vmem:[%s199 + $0x3c] sm:$0xf]
      %v216 = vld [vmem:[%s199 + $0x40] sm:$0xf]
      %v217 = vld [vmem:[%s199 + $0x44] sm:$0xf]
      %v218 = vld [vmem:[%s199 + $0x48] sm:$0xf]
      %v219 = vld [vmem:[%s199 + $0x4c] sm:$0xf]
      %v220 = vld [vmem:[%s199 + $0x50] sm:$0xf]
      %v221 = vld [vmem:[%s199 + $0x54] sm:$0xf]
      %v222 = vld [vmem:[%s199 + $0x58] sm:$0xf]
      %v223 = vld [vmem:[%s199 + $0x5c] sm:$0xf]
      %v224 = vld [vmem:[%s199 + $0x60] sm:$0xf]
      %v225 = vld [vmem:[%s199 + $0x64] sm:$0xf]
      %v226 = vld [vmem:[%s199 + $0x68] sm:$0xf]
      %v227 = vld [vmem:[%s199 + $0x6c] sm:$0xf]
      %v228 = vld [vmem:[%s199 + $0x70] sm:$0xf]
      %v229 = vld [vmem:[%s199 + $0x74] sm:$0xf]
      %v230 = vld [vmem:[%s199 + $0x78] sm:$0xf]
      %v231 = vld [vmem:[%s199 + $0x7c] sm:$0xf]
      %v232 = vld [vmem:[%s1] sm:$0xf]
      %v233 = vld [vmem:[%s1 + $0x4] sm:$0x3]
      %s234 = sadd.s32 %s195, 16
      %s235 = sshra.s32 %s234, 3
      %s236 = sand.u32 %s234, 7
      %s237 = smul.addr %s235, 4
      %s238 = scalar_lea.vmem %s183, %s237
      %v239 = vld [vmem:[%s238] sm:$0xf]
      %v240 = vld [vmem:[%s238 + $0x4] sm:$0xf]
      %v241 = vld [vmem:[%s238 + $0x8] sm:$0xf]
      %v242 = vld [vmem:[%s238 + $0xc] sm:$0xf]
      %v243 = vld [vmem:[%s238 + $0x10] sm:$0xf]
      %v244 = vld [vmem:[%s238 + $0x14] sm:$0xf]
      %v245 = vld [vmem:[%s238 + $0x18] sm:$0xf]
      %v246 = vld [vmem:[%s238 + $0x1c] sm:$0xf]
      %v247 = vld [vmem:[%s238 + $0x20] sm:$0xf]
      %v248 = vld [vmem:[%s238 + $0x24] sm:$0xf]
      %v249 = vld [vmem:[%s238 + $0x28] sm:$0xf]
      %v250 = vld [vmem:[%s238 + $0x2c] sm:$0xf]
      %v251 = vld [vmem:[%s238 + $0x30] sm:$0xf]
      %v252 = vld [vmem:[%s238 + $0x34] sm:$0xf]
      %v253 = vld [vmem:[%s238 + $0x38] sm:$0xf]
      %v254 = vld [vmem:[%s238 + $0x3c] sm:$0xf]
      %v255 = vld [vmem:[%s238 + $0x40] sm:$0xf]
      %v256 = vld [vmem:[%s238 + $0x44] sm:$0xf]
      %v257 = vld [vmem:[%s238 + $0x48] sm:$0xf]
      %v258 = vld [vmem:[%s238 + $0x4c] sm:$0xf]
      %v259 = vld [vmem:[%s238 + $0x50] sm:$0xf]
      %v260 = vld [vmem:[%s238 + $0x54] sm:$0xf]
      %v261 = vld [vmem:[%s238 + $0x58] sm:$0xf]
      %v262 = vld [vmem:[%s238 + $0x5c] sm:$0xf]
      %v263 = vld [vmem:[%s238 + $0x60] sm:$0xf]
      %v264 = vld [vmem:[%s238 + $0x64] sm:$0xf]
      %v265 = vld [vmem:[%s238 + $0x68] sm:$0xf]
      %v266 = vld [vmem:[%s238 + $0x6c] sm:$0xf]
      %v267 = vld [vmem:[%s238 + $0x70] sm:$0xf]
      %v268 = vld [vmem:[%s238 + $0x74] sm:$0xf]
      %v269 = vld [vmem:[%s238 + $0x78] sm:$0xf]
      %v270 = vld [vmem:[%s238 + $0x7c] sm:$0xf]
      %s271 = scalar_lea.vmem %s1, 8
      %v272 = vld [vmem:[%s271] sm:$0xf]
      %v273 = vld [vmem:[%s271 + $0x4] sm:$0x3]
      %v306 = vunpack.c.l.b16 %v239
      %v307 = vunpack.c.l.b16 %v240
      %v308 = vunpack.c.l.b16 %v241
      %v309 = vunpack.c.l.b16 %v242
      %v310 = vunpack.c.l.b16 %v243
      %v311 = vunpack.c.l.b16 %v244
      %v312 = vunpack.c.l.b16 %v245
      %v313 = vunpack.c.l.b16 %v246
      %v314 = vunpack.c.l.b16 %v247
      %v315 = vunpack.c.l.b16 %v248
      %v316 = vunpack.c.l.b16 %v249
      %v317 = vunpack.c.l.b16 %v250
      %v318 = vunpack.c.l.b16 %v251
      %v319 = vunpack.c.l.b16 %v252
      %v320 = vunpack.c.l.b16 %v253
      %v321 = vunpack.c.l.b16 %v254
      %v322 = vunpack.c.l.b16 %v255
      %v323 = vunpack.c.l.b16 %v256
      %v324 = vunpack.c.l.b16 %v257
      %v325 = vunpack.c.l.b16 %v258
      %v326 = vunpack.c.l.b16 %v259
      %v327 = vunpack.c.l.b16 %v260
      %v328 = vunpack.c.l.b16 %v261
      %v329 = vunpack.c.l.b16 %v262
      %v330 = vunpack.c.l.b16 %v263
      %v331 = vunpack.c.l.b16 %v264
      %v332 = vunpack.c.l.b16 %v265
      %v333 = vunpack.c.l.b16 %v266
      %v334 = vunpack.c.l.b16 %v267
      %v335 = vunpack.c.l.b16 %v268
      %v336 = vunpack.c.l.b16 %v269
      %v337 = vunpack.c.l.b16 %v270
      %v338 = vpack.c.b16 %v307, %v306
      %v339 = vpack.c.b16 %v309, %v308
      %v340 = vpack.c.b16 %v311, %v310
      %v341 = vpack.c.b16 %v313, %v312
      %v342 = vpack.c.b16 %v315, %v314
      %v343 = vpack.c.b16 %v317, %v316
      %v344 = vpack.c.b16 %v319, %v318
      %v345 = vpack.c.b16 %v321, %v320
      %v346 = vpack.c.b16 %v323, %v322
      %v347 = vpack.c.b16 %v325, %v324
      %v348 = vpack.c.b16 %v327, %v326
      %v349 = vpack.c.b16 %v329, %v328
      %v350 = vpack.c.b16 %v331, %v330
      %v351 = vpack.c.b16 %v333, %v332
      %v352 = vpack.c.b16 %v335, %v334
      %v353 = vpack.c.b16 %v337, %v336
      %v356 = vunpack.c.l.b16 %v272
      %v357 = vunpack.c.l.b16 %v273
      %v358 = vpack.c.b16 %v357, %v356
      %vm359 = vcmask 97280
      %v361 = vsel %vm359, %v338, 0
      %v364 = vsel %vm359, %v339, 0
      %v367 = vsel %vm359, %v340, 0
      %v370 = vsel %vm359, %v341, 0
      %v373 = vsel %vm359, %v342, 0
      %v376 = vsel %vm359, %v343, 0
      %v379 = vsel %vm359, %v344, 0
      %v382 = vsel %vm359, %v345, 0
      %v385 = vsel %vm359, %v346, 0
      %v388 = vsel %vm359, %v347, 0
      %v391 = vsel %vm359, %v348, 0
      %v394 = vsel %vm359, %v349, 0
      %v397 = vsel %vm359, %v350, 0
      %v400 = vsel %vm359, %v351, 0
      %v403 = vsel %vm359, %v352, 0
      %v406 = vsel %vm359, %v353, 0
      %vm408 = vcmask 1045504
      %v410 = vsel %vm408, %v358, 0
      %412 = vmatprep.subr.bf16.mxu0 0
      %413 = vmatpush1.bf16.msra.mxu0 %v410
      %414 = vmatprep.subr.bf16.mxu0 0
      %415 = vmatpush1.bf16.msra.mxu0 0
      %416 = vmatprep.subr.bf16.mxu0 0
      %417 = vmatpush1.bf16.msra.mxu0 0
      %418 = vmatprep.subr.bf16.mxu0 0
      %419 = vmatpush1.bf16.msra.mxu0 0
      %420 = vmatprep.subr.bf16.mxu0 0
      %421 = vmatpush1.bf16.msra.mxu0 0
      %422 = vmatprep.subr.bf16.mxu0 0
      %423 = vmatpush1.bf16.msra.mxu0 0
      %424 = vmatprep.subr.bf16.mxu0 0
      %425 = vmatpush1.bf16.msra.mxu0 0
      %426 = vmatprep.subr.bf16.mxu0 0
      %427 = vmatpush1.bf16.msra.mxu0 0
      %428 = vmatprep.subr.bf16.mxu0 0
      %429 = vmatpush1.bf16.msra.mxu0 0
      %430 = vmatprep.subr.bf16.mxu0 0
      %431 = vmatpush1.bf16.msra.mxu0 0
      %432 = vmatprep.subr.bf16.mxu0 0
      %433 = vmatpush1.bf16.msra.mxu0 0
      %434 = vmatprep.subr.bf16.mxu0 0
      %435 = vmatpush1.bf16.msra.mxu0 0
      %436 = vmatprep.subr.bf16.mxu0 0
      %437 = vmatpush1.bf16.msra.mxu0 0
      %438 = vmatprep.subr.bf16.mxu0 0
      %439 = vmatpush1.bf16.msra.mxu0 0
      %440 = vmatprep.subr.bf16.mxu0 0
      %441 = vmatpush1.bf16.msra.mxu0 0
      %442 = vmatprep.subr.bf16.mxu0 0
      %443 = vmatpush1.bf16.msra.mxu0 0
      %444 = vmatprep.mubr.bf16.mxu0 0
      %445 = vmatmul.mubr.bf16.gmra.mrb[0].mxu0 %v361
      %v446 = vpop.f32.mrb[0].mxu0
      %v447 = vadd.f32 0.0, %v446
      %v448 = vpop.f32.mrb[0].mxu0
      %v449 = vpop.f32.mrb[0].mxu0
      %v450 = vadd.f32 0.0, %v449
      %v451 = vpop.f32.mrb[0].mxu0
      %452 = vmatprep.mubr.bf16.mxu0 0
      %453 = vmatmul.mubr.bf16.gmra.mrb[0].mxu0 %v364
      %v454 = vpop.f32.mrb[0].mxu0
      %v455 = vadd.f32 0.0, %v454
      %v456 = vpop.f32.mrb[0].mxu0
      %v457 = vpop.f32.mrb[0].mxu0
      %v458 = vadd.f32 0.0, %v457
      %v459 = vpop.f32.mrb[0].mxu0
      %460 = vmatprep.mubr.bf16.mxu0 0
      %461 = vmatmul.mubr.bf16.gmra.mrb[0].mxu0 %v367
      %v462 = vpop.f32.mrb[0].mxu0
      %v463 = vadd.f32 0.0, %v462
      %v464 = vpop.f32.mrb[0].mxu0
      %v465 = vpop.f32.mrb[0].mxu0
      %v466 = vadd.f32 0.0, %v465
      %v467 = vpop.f32.mrb[0].mxu0
      %468 = vmatprep.mubr.bf16.mxu0 0
      %469 = vmatmul.mubr.bf16.gmra.mrb[0].mxu0 %v370
      %v470 = vpop.f32.mrb[0].mxu0
      %v471 = vadd.f32 0.0, %v470
      %v472 = vpop.f32.mrb[0].mxu0
      %v473 = vpop.f32.mrb[0].mxu0
      %v474 = vadd.f32 0.0, %v473
      %v475 = vpop.f32.mrb[0].mxu0
      %476 = vmatprep.mubr.bf16.mxu0 0
      %477 = vmatmul.mubr.bf16.gmra.mrb[0].mxu0 %v373
      %v478 = vpop.f32.mrb[0].mxu0
      %v479 = vadd.f32 0.0, %v478
      %v480 = vpop.f32.mrb[0].mxu0
      %v481 = vpop.f32.mrb[0].mxu0
      %v482 = vadd.f32 0.0, %v481
      %v483 = vpop.f32.mrb[0].mxu0
      %484 = vmatprep.mubr.bf16.mxu0 0
      %485 = vmatmul.mubr.bf16.gmra.mrb[0].mxu0 %v376
      %v486 = vpop.f32.mrb[0].mxu0
      %v487 = vadd.f32 0.0, %v486
      %v488 = vpop.f32.mrb[0].mxu0
      %v489 = vpop.f32.mrb[0].mxu0
      %v490 = vadd.f32 0.0, %v489
      %v491 = vpop.f32.mrb[0].mxu0
      %492 = vmatprep.mubr.bf16.mxu0 0
      %493 = vmatmul.mubr.bf16.gmra.mrb[0].mxu0 %v379
      %v494 = vpop.f32.mrb[0].mxu0
      %v495 = vadd.f32 0.0, %v494
      %v496 = vpop.f32.mrb[0].mxu0
      %v497 = vpop.f32.mrb[0].mxu0
      %v498 = vadd.f32 0.0, %v497
      %v499 = vpop.f32.mrb[0].mxu0
      %500 = vmatprep.mubr.bf16.mxu0 0
      %501 = vmatmul.mubr.bf16.gmra.mrb[0].mxu0 %v382
      %v502 = vpop.f32.mrb[0].mxu0
      %v503 = vadd.f32 0.0, %v502
      %v504 = vpop.f32.mrb[0].mxu0
      %v505 = vpop.f32.mrb[0].mxu0
      %v506 = vadd.f32 0.0, %v505
      %v507 = vpop.f32.mrb[0].mxu0
      %508 = vmatprep.mubr.bf16.mxu0 0
      %509 = vmatmul.mubr.bf16.gmra.mrb[0].mxu0 %v385
      %v510 = vpop.f32.mrb[0].mxu0
      %v511 = vadd.f32 0.0, %v510
      %v512 = vpop.f32.mrb[0].mxu0
      %v513 = vpop.f32.mrb[0].mxu0
      %v514 = vadd.f32 0.0, %v513
      %v515 = vpop.f32.mrb[0].mxu0
      %516 = vmatprep.mubr.bf16.mxu0 0
      %517 = vmatmul.mubr.bf16.gmra.mrb[0].mxu0 %v388
      %v518 = vpop.f32.mrb[0].mxu0
      %v519 = vadd.f32 0.0, %v518
      %v520 = vpop.f32.mrb[0].mxu0
      %v521 = vpop.f32.mrb[0].mxu0
      %v522 = vadd.f32 0.0, %v521
      %v523 = vpop.f32.mrb[0].mxu0
      %524 = vmatprep.mubr.bf16.mxu0 0
      %525 = vmatmul.mubr.bf16.gmra.mrb[0].mxu0 %v391
      %v526 = vpop.f32.mrb[0].mxu0
      %v527 = vadd.f32 0.0, %v526
      %v528 = vpop.f32.mrb[0].mxu0
      %v529 = vpop.f32.mrb[0].mxu0
      %v530 = vadd.f32 0.0, %v529
      %v531 = vpop.f32.mrb[0].mxu0
      %532 = vmatprep.mubr.bf16.mxu0 0
      %533 = vmatmul.mubr.bf16.gmra.mrb[0].mxu0 %v394
      %v534 = vpop.f32.mrb[0].mxu0
      %v535 = vadd.f32 0.0, %v534
      %v536 = vpop.f32.mrb[0].mxu0
      %v537 = vpop.f32.mrb[0].mxu0
      %v538 = vadd.f32 0.0, %v537
      %v539 = vpop.f32.mrb[0].mxu0
      %540 = vmatprep.mubr.bf16.mxu0 0
      %541 = vmatmul.mubr.bf16.gmra.mrb[0].mxu0 %v397
      %v542 = vpop.f32.mrb[0].mxu0
      %v543 = vadd.f32 0.0, %v542
      %v544 = vpop.f32.mrb[0].mxu0
      %v545 = vpop.f32.mrb[0].mxu0
      %v546 = vadd.f32 0.0, %v545
      %v547 = vpop.f32.mrb[0].mxu0
      %548 = vmatprep.mubr.bf16.mxu0 0
      %549 = vmatmul.mubr.bf16.gmra.mrb[0].mxu0 %v400
      %v550 = vpop.f32.mrb[0].mxu0
      %v551 = vadd.f32 0.0, %v550
      %v552 = vpop.f32.mrb[0].mxu0
      %v553 = vpop.f32.mrb[0].mxu0
      %v554 = vadd.f32 0.0, %v553
      %v555 = vpop.f32.mrb[0].mxu0
      %556 = vmatprep.mubr.bf16.mxu0 0
      %557 = vmatmul.mubr.bf16.gmra.mrb[0].mxu0 %v403
      %v558 = vpop.f32.mrb[0].mxu0
      %v559 = vadd.f32 0.0, %v558
      %v560 = vpop.f32.mrb[0].mxu0
      %v561 = vpop.f32.mrb[0].mxu0
      %v562 = vadd.f32 0.0, %v561
      %v563 = vpop.f32.mrb[0].mxu0
      %564 = vmatprep.mubr.bf16.mxu0 0
      %565 = vmatmul.mubr.bf16.gmra.mrb[0].mxu0 %v406
      %v566 = vpop.f32.mrb[0].mxu0
      %v567 = vadd.f32 0.0, %v566
      %v568 = vpop.f32.mrb[0].mxu0
      %v569 = vpop.f32.mrb[0].mxu0
      %v570 = vadd.f32 0.0, %v569
      %v571 = vpop.f32.mrb[0].mxu0
      %572 = vdwg.mxu0
      %v605 = vunpack.c.l.b16 %v200
      %v606 = vunpack.c.l.b16 %v201
      %v607 = vunpack.c.l.b16 %v202
      %v608 = vunpack.c.l.b16 %v203
      %v609 = vunpack.c.l.b16 %v204
      %v610 = vunpack.c.l.b16 %v205
      %v611 = vunpack.c.l.b16 %v206
      %v612 = vunpack.c.l.b16 %v207
      %v613 = vunpack.c.l.b16 %v208
      %v614 = vunpack.c.l.b16 %v209
      %v615 = vunpack.c.l.b16 %v210
      %v616 = vunpack.c.l.b16 %v211
      %v617 = vunpack.c.l.b16 %v212
      %v618 = vunpack.c.l.b16 %v213
      %v619 = vunpack.c.l.b16 %v214
      %v620 = vunpack.c.l.b16 %v215
      %v621 = vunpack.c.l.b16 %v216
      %v622 = vunpack.c.l.b16 %v217
      %v623 = vunpack.c.l.b16 %v218
      %v624 = vunpack.c.l.b16 %v219
      %v625 = vunpack.c.l.b16 %v220
      %v626 = vunpack.c.l.b16 %v221
      %v627 = vunpack.c.l.b16 %v222
      %v628 = vunpack.c.l.b16 %v223
      %v629 = vunpack.c.l.b16 %v224
      %v630 = vunpack.c.l.b16 %v225
      %v631 = vunpack.c.l.b16 %v226
      %v632 = vunpack.c.l.b16 %v227
      %v633 = vunpack.c.l.b16 %v228
      %v634 = vunpack.c.l.b16 %v229
      %v635 = vunpack.c.l.b16 %v230
      %v636 = vunpack.c.l.b16 %v231
      %v637 = vpack.c.b16 %v606, %v605
      %v638 = vpack.c.b16 %v608, %v607
      %v639 = vpack.c.b16 %v610, %v609
      %v640 = vpack.c.b16 %v612, %v611
      %v641 = vpack.c.b16 %v614, %v613
      %v642 = vpack.c.b16 %v616, %v615
      %v643 = vpack.c.b16 %v618, %v617
      %v644 = vpack.c.b16 %v620, %v619
      %v645 = vpack.c.b16 %v622, %v621
      %v646 = vpack.c.b16 %v624, %v623
      %v647 = vpack.c.b16 %v626, %v625
      %v648 = vpack.c.b16 %v628, %v627
      %v649 = vpack.c.b16 %v630, %v629
      %v650 = vpack.c.b16 %v632, %v631
      %v651 = vpack.c.b16 %v634, %v633
      %v652 = vpack.c.b16 %v636, %v635
      %v655 = vunpack.c.l.b16 %v232
      %v656 = vunpack.c.l.b16 %v233
      %v657 = vpack.c.b16 %v656, %v655
      %v659 = vsel %vm359, %v637, 0
      %v662 = vsel %vm359, %v638, 0
      %v665 = vsel %vm359, %v639, 0
      %v668 = vsel %vm359, %v640, 0
      %v671 = vsel %vm359, %v641, 0
      %v674 = vsel %vm359, %v642, 0
      %v677 = vsel %vm359, %v643, 0
      %v680 = vsel %vm359, %v644, 0
      %v683 = vsel %vm359, %v645, 0
      %v686 = vsel %vm359, %v646, 0
      %v689 = vsel %vm359, %v647, 0
      %v692 = vsel %vm359, %v648, 0
      %v695 = vsel %vm359, %v649, 0
      %v698 = vsel %vm359, %v650, 0
      %v701 = vsel %vm359, %v651, 0
      %v704 = vsel %vm359, %v652, 0
      %v707 = vsel %vm408, %v657, 0
      %709 = vmatprep.subr.bf16.mxu0 0
      %710 = vmatpush1.bf16.msra.mxu0 %v707
      %711 = vmatprep.subr.bf16.mxu0 0
      %712 = vmatpush1.bf16.msra.mxu0 0
      %713 = vmatprep.subr.bf16.mxu0 0
      %714 = vmatpush1.bf16.msra.mxu0 0
      %715 = vmatprep.subr.bf16.mxu0 0
      %716 = vmatpush1.bf16.msra.mxu0 0
      %717 = vmatprep.subr.bf16.mxu0 0
      %718 = vmatpush1.bf16.msra.mxu0 0
      %719 = vmatprep.subr.bf16.mxu0 0
      %720 = vmatpush1.bf16.msra.mxu0 0
      %721 = vmatprep.subr.bf16.mxu0 0
      %722 = vmatpush1.bf16.msra.mxu0 0
      %723 = vmatprep.subr.bf16.mxu0 0
      %724 = vmatpush1.bf16.msra.mxu0 0
      %725 = vmatprep.subr.bf16.mxu0 0
      %726 = vmatpush1.bf16.msra.mxu0 0
      %727 = vmatprep.subr.bf16.mxu0 0
      %728 = vmatpush1.bf16.msra.mxu0 0
      %729 = vmatprep.subr.bf16.mxu0 0
      %730 = vmatpush1.bf16.msra.mxu0 0
      %731 = vmatprep.subr.bf16.mxu0 0
      %732 = vmatpush1.bf16.msra.mxu0 0
      %733 = vmatprep.subr.bf16.mxu0 0
      %734 = vmatpush1.bf16.msra.mxu0 0
      %735 = vmatprep.subr.bf16.mxu0 0
      %736 = vmatpush1.bf16.msra.mxu0 0
      %737 = vmatprep.subr.bf16.mxu0 0
      %738 = vmatpush1.bf16.msra.mxu0 0
      %739 = vmatprep.subr.bf16.mxu0 0
      %740 = vmatpush1.bf16.msra.mxu0 0
      %741 = vmatprep.mubr.bf16.mxu0 0
      %742 = vmatmul.mubr.bf16.gmra.mrb[0].mxu0 %v659
      %v743 = vpop.f32.mrb[0].mxu0
      %v744 = vadd.f32 %v447, %v743
      %v745 = vpop.f32.mrb[0].mxu0
      %v746 = vpop.f32.mrb[0].mxu0
      %v747 = vadd.f32 %v450, %v746
      %v748 = vpop.f32.mrb[0].mxu0
      %749 = vmatprep.mubr.bf16.mxu0 0
      %750 = vmatmul.mubr.bf16.gmra.mrb[0].mxu0 %v662
      %v751 = vpop.f32.mrb[0].mxu0
      %v752 = vadd.f32 %v455, %v751
      %v753 = vpop.f32.mrb[0].mxu0
      %v754 = vpop.f32.mrb[0].mxu0
      %v755 = vadd.f32 %v458, %v754
      %v756 = vpop.f32.mrb[0].mxu0
      %757 = vmatprep.mubr.bf16.mxu0 0
      %758 = vmatmul.mubr.bf16.gmra.mrb[0].mxu0 %v665
      %v759 = vpop.f32.mrb[0].mxu0
      %v760 = vadd.f32 %v463, %v759
      %v761 = vpop.f32.mrb[0].mxu0
      %v762 = vpop.f32.mrb[0].mxu0
      %v763 = vadd.f32 %v466, %v762
      %v764 = vpop.f32.mrb[0].mxu0
      %765 = vmatprep.mubr.bf16.mxu0 0
      %766 = vmatmul.mubr.bf16.gmra.mrb[0].mxu0 %v668
      %v767 = vpop.f32.mrb[0].mxu0
      %v768 = vadd.f32 %v471, %v767
      %v769 = vpop.f32.mrb[0].mxu0
      %v770 = vpop.f32.mrb[0].mxu0
      %v771 = vadd.f32 %v474, %v770
      %v772 = vpop.f32.mrb[0].mxu0
      %773 = vmatprep.mubr.bf16.mxu0 0
      %774 = vmatmul.mubr.bf16.gmra.mrb[0].mxu0 %v671
      %v775 = vpop.f32.mrb[0].mxu0
      %v776 = vadd.f32 %v479, %v775
      %v777 = vpop.f32.mrb[0].mxu0
      %v778 = vpop.f32.mrb[0].mxu0
      %v779 = vadd.f32 %v482, %v778
      %v780 = vpop.f32.mrb[0].mxu0
      %781 = vmatprep.mubr.bf16.mxu0 0
      %782 = vmatmul.mubr.bf16.gmra.mrb[0].mxu0 %v674
      %v783 = vpop.f32.mrb[0].mxu0
      %v784 = vadd.f32 %v487, %v783
      %v785 = vpop.f32.mrb[0].mxu0
      %v786 = vpop.f32.mrb[0].mxu0
      %v787 = vadd.f32 %v490, %v786
      %v788 = vpop.f32.mrb[0].mxu0
      %789 = vmatprep.mubr.bf16.mxu0 0
      %790 = vmatmul.mubr.bf16.gmra.mrb[0].mxu0 %v677
      %v791 = vpop.f32.mrb[0].mxu0
      %v792 = vadd.f32 %v495, %v791
      %v793 = vpop.f32.mrb[0].mxu0
      %v794 = vpop.f32.mrb[0].mxu0
      %v795 = vadd.f32 %v498, %v794
      %v796 = vpop.f32.mrb[0].mxu0
      %797 = vmatprep.mubr.bf16.mxu0 0
      %798 = vmatmul.mubr.bf16.gmra.mrb[0].mxu0 %v680
      %v799 = vpop.f32.mrb[0].mxu0
      %v800 = vadd.f32 %v503, %v799
      %v801 = vpop.f32.mrb[0].mxu0
      %v802 = vpop.f32.mrb[0].mxu0
      %v803 = vadd.f32 %v506, %v802
      %v804 = vpop.f32.mrb[0].mxu0
      %805 = vmatprep.mubr.bf16.mxu0 0
      %806 = vmatmul.mubr.bf16.gmra.mrb[0].mxu0 %v683
      %v807 = vpop.f32.mrb[0].mxu0
      %v808 = vadd.f32 %v511, %v807
      %v809 = vpop.f32.mrb[0].mxu0
      %v810 = vpop.f32.mrb[0].mxu0
      %v811 = vadd.f32 %v514, %v810
      %v812 = vpop.f32.mrb[0].mxu0
      %813 = vmatprep.mubr.bf16.mxu0 0
      %814 = vmatmul.mubr.bf16.gmra.mrb[0].mxu0 %v686
      %v815 = vpop.f32.mrb[0].mxu0
      %v816 = vadd.f32 %v519, %v815
      %v817 = vpop.f32.mrb[0].mxu0
      %v818 = vpop.f32.mrb[0].mxu0
      %v819 = vadd.f32 %v522, %v818
      %v820 = vpop.f32.mrb[0].mxu0
      %821 = vmatprep.mubr.bf16.mxu0 0
      %822 = vmatmul.mubr.bf16.gmra.mrb[0].mxu0 %v689
      %v823 = vpop.f32.mrb[0].mxu0
      %v824 = vadd.f32 %v527, %v823
      %v825 = vpop.f32.mrb[0].mxu0
      %v826 = vpop.f32.mrb[0].mxu0
      %v827 = vadd.f32 %v530, %v826
      %v828 = vpop.f32.mrb[0].mxu0
      %829 = vmatprep.mubr.bf16.mxu0 0
      %830 = vmatmul.mubr.bf16.gmra.mrb[0].mxu0 %v692
      %v831 = vpop.f32.mrb[0].mxu0
      %v832 = vadd.f32 %v535, %v831
      %v833 = vpop.f32.mrb[0].mxu0
      %v834 = vpop.f32.mrb[0].mxu0
      %v835 = vadd.f32 %v538, %v834
      %v836 = vpop.f32.mrb[0].mxu0
      %837 = vmatprep.mubr.bf16.mxu0 0
      %838 = vmatmul.mubr.bf16.gmra.mrb[0].mxu0 %v695
      %v839 = vpop.f32.mrb[0].mxu0
      %v840 = vadd.f32 %v543, %v839
      %v841 = vpop.f32.mrb[0].mxu0
      %v842 = vpop.f32.mrb[0].mxu0
      %v843 = vadd.f32 %v546, %v842
      %v844 = vpop.f32.mrb[0].mxu0
      %845 = vmatprep.mubr.bf16.mxu0 0
      %846 = vmatmul.mubr.bf16.gmra.mrb[0].mxu0 %v698
      %v847 = vpop.f32.mrb[0].mxu0
      %v848 = vadd.f32 %v551, %v847
      %v849 = vpop.f32.mrb[0].mxu0
      %v850 = vpop.f32.mrb[0].mxu0
      %v851 = vadd.f32 %v554, %v850
      %v852 = vpop.f32.mrb[0].mxu0
      %853 = vmatprep.mubr.bf16.mxu0 0
      %854 = vmatmul.mubr.bf16.gmra.mrb[0].mxu0 %v701
      %v855 = vpop.f32.mrb[0].mxu0
      %v856 = vadd.f32 %v559, %v855
      %v857 = vpop.f32.mrb[0].mxu0
      %v858 = vpop.f32.mrb[0].mxu0
      %v859 = vadd.f32 %v562, %v858
      %v860 = vpop.f32.mrb[0].mxu0
      %861 = vmatprep.mubr.bf16.mxu0 0
      %862 = vmatmul.mubr.bf16.gmra.mrb[0].mxu0 %v704
      %v863 = vpop.f32.mrb[0].mxu0
      %v864 = vadd.f32 %v567, %v863
      %v865 = vpop.f32.mrb[0].mxu0
      %v866 = vpop.f32.mrb[0].mxu0
      %v867 = vadd.f32 %v570, %v866
      %v868 = vpop.f32.mrb[0].mxu0
      %869 = vdwg.mxu0
      %s870 = sadd.s32 %s195, 32
      %s871 = sshra.s32 %s870, 3
      %s872 = sand.u32 %s870, 7
      %s873 = smul.addr %s871, 4
      %s874 = scalar_lea.vmem %s183, %s873
      %v875 = vld [vmem:[%s874] sm:$0xf]
      %v876 = vld [vmem:[%s874 + $0x4] sm:$0xf]
      %v877 = vld [vmem:[%s874 + $0x8] sm:$0xf]
      %v878 = vld [vmem:[%s874 + $0xc] sm:$0xf]
      %v879 = vld [vmem:[%s874 + $0x10] sm:$0xf]
      %v880 = vld [vmem:[%s874 + $0x14] sm:$0xf]
      %v881 = vld [vmem:[%s874 + $0x18] sm:$0xf]
      %v882 = vld [vmem:[%s874 + $0x1c] sm:$0xf]
      %v883 = vld [vmem:[%s874 + $0x20] sm:$0xf]
      %v884 = vld [vmem:[%s874 + $0x24] sm:$0xf]
      %v885 = vld [vmem:[%s874 + $0x28] sm:$0xf]
      %v886 = vld [vmem:[%s874 + $0x2c] sm:$0xf]
      %v887 = vld [vmem:[%s874 + $0x30] sm:$0xf]
      %v888 = vld [vmem:[%s874 + $0x34] sm:$0xf]
      %v889 = vld [vmem:[%s874 + $0x38] sm:$0xf]
      %v890 = vld [vmem:[%s874 + $0x3c] sm:$0xf]
      %v891 = vld [vmem:[%s874 + $0x40] sm:$0xf]
      %v892 = vld [vmem:[%s874 + $0x44] sm:$0xf]
      %v893 = vld [vmem:[%s874 + $0x48] sm:$0xf]
      %v894 = vld [vmem:[%s874 + $0x4c] sm:$0xf]
      %v895 = vld [vmem:[%s874 + $0x50] sm:$0xf]
      %v896 = vld [vmem:[%s874 + $0x54] sm:$0xf]
      %v897 = vld [vmem:[%s874 + $0x58] sm:$0xf]
      %v898 = vld [vmem:[%s874 + $0x5c] sm:$0xf]
      %v899 = vld [vmem:[%s874 + $0x60] sm:$0xf]
      %v900 = vld [vmem:[%s874 + $0x64] sm:$0xf]
      %v901 = vld [vmem:[%s874 + $0x68] sm:$0xf]
      %v902 = vld [vmem:[%s874 + $0x6c] sm:$0xf]
      %v903 = vld [vmem:[%s874 + $0x70] sm:$0xf]
      %v904 = vld [vmem:[%s874 + $0x74] sm:$0xf]
      %v905 = vld [vmem:[%s874 + $0x78] sm:$0xf]
      %v906 = vld [vmem:[%s874 + $0x7c] sm:$0xf]
      %s907 = scalar_lea.vmem %s1, 16
      %v908 = vld [vmem:[%s907] sm:$0xf]
      %v909 = vld [vmem:[%s907 + $0x4] sm:$0x3]
      %v942 = vunpack.c.l.b16 %v875
      %v943 = vunpack.c.l.b16 %v876
      %v944 = vunpack.c.l.b16 %v877
      %v945 = vunpack.c.l.b16 %v878
      %v946 = vunpack.c.l.b16 %v879
      %v947 = vunpack.c.l.b16 %v880
      %v948 = vunpack.c.l.b16 %v881
      %v949 = vunpack.c.l.b16 %v882
      %v950 = vunpack.c.l.b16 %v883
      %v951 = vunpack.c.l.b16 %v884
      %v952 = vunpack.c.l.b16 %v885
      %v953 = vunpack.c.l.b16 %v886
      %v954 = vunpack.c.l.b16 %v887
      %v955 = vunpack.c.l.b16 %v888
      %v956 = vunpack.c.l.b16 %v889
      %v957 = vunpack.c.l.b16 %v890
      %v958 = vunpack.c.l.b16 %v891
      %v959 = vunpack.c.l.b16 %v892
      %v960 = vunpack.c.l.b16 %v893
      %v961 = vunpack.c.l.b16 %v894
      %v962 = vunpack.c.l.b16 %v895
      %v963 = vunpack.c.l.b16 %v896
      %v964 = vunpack.c.l.b16 %v897
      %v965 = vunpack.c.l.b16 %v898
      %v966 = vunpack.c.l.b16 %v899
      %v967 = vunpack.c.l.b16 %v900
      %v968 = vunpack.c.l.b16 %v901
      %v969 = vunpack.c.l.b16 %v902
      %v970 = vunpack.c.l.b16 %v903
      %v971 = vunpack.c.l.b16 %v904
      %v972 = vunpack.c.l.b16 %v905
      %v973 = vunpack.c.l.b16 %v906
      %v974 = vpack.c.b16 %v943, %v942
      %v975 = vpack.c.b16 %v945, %v944
      %v976 = vpack.c.b16 %v947, %v946
      %v977 = vpack.c.b16 %v949, %v948
      %v978 = vpack.c.b16 %v951, %v950
      %v979 = vpack.c.b16 %v953, %v952
      %v980 = vpack.c.b16 %v955, %v954
      %v981 = vpack.c.b16 %v957, %v956
      %v982 = vpack.c.b16 %v959, %v958
      %v983 = vpack.c.b16 %v961, %v960
      %v984 = vpack.c.b16 %v963, %v962
      %v985 = vpack.c.b16 %v965, %v964
      %v986 = vpack.c.b16 %v967, %v966
      %v987 = vpack.c.b16 %v969, %v968
      %v988 = vpack.c.b16 %v971, %v970
      %v989 = vpack.c.b16 %v973, %v972
      %v992 = vunpack.c.l.b16 %v908
      %v993 = vunpack.c.l.b16 %v909
      %v994 = vpack.c.b16 %v993, %v992
      %v996 = vsel %vm359, %v974, 0
      %v999 = vsel %vm359, %v975, 0
      %v1002 = vsel %vm359, %v976, 0
      %v1005 = vsel %vm359, %v977, 0
      %v1008 = vsel %vm359, %v978, 0
      %v1011 = vsel %vm359, %v979, 0
      %v1014 = vsel %vm359, %v980, 0
      %v1017 = vsel %vm359, %v981, 0
      %v1020 = vsel %vm359, %v982, 0
      %v1023 = vsel %vm359, %v983, 0
      %v1026 = vsel %vm359, %v984, 0
      %v1029 = vsel %vm359, %v985, 0
      %v1032 = vsel %vm359, %v986, 0
      %v1035 = vsel %vm359, %v987, 0
      %v1038 = vsel %vm359, %v988, 0
      %v1041 = vsel %vm359, %v989, 0
      %v1044 = vsel %vm408, %v994, 0
      %1046 = vmatprep.subr.bf16.mxu0 0
      %1047 = vmatpush1.bf16.msra.mxu0 %v1044
      %1048 = vmatprep.subr.bf16.mxu0 0
      %1049 = vmatpush1.bf16.msra.mxu0 0
      %1050 = vmatprep.subr.bf16.mxu0 0
      %1051 = vmatpush1.bf16.msra.mxu0 0
      %1052 = vmatprep.subr.bf16.mxu0 0
      %1053 = vmatpush1.bf16.msra.mxu0 0
      %1054 = vmatprep.subr.bf16.mxu0 0
      %1055 = vmatpush1.bf16.msra.mxu0 0
      %1056 = vmatprep.subr.bf16.mxu0 0
      %1057 = vmatpush1.bf16.msra.mxu0 0
      %1058 = vmatprep.subr.bf16.mxu0 0
      %1059 = vmatpush1.bf16.msra.mxu0 0
      %1060 = vmatprep.subr.bf16.mxu0 0
      %1061 = vmatpush1.bf16.msra.mxu0 0
      %1062 = vmatprep.subr.bf16.mxu0 0
      %1063 = vmatpush1.bf16.msra.mxu0 0
      %1064 = vmatprep.subr.bf16.mxu0 0
      %1065 = vmatpush1.bf16.msra.mxu0 0
      %1066 = vmatprep.subr.bf16.mxu0 0
      %1067 = vmatpush1.bf16.msra.mxu0 0
      %1068 = vmatprep.subr.bf16.mxu0 0
      %1069 = vmatpush1.bf16.msra.mxu0 0
      %1070 = vmatprep.subr.bf16.mxu0 0
      %1071 = vmatpush1.bf16.msra.mxu0 0
      %1072 = vmatprep.subr.bf16.mxu0 0
      %1073 = vmatpush1.bf16.msra.mxu0 0
      %1074 = vmatprep.subr.bf16.mxu0 0
      %1075 = vmatpush1.bf16.msra.mxu0 0
      %1076 = vmatprep.subr.bf16.mxu0 0
      %1077 = vmatpush1.bf16.msra.mxu0 0
      %1078 = vmatprep.mubr.bf16.mxu0 0
      %1079 = vmatmul.mubr.bf16.gmra.mrb[0].mxu0 %v996
      %v1080 = vpop.f32.mrb[0].mxu0
      %v1081 = vadd.f32 0.0, %v1080
      %v1082 = vpop.f32.mrb[0].mxu0
      %v1083 = vpop.f32.mrb[0].mxu0
      %v1084 = vadd.f32 0.0, %v1083
      %v1085 = vpop.f32.mrb[0].mxu0
      %1086 = vmatprep.mubr.bf16.mxu0 0
      %1087 = vmatmul.mubr.bf16.gmra.mrb[0].mxu0 %v999
      %v1088 = vpop.f32.mrb[0].mxu0
      %v1089 = vadd.f32 0.0, %v1088
      %v1090 = vpop.f32.mrb[0].mxu0
      %v1091 = vpop.f32.mrb[0].mxu0
      %v1092 = vadd.f32 0.0, %v1091
      %v1093 = vpop.f32.mrb[0].mxu0
      %1094 = vmatprep.mubr.bf16.mxu0 0
      %1095 = vmatmul.mubr.bf16.gmra.mrb[0].mxu0 %v1002
      %v1096 = vpop.f32.mrb[0].mxu0
      %v1097 = vadd.f32 0.0, %v1096
      %v1098 = vpop.f32.mrb[0].mxu0
      %v1099 = vpop.f32.mrb[0].mxu0
      %v1100 = vadd.f32 0.0, %v1099
      %v1101 = vpop.f32.mrb[0].mxu0
      %1102 = vmatprep.mubr.bf16.mxu0 0
      %1103 = vmatmul.mubr.bf16.gmra.mrb[0].mxu0 %v1005
      %v1104 = vpop.f32.mrb[0].mxu0
      %v1105 = vadd.f32 0.0, %v1104
      %v1106 = vpop.f32.mrb[0].mxu0
      %v1107 = vpop.f32.mrb[0].mxu0
      %v1108 = vadd.f32 0.0, %v1107
      %v1109 = vpop.f32.mrb[0].mxu0
      %1110 = vmatprep.mubr.bf16.mxu0 0
      %1111 = vmatmul.mubr.bf16.gmra.mrb[0].mxu0 %v1008
      %v1112 = vpop.f32.mrb[0].mxu0
      %v1113 = vadd.f32 0.0, %v1112
      %v1114 = vpop.f32.mrb[0].mxu0
      %v1115 = vpop.f32.mrb[0].mxu0
      %v1116 = vadd.f32 0.0, %v1115
      %v1117 = vpop.f32.mrb[0].mxu0
      %1118 = vmatprep.mubr.bf16.mxu0 0
      %1119 = vmatmul.mubr.bf16.gmra.mrb[0].mxu0 %v1011
      %v1120 = vpop.f32.mrb[0].mxu0
      %v1121 = vadd.f32 0.0, %v1120
      %v1122 = vpop.f32.mrb[0].mxu0
      %v1123 = vpop.f32.mrb[0].mxu0
      %v1124 = vadd.f32 0.0, %v1123
      %v1125 = vpop.f32.mrb[0].mxu0
      %1126 = vmatprep.mubr.bf16.mxu0 0
      %1127 = vmatmul.mubr.bf16.gmra.mrb[0].mxu0 %v1014
      %v1128 = vpop.f32.mrb[0].mxu0
      %v1129 = vadd.f32 0.0, %v1128
      %v1130 = vpop.f32.mrb[0].mxu0
      %v1131 = vpop.f32.mrb[0].mxu0
      %v1132 = vadd.f32 0.0, %v1131
      %v1133 = vpop.f32.mrb[0].mxu0
      %1134 = vmatprep.mubr.bf16.mxu0 0
      %1135 = vmatmul.mubr.bf16.gmra.mrb[0].mxu0 %v1017
      %v1136 = vpop.f32.mrb[0].mxu0
      %v1137 = vadd.f32 0.0, %v1136
      %v1138 = vpop.f32.mrb[0].mxu0
      %v1139 = vpop.f32.mrb[0].mxu0
      %v1140 = vadd.f32 0.0, %v1139
      %v1141 = vpop.f32.mrb[0].mxu0
      %1142 = vmatprep.mubr.bf16.mxu0 0
      %1143 = vmatmul.mubr.bf16.gmra.mrb[0].mxu0 %v1020
      %v1144 = vpop.f32.mrb[0].mxu0
      %v1145 = vadd.f32 0.0, %v1144
      %v1146 = vpop.f32.mrb[0].mxu0
      %v1147 = vpop.f32.mrb[0].mxu0
      %v1148 = vadd.f32 0.0, %v1147
      %v1149 = vpop.f32.mrb[0].mxu0
      %1150 = vmatprep.mubr.bf16.mxu0 0
      %1151 = vmatmul.mubr.bf16.gmra.mrb[0].mxu0 %v1023
      %v1152 = vpop.f32.mrb[0].mxu0
      %v1153 = vadd.f32 0.0, %v1152
      %v1154 = vpop.f32.mrb[0].mxu0
      %v1155 = vpop.f32.mrb[0].mxu0
      %v1156 = vadd.f32 0.0, %v1155
      %v1157 = vpop.f32.mrb[0].mxu0
      %1158 = vmatprep.mubr.bf16.mxu0 0
      %1159 = vmatmul.mubr.bf16.gmra.mrb[0].mxu0 %v1026
      %v1160 = vpop.f32.mrb[0].mxu0
      %v1161 = vadd.f32 0.0, %v1160
      %v1162 = vpop.f32.mrb[0].mxu0
      %v1163 = vpop.f32.mrb[0].mxu0
      %v1164 = vadd.f32 0.0, %v1163
      %v1165 = vpop.f32.mrb[0].mxu0
      %1166 = vmatprep.mubr.bf16.mxu0 0
      %1167 = vmatmul.mubr.bf16.gmra.mrb[0].mxu0 %v1029
      %v1168 = vpop.f32.mrb[0].mxu0
      %v1169 = vadd.f32 0.0, %v1168
      %v1170 = vpop.f32.mrb[0].mxu0
      %v1171 = vpop.f32.mrb[0].mxu0
      %v1172 = vadd.f32 0.0, %v1171
      %v1173 = vpop.f32.mrb[0].mxu0
      %1174 = vmatprep.mubr.bf16.mxu0 0
      %1175 = vmatmul.mubr.bf16.gmra.mrb[0].mxu0 %v1032
      %v1176 = vpop.f32.mrb[0].mxu0
      %v1177 = vadd.f32 0.0, %v1176
      %v1178 = vpop.f32.mrb[0].mxu0
      %v1179 = vpop.f32.mrb[0].mxu0
      %v1180 = vadd.f32 0.0, %v1179
      %v1181 = vpop.f32.mrb[0].mxu0
      %1182 = vmatprep.mubr.bf16.mxu0 0
      %1183 = vmatmul.mubr.bf16.gmra.mrb[0].mxu0 %v1035
      %v1184 = vpop.f32.mrb[0].mxu0
      %v1185 = vadd.f32 0.0, %v1184
      %v1186 = vpop.f32.mrb[0].mxu0
      %v1187 = vpop.f32.mrb[0].mxu0
      %v1188 = vadd.f32 0.0, %v1187
      %v1189 = vpop.f32.mrb[0].mxu0
      %1190 = vmatprep.mubr.bf16.mxu0 0
      %1191 = vmatmul.mubr.bf16.gmra.mrb[0].mxu0 %v1038
      %v1192 = vpop.f32.mrb[0].mxu0
      %v1193 = vadd.f32 0.0, %v1192
      %v1194 = vpop.f32.mrb[0].mxu0
      %v1195 = vpop.f32.mrb[0].mxu0
      %v1196 = vadd.f32 0.0, %v1195
      %v1197 = vpop.f32.mrb[0].mxu0
      %1198 = vmatprep.mubr.bf16.mxu0 0
      %1199 = vmatmul.mubr.bf16.gmra.mrb[0].mxu0 %v1041
      %v1200 = vpop.f32.mrb[0].mxu0
      %v1201 = vadd.f32 0.0, %v1200
      %v1202 = vpop.f32.mrb[0].mxu0
      %v1203 = vpop.f32.mrb[0].mxu0
      %v1204 = vadd.f32 0.0, %v1203
      %v1205 = vpop.f32.mrb[0].mxu0
      %1206 = vdwg.mxu0
      %v1207 = vadd.f32 %v744, %v1081
      %v1208 = vadd.f32 %v747, %v1084
      %v1209 = vadd.f32 %v752, %v1089
      %v1210 = vadd.f32 %v755, %v1092
      %v1211 = vadd.f32 %v760, %v1097
      %v1212 = vadd.f32 %v763, %v1100
      %v1213 = vadd.f32 %v768, %v1105
      %v1214 = vadd.f32 %v771, %v1108
      %v1215 = vadd.f32 %v776, %v1113
      %v1216 = vadd.f32 %v779, %v1116
      %v1217 = vadd.f32 %v784, %v1121
      %v1218 = vadd.f32 %v787, %v1124
      %v1219 = vadd.f32 %v792, %v1129
      %v1220 = vadd.f32 %v795, %v1132
      %v1221 = vadd.f32 %v800, %v1137
      %v1222 = vadd.f32 %v803, %v1140
      %v1223 = vadd.f32 %v808, %v1145
      %v1224 = vadd.f32 %v811, %v1148
      %v1225 = vadd.f32 %v816, %v1153
      %v1226 = vadd.f32 %v819, %v1156
      %v1227 = vadd.f32 %v824, %v1161
      %v1228 = vadd.f32 %v827, %v1164
      %v1229 = vadd.f32 %v832, %v1169
      %v1230 = vadd.f32 %v835, %v1172
      %v1231 = vadd.f32 %v840, %v1177
      %v1232 = vadd.f32 %v843, %v1180
      %v1233 = vadd.f32 %v848, %v1185
      %v1234 = vadd.f32 %v851, %v1188
      %v1235 = vadd.f32 %v856, %v1193
      %v1236 = vadd.f32 %v859, %v1196
      %v1237 = vadd.f32 %v864, %v1201
      %v1238 = vadd.f32 %v867, %v1204
      %v1239 = vld [vmem:[%s2] sm:$0x1]
      %v1241 = vlaneseq
      %v1242 = vshrl.u32 %v1241, 7
      %v1243 = vsub.s32 0, %v1242
      %v1244 = vrot.slane %v1239, %v1243
      %v1246 = vadd.f32 %v1207, %v1244
      %v1247 = vadd.f32 %v1208, %v1244
      %v1248 = vadd.f32 %v1209, %v1244
      %v1249 = vadd.f32 %v1210, %v1244
      %v1250 = vadd.f32 %v1211, %v1244
      %v1251 = vadd.f32 %v1212, %v1244
      %v1252 = vadd.f32 %v1213, %v1244
      %v1253 = vadd.f32 %v1214, %v1244
      %v1254 = vadd.f32 %v1215, %v1244
      %v1255 = vadd.f32 %v1216, %v1244
      %v1256 = vadd.f32 %v1217, %v1244
      %v1257 = vadd.f32 %v1218, %v1244
      %v1258 = vadd.f32 %v1219, %v1244
      %v1259 = vadd.f32 %v1220, %v1244
      %v1260 = vadd.f32 %v1221, %v1244
      %v1261 = vadd.f32 %v1222, %v1244
      %v1262 = vadd.f32 %v1223, %v1244
      %v1263 = vadd.f32 %v1224, %v1244
      %v1264 = vadd.f32 %v1225, %v1244
      %v1265 = vadd.f32 %v1226, %v1244
      %v1266 = vadd.f32 %v1227, %v1244
      %v1267 = vadd.f32 %v1228, %v1244
      %v1268 = vadd.f32 %v1229, %v1244
      %v1269 = vadd.f32 %v1230, %v1244
      %v1270 = vadd.f32 %v1231, %v1244
      %v1271 = vadd.f32 %v1232, %v1244
      %v1272 = vadd.f32 %v1233, %v1244
      %v1273 = vadd.f32 %v1234, %v1244
      %v1274 = vadd.f32 %v1235, %v1244
      %v1275 = vadd.f32 %v1236, %v1244
      %v1276 = vadd.f32 %v1237, %v1244
      %v1277 = vadd.f32 %v1238, %v1244
      %v1278 = vmax.f32 %v1246, 0.0
      %v1279 = vmax.f32 %v1247, 0.0
      %v1280 = vmax.f32 %v1248, 0.0
      %v1281 = vmax.f32 %v1249, 0.0
      %v1282 = vmax.f32 %v1250, 0.0
      %v1283 = vmax.f32 %v1251, 0.0
      %v1284 = vmax.f32 %v1252, 0.0
      %v1285 = vmax.f32 %v1253, 0.0
      %v1286 = vmax.f32 %v1254, 0.0
      %v1287 = vmax.f32 %v1255, 0.0
      %v1288 = vmax.f32 %v1256, 0.0
      %v1289 = vmax.f32 %v1257, 0.0
      %v1290 = vmax.f32 %v1258, 0.0
      %v1291 = vmax.f32 %v1259, 0.0
      %v1292 = vmax.f32 %v1260, 0.0
      %v1293 = vmax.f32 %v1261, 0.0
      %v1294 = vmax.f32 %v1262, 0.0
      %v1295 = vmax.f32 %v1263, 0.0
      %v1296 = vmax.f32 %v1264, 0.0
      %v1297 = vmax.f32 %v1265, 0.0
      %v1298 = vmax.f32 %v1266, 0.0
      %v1299 = vmax.f32 %v1267, 0.0
      %v1300 = vmax.f32 %v1268, 0.0
      %v1301 = vmax.f32 %v1269, 0.0
      %v1302 = vmax.f32 %v1270, 0.0
      %v1303 = vmax.f32 %v1271, 0.0
      %v1304 = vmax.f32 %v1272, 0.0
      %v1305 = vmax.f32 %v1273, 0.0
      %v1306 = vmax.f32 %v1274, 0.0
      %v1307 = vmax.f32 %v1275, 0.0
      %v1308 = vmax.f32 %v1276, 0.0
      %v1309 = vmax.f32 %v1277, 0.0
      %v1310 = vpack.c.bf16 %v1279, %v1278
      %v1311 = vpack.c.bf16 %v1281, %v1280
      %v1312 = vpack.c.bf16 %v1283, %v1282
      %v1313 = vpack.c.bf16 %v1285, %v1284
      %v1314 = vpack.c.bf16 %v1287, %v1286
      %v1315 = vpack.c.bf16 %v1289, %v1288
      %v1316 = vpack.c.bf16 %v1291, %v1290
      %v1317 = vpack.c.bf16 %v1293, %v1292
      %v1318 = vpack.c.bf16 %v1295, %v1294
      %v1319 = vpack.c.bf16 %v1297, %v1296
      %v1320 = vpack.c.bf16 %v1299, %v1298
      %v1321 = vpack.c.bf16 %v1301, %v1300
      %v1322 = vpack.c.bf16 %v1303, %v1302
      %v1323 = vpack.c.bf16 %v1305, %v1304
      %v1324 = vpack.c.bf16 %v1307, %v1306
      %v1325 = vpack.c.bf16 %v1309, %v1308
      %v1342 = vunpack.c.l.b16 %v1310
      %v1343 = vunpack.c.h.b16 %v1310
      %v1344 = vunpack.c.l.b16 %v1311
      %v1345 = vunpack.c.h.b16 %v1311
      %v1346 = vunpack.c.l.b16 %v1312
      %v1347 = vunpack.c.h.b16 %v1312
      %v1348 = vunpack.c.l.b16 %v1313
      %v1349 = vunpack.c.h.b16 %v1313
      %v1350 = vunpack.c.l.b16 %v1314
      %v1351 = vunpack.c.h.b16 %v1314
      %v1352 = vunpack.c.l.b16 %v1315
      %v1353 = vunpack.c.h.b16 %v1315
      %v1354 = vunpack.c.l.b16 %v1316
      %v1355 = vunpack.c.h.b16 %v1316
      %v1356 = vunpack.c.l.b16 %v1317
      %v1357 = vunpack.c.h.b16 %v1317
      %v1358 = vunpack.c.l.b16 %v1318
      %v1359 = vunpack.c.h.b16 %v1318
      %v1360 = vunpack.c.l.b16 %v1319
      %v1361 = vunpack.c.h.b16 %v1319
      %v1362 = vunpack.c.l.b16 %v1320
      %v1363 = vunpack.c.h.b16 %v1320
      %v1364 = vunpack.c.l.b16 %v1321
      %v1365 = vunpack.c.h.b16 %v1321
      %v1366 = vunpack.c.l.b16 %v1322
      %v1367 = vunpack.c.h.b16 %v1322
      %v1368 = vunpack.c.l.b16 %v1323
      %v1369 = vunpack.c.h.b16 %v1323
      %v1370 = vunpack.c.l.b16 %v1324
      %v1371 = vunpack.c.h.b16 %v1324
      %v1372 = vunpack.c.l.b16 %v1325
      %v1373 = vunpack.c.h.b16 %v1325
      %v1374 = vpack.c.b16 %v1342, %v1342
      %v1375 = vpack.c.b16 %v1343, %v1343
      %v1376 = vpack.c.b16 %v1344, %v1344
      %v1377 = vpack.c.b16 %v1345, %v1345
      %v1378 = vpack.c.b16 %v1346, %v1346
      %v1379 = vpack.c.b16 %v1347, %v1347
      %v1380 = vpack.c.b16 %v1348, %v1348
      %v1381 = vpack.c.b16 %v1349, %v1349
      %v1382 = vpack.c.b16 %v1350, %v1350
      %v1383 = vpack.c.b16 %v1351, %v1351
      %v1384 = vpack.c.b16 %v1352, %v1352
      %v1385 = vpack.c.b16 %v1353, %v1353
      %v1386 = vpack.c.b16 %v1354, %v1354
      %v1387 = vpack.c.b16 %v1355, %v1355
      %v1388 = vpack.c.b16 %v1356, %v1356
      %v1389 = vpack.c.b16 %v1357, %v1357
      %v1390 = vpack.c.b16 %v1358, %v1358
      %v1391 = vpack.c.b16 %v1359, %v1359
      %v1392 = vpack.c.b16 %v1360, %v1360
      %v1393 = vpack.c.b16 %v1361, %v1361
      %v1394 = vpack.c.b16 %v1362, %v1362
      %v1395 = vpack.c.b16 %v1363, %v1363
      %v1396 = vpack.c.b16 %v1364, %v1364
      %v1397 = vpack.c.b16 %v1365, %v1365
      %v1398 = vpack.c.b16 %v1366, %v1366
      %v1399 = vpack.c.b16 %v1367, %v1367
      %v1400 = vpack.c.b16 %v1368, %v1368
      %v1401 = vpack.c.b16 %v1369, %v1369
      %v1402 = vpack.c.b16 %v1370, %v1370
      %v1403 = vpack.c.b16 %v1371, %v1371
      %v1404 = vpack.c.b16 %v1372, %v1372
      %v1405 = vpack.c.b16 %v1373, %v1373
      %vm1438 = vcmask 60416
      %1439 = vst.msk [vmem:[%s192] sm:$0xf] %vm1438, %v1374
      %1440 = vst.msk [vmem:[%s192 + $0x4] sm:$0xf] %vm1438, %v1375
      %1441 = vst.msk [vmem:[%s192 + $0x8] sm:$0xf] %vm1438, %v1376
      %1442 = vst.msk [vmem:[%s192 + $0xc] sm:$0xf] %vm1438, %v1377
      %1443 = vst.msk [vmem:[%s192 + $0x10] sm:$0xf] %vm1438, %v1378
      %1444 = vst.msk [vmem:[%s192 + $0x14] sm:$0xf] %vm1438, %v1379
      %1445 = vst.msk [vmem:[%s192 + $0x18] sm:$0xf] %vm1438, %v1380
      %1446 = vst.msk [vmem:[%s192 + $0x1c] sm:$0xf] %vm1438, %v1381
      %1447 = vst.msk [vmem:[%s192 + $0x20] sm:$0xf] %vm1438, %v1382
      %1448 = vst.msk [vmem:[%s192 + $0x24] sm:$0xf] %vm1438, %v1383
      %1449 = vst.msk [vmem:[%s192 + $0x28] sm:$0xf] %vm1438, %v1384
      %1450 = vst.msk [vmem:[%s192 + $0x2c] sm:$0xf] %vm1438, %v1385
      %1451 = vst.msk [vmem:[%s192 + $0x30] sm:$0xf] %vm1438, %v1386
      %1452 = vst.msk [vmem:[%s192 + $0x34] sm:$0xf] %vm1438, %v1387
      %1453 = vst.msk [vmem:[%s192 + $0x38] sm:$0xf] %vm1438, %v1388
      %1454 = vst.msk [vmem:[%s192 + $0x3c] sm:$0xf] %vm1438, %v1389
      %1455 = vst.msk [vmem:[%s192 + $0x40] sm:$0xf] %vm1438, %v1390
      %1456 = vst.msk [vmem:[%s192 + $0x44] sm:$0xf] %vm1438, %v1391
      %1457 = vst.msk [vmem:[%s192 + $0x48] sm:$0xf] %vm1438, %v1392
      %1458 = vst.msk [vmem:[%s192 + $0x4c] sm:$0xf] %vm1438, %v1393
      %1459 = vst.msk [vmem:[%s192 + $0x50] sm:$0xf] %vm1438, %v1394
      %1460 = vst.msk [vmem:[%s192 + $0x54] sm:$0xf] %vm1438, %v1395
      %1461 = vst.msk [vmem:[%s192 + $0x58] sm:$0xf] %vm1438, %v1396
      %1462 = vst.msk [vmem:[%s192 + $0x5c] sm:$0xf] %vm1438, %v1397
      %1463 = vst.msk [vmem:[%s192 + $0x60] sm:$0xf] %vm1438, %v1398
      %1464 = vst.msk [vmem:[%s192 + $0x64] sm:$0xf] %vm1438, %v1399
      %1465 = vst.msk [vmem:[%s192 + $0x68] sm:$0xf] %vm1438, %v1400
      %1466 = vst.msk [vmem:[%s192 + $0x6c] sm:$0xf] %vm1438, %v1401
      %1467 = vst.msk [vmem:[%s192 + $0x70] sm:$0xf] %vm1438, %v1402
      %1468 = vst.msk [vmem:[%s192 + $0x74] sm:$0xf] %vm1438, %v1403
      %1469 = vst.msk [vmem:[%s192 + $0x78] sm:$0xf] %vm1438, %v1404
      %1470 = vst.msk [vmem:[%s192 + $0x7c] sm:$0xf] %vm1438, %v1405
      %s1471 = smul.u32 32, %s19
      %p1472 = scmp.lt.s32.totalorder %s18, 1
      %s1473 = scalar_select %p1472, %s18, 1
      %p1474 = scmp.lt.s32.totalorder %s1471, 31
      %s1475 = scalar_select %p1474, %s1471, 31
      %s1476 = smul.addr %s1473, 32
      %s1477 = sadd.s32 %s1475, %s1476
      %s1478 = smul.addr %s1477, 4
      %s1479 = scalar_lea.vmem %s3, %s1478
      // Predicated region
      $region33: #{downsample_layer_forward.3} parent=31 // pred_check
        %p1480 = pneg %p114
      $region34: #{downsample_layer_forward.3} parent=31 // pred_check_branch
        %1482 = sbr.rel (%p1480) target = $region36
      $region35: #{downsample_layer_forward.3} parent=31 // pred_region
        %s1483 = smul.u32 32, %s19
      $region36: #{downsample_layer_forward.3} parent=31 // pred_fallthru
        _
    $region32: #{downsample_layer_forward.3} parent=5 // pred_fallthru
      _
    %p1484 = scmp.le.s32.totalorder 2, %s9
    // Predicated region
    $region37: #{downsample_layer_forward.3} parent=5 // pred_check
      %p1485 = pneg %p1484
    $region38: #{downsample_layer_forward.3} parent=5 // pred_check_branch
      %1487 = sbr.rel (%p1485) target = $region40
    $region39: #{downsample_layer_forward.3} parent=5 // pred_region
      %s1488 = ssub.s32 %s9, 2
      // Predicated region
      $region41: #{downsample_layer_forward.3} parent=39 // pred_check
        %p1489 = pneg %p120
      $region42: #{downsample_layer_forward.3} parent=39 // pred_check_branch
        %1491 = sbr.rel (%p1489) target = $region44
      $region43: #{downsample_layer_forward.3} parent=39 // pred_region
        %s1492 = smul.u32 32, %s21
        %p1493 = scmp.lt.s32.totalorder %s20, 1
        %s1494 = scalar_select %p1493, %s20, 1
        %p1495 = scmp.lt.s32.totalorder %s1492, 31
        %s1496 = scalar_select %p1495, %s1492, 31
        %s1497 = smul.addr %s1494, 32
        %s1498 = sadd.s32 %s1496, %s1497
        %s1499 = smul.addr %s1498, 4
        %s1500 = scalar_lea.vmem %s3, %s1499
      $region44: #{downsample_layer_forward.3} parent=39 // pred_fallthru
        _
    $region40: #{downsample_layer_forward.3} parent=5 // pred_fallthru
      _
  $region6: #{downsample_layer_forward.3} parent=0 // loop_footer
    %s13 = sadd.s32 1, %s9
  $region7: #{downsample_layer_forward.3} parent=0 // loop_footer_branch
    %8 = sbr.rel target = $region3
  $region8: #{downsample_layer_forward.3} parent=0 // loop_exit
    _

// kernel: downsample_layer_forward.4
$region0: #{downsample_layer_forward.4}
  #allocation0 [shape = 'u32[]', space=smem, size = 0x4, offset = 0x4, fixed_abs, tag = 'smem constant byte address 0x4 - core index']
  #allocation1 [shape = 'u32[144,128]{1,0:T(1,128)}', space=vmem, size = 0x12000, scoped, tag = 'internal scratch']
  %s0 = inlined_call_operand.vmem [shape: bf16[2,288,24], index: 0, kind: input, shape index: {}]
  %s1 = inlined_call_operand.vmem [shape: bf16[3,24,8], index: 1, kind: input, shape index: {}]
  %s2 = inlined_call_operand.vmem [shape: f32[1,8], index: 2, kind: input, shape index: {}]
  %s3 = inlined_call_operand.vmem [shape: f32[2,256,8], index: 3, kind: output, shape index: {}]
  %s4 = sld [smem:[#allocation0]]
  $region45: #{downsample_layer_forward.4} parent=0
    _
  %s6 = ssub.s32 1, %s4
  %s7 = scalar_select 0, %s6, %s4
  loop: start=0, step=1, limit=4
  $region2: #{downsample_layer_forward.4} parent=0 // loop_pre_header
    _
  $region3: #{downsample_layer_forward.4} parent=0 // loop_header
    %s9 = sphi 0, %s13
    %p10 = scmp.ge.s32.totalorder %s9, 4
    %s16 = sphi 0, %s28
    %s17 = sphi 0, %s24
    %s18 = sphi 0, %s16
    %s19 = sphi 0, %s17
    %s20 = sphi 0, %s18
    %s21 = sphi 0, %s19
    %s31 = sphi 0, %s33
    %s34 = sphi 0, %s31
    %s35 = sphi 0, %s34
    %s51 = sphi 0, %s35
    %s55 = sphi 0, %s55
    %s57 = sphi 0, %s55
    %s58 = sphi 0, %s57
    %s72 = sphi 0, %s58
    %s76 = sphi 0, %s76
    %s78 = sphi 0, %s76
    %s79 = sphi 0, %s78
    %s93 = sphi 0, %s79
    %s101 = sphi 0, %s103
    %s104 = sphi 0, %s101
    %s105 = sphi 0, %s104
    %s121 = sphi 0, %s105
  $region4: #{downsample_layer_forward.4} parent=0 // loop_header_branch
    %12 = sbr.rel (%p10) target = $region8
  $region5: #{downsample_layer_forward.4} parent=0 // loop_body
    %s14 = ssub.s32 %s9, 1
    %s15 = ssub.s32 %s9, 2
    %s22 = sadd.s32 1, %s17
    %p23 = scmp.ge.s32.totalorder %s22, 1
    %s24 = scalar_select %p23, 0, %s22
    %s25 = sadd.s32 1, %s16
    %s26 = scalar_select %p23, %s25, %s16
    %p27 = scmp.ge.s32.totalorder %s26, 2
    %s28 = scalar_select %p27, 0, %s26
    %s29 = ssub.s32 %s16, %s28
    %p30 = scmp.eq.s32.totalorder %s29, 0
    %s32 = sadd.s32 %s31, 1
    %s33 = scalar_select %p30, %s31, %s32
    %p36 = pneg %p30
    %p37 = scmp.eq.s32.totalorder %s9, 1
    %p38 = por %p36, %p37
    %p39 = scmp.ne.s32.totalorder %s31, %s34
    %p40 = scmp.eq.s32.totalorder %s9, 0
    %p41 = por %p39, %p40
    %p42 = scmp.ne.s32.totalorder %s31, %s34
    %p43 = scmp.eq.s32.totalorder %s14, 1
    %p44 = por %p42, %p43
    %p45 = scmp.ne.s32.totalorder %s34, %s35
    %p46 = scmp.eq.s32.totalorder %s14, 0
    %p47 = por %p45, %p46
    %p48 = scmp.ne.s32.totalorder %s34, %s35
    %p49 = scmp.eq.s32.totalorder %s15, 1
    %p50 = por %p48, %p49
    %p52 = scmp.ne.s32.totalorder %s35, %s51
    %p53 = scmp.eq.s32.totalorder %s15, 0
    %p54 = por %p52, %p53
    %s56 = sadd.s32 %s55, 1
    %p59 = scmp.eq.s32.totalorder %s9, 1
    %p60 = scmp.ne.s32.totalorder %s55, %s57
    %p61 = scmp.eq.s32.totalorder %s9, 0
    %p62 = por %p60, %p61
    %p63 = scmp.ne.s32.totalorder %s55, %s57
    %p64 = scmp.eq.s32.totalorder %s14, 1
    %p65 = por %p63, %p64
    %p66 = scmp.ne.s32.totalorder %s57, %s58
    %p67 = scmp.eq.s32.totalorder %s14, 0
    %p68 = por %p66, %p67
    %p69 = scmp.ne.s32.totalorder %s57, %s58
    %p70 = scmp.eq.s32.totalorder %s15, 1
    %p71 = por %p69, %p70
    %p73 = scmp.ne.s32.totalorder %s58, %s72
    %p74 = scmp.eq.s32.totalorder %s15, 0
    %p75 = por %p73, %p74
    %s77 = sadd.s32 %s76, 1
    %p80 = scmp.eq.s32.totalorder %s9, 1
    %p81 = scmp.ne.s32.totalorder %s76, %s78
    %p82 = scmp.eq.s32.totalorder %s9, 0
    %p83 = por %p81, %p82
    %p84 = scmp.ne.s32.totalorder %s76, %s78
    %p85 = scmp.eq.s32.totalorder %s14, 1
    %p86 = por %p84, %p85
    %p87 = scmp.ne.s32.totalorder %s78, %s79
    %p88 = scmp.eq.s32.totalorder %s14, 0
    %p89 = por %p87, %p88
    %p90 = scmp.ne.s32.totalorder %s78, %s79
    %p91 = scmp.eq.s32.totalorder %s15, 1
    %p92 = por %p90, %p91
    %p94 = scmp.ne.s32.totalorder %s79, %s93
    %p95 = scmp.eq.s32.totalorder %s15, 0
    %p96 = por %p94, %p95
    %s97 = ssub.s32 %s16, %s28
    %s98 = ssub.s32 %s17, %s24
    %s99 = sor.u32 %s97, %s98
    %p100 = scmp.eq.s32.totalorder %s99, 0
    %s102 = sadd.s32 %s101, 1
    %s103 = scalar_select %p100, %s101, %s102
    %p106 = pneg %p100
    %p107 = scmp.eq.s32.totalorder %s9, 1
    %p108 = por %p106, %p107
    %p109 = scmp.ne.s32.totalorder %s101, %s104
    %p110 = scmp.eq.s32.totalorder %s9, 0
    %p111 = por %p109, %p110
    %p112 = scmp.ne.s32.totalorder %s101, %s104
    %p113 = scmp.eq.s32.totalorder %s14, 1
    %p114 = por %p112, %p113
    %p115 = scmp.ne.s32.totalorder %s104, %s105
    %p116 = scmp.eq.s32.totalorder %s14, 0
    %p117 = por %p115, %p116
    %p118 = scmp.ne.s32.totalorder %s104, %s105
    %p119 = scmp.eq.s32.totalorder %s15, 1
    %p120 = por %p118, %p119
    %p122 = scmp.ne.s32.totalorder %s105, %s121
    %p123 = scmp.eq.s32.totalorder %s15, 0
    %p124 = por %p122, %p123
    %p125 = scmp.le.s32.totalorder 1, %s9
    %p126 = scmp.lt.s32.totalorder %s9, 3
    %p127 = pnand %p125, %p126
    %p128 = pneg %p127
    // Predicated region
    $region9: #{downsample_layer_forward.4} parent=5 // pred_check
      _
    $region10: #{downsample_layer_forward.4} parent=5 // pred_check_branch
      %130 = sbr.rel (%p127) target = $region12
    $region11: #{downsample_layer_forward.4} parent=5 // pred_region
      %s131 = ssub.s32 %s9, 1
      // Predicated region
      $region13: #{downsample_layer_forward.4} parent=11 // pred_check
        %p132 = pneg %p68
      $region14: #{downsample_layer_forward.4} parent=11 // pred_check_branch
        %134 = sbr.rel (%p132) target = $region16
      $region15: #{downsample_layer_forward.4} parent=11 // pred_region
        _
      $region16: #{downsample_layer_forward.4} parent=11 // pred_fallthru
        _
      // Predicated region
      $region17: #{downsample_layer_forward.4} parent=11 // pred_check
        %p135 = pneg %p89
      $region18: #{downsample_layer_forward.4} parent=11 // pred_check_branch
        %137 = sbr.rel (%p135) target = $region20
      $region19: #{downsample_layer_forward.4} parent=11 // pred_region
        _
      $region20: #{downsample_layer_forward.4} parent=11 // pred_fallthru
        _
    $region12: #{downsample_layer_forward.4} parent=5 // pred_fallthru
      _
    %p138 = scmp.lt.s32.totalorder %s9, 2
    // Predicated region
    $region21: #{downsample_layer_forward.4} parent=5 // pred_check
      %p139 = pneg %p138
    $region22: #{downsample_layer_forward.4} parent=5 // pred_check_branch
      %141 = sbr.rel (%p139) target = $region24
    $region23: #{downsample_layer_forward.4} parent=5 // pred_region
      // Predicated region
      $region25: #{downsample_layer_forward.4} parent=23 // pred_check
        %p142 = pneg %p41
      $region26: #{downsample_layer_forward.4} parent=23 // pred_check_branch
        %144 = sbr.rel (%p142) target = $region28
      $region27: #{downsample_layer_forward.4} parent=23 // pred_region
        %p145 = scmp.lt.s32.totalorder %s16, 1
        %s146 = scalar_select %p145, %s16, 1
        %s147 = smul.addr %s146, 36
        %s148 = smul.addr %s147, 4
        %s149 = scalar_lea.vmem %s0, %s148
      $region28: #{downsample_layer_forward.4} parent=23 // pred_fallthru
        _
    $region24: #{downsample_layer_forward.4} parent=5 // pred_fallthru
      _
    %p150 = scmp.le.s32.totalorder 1, %s9
    %p151 = scmp.lt.s32.totalorder %s9, 3
    %p152 = pnand %p150, %p151
    %p153 = pneg %p152
    // Predicated region
    $region29: #{downsample_layer_forward.4} parent=5 // pred_check
      _
    $region30: #{downsample_layer_forward.4} parent=5 // pred_check_branch
      %155 = sbr.rel (%p152) target = $region32
    $region31: #{downsample_layer_forward.4} parent=5 // pred_region
      %s156 = ssub.s32 %s9, 1
      %p157 = scmp.lt.s32.totalorder %s18, 1
      %s158 = scalar_select %p157, %s18, 1
      %s159 = smul.addr %s158, 36
      %s160 = smul.addr %s159, 4
      %s161 = scalar_lea.vmem %s0, %s160
      %p162 = pneg %p47
      %p163 = pneg %p44
      %p164 = pneg %p68
      %p165 = pneg %p65
      %p166 = pneg %p89
      %p167 = pneg %p86
      %p168 = pneg %p117
      %p169 = pneg %p114
      %s170 = smul.u32 32, %s19
      %p171 = scmp.lt.s32.totalorder %s18, 1
      %s172 = scalar_select %p171, %s18, 1
      %p173 = scmp.lt.s32.totalorder %s170, 31
      %s174 = scalar_select %p173, %s170, 31
      %s175 = smul.addr %s172, 32
      %s176 = sadd.s32 %s174, %s175
      %s177 = smul.addr %s176, 8
      %s178 = scalar_lea.vmem %s3, %s177
      %p179 = scmp.lt.s32.totalorder %s18, 1
      %s180 = scalar_select %p179, %s18, 1
      %s181 = smul.addr %s180, 36
      %s182 = smul.addr %s181, 4
      %s183 = scalar_lea.vmem %s0, %s182
      %s184 = smul.u32 32, %s19
      %p185 = scmp.lt.s32.totalorder %s18, 1
      %s186 = scalar_select %p185, %s18, 1
      %p187 = scmp.lt.s32.totalorder %s184, 31
      %s188 = scalar_select %p187, %s184, 31
      %s189 = smul.addr %s186, 32
      %s190 = sadd.s32 %s188, %s189
      %s191 = smul.addr %s190, 8
      %s192 = scalar_lea.vmem %s3, %s191
      %s193 = smul.u32 32, %s19
      %s195 = smul.u32 %s19, 256
      %s196 = sshra.s32 %s195, 3
      %s197 = sand.u32 %s195, 7
      %s198 = smul.addr %s196, 4
      %s199 = scalar_lea.vmem %s183, %s198
      %v200 = vld [vmem:[%s199] sm:$0xf]
      %v201 = vld [vmem:[%s199 + $0x4] sm:$0xf]
      %v202 = vld [vmem:[%s199 + $0x8] sm:$0xf]
      %v203 = vld [vmem:[%s199 + $0xc] sm:$0xf]
      %v204 = vld [vmem:[%s199 + $0x10] sm:$0xf]
      %v205 = vld [vmem:[%s199 + $0x14] sm:$0xf]
      %v206 = vld [vmem:[%s199 + $0x18] sm:$0xf]
      %v207 = vld [vmem:[%s199 + $0x1c] sm:$0xf]
      %v208 = vld [vmem:[%s199 + $0x20] sm:$0xf]
      %v209 = vld [vmem:[%s199 + $0x24] sm:$0xf]
      %v210 = vld [vmem:[%s199 + $0x28] sm:$0xf]
      %v211 = vld [vmem:[%s199 + $0x2c] sm:$0xf]
      %v212 = vld [vmem:[%s199 + $0x30] sm:$0xf]
      %v213 = vld [vmem:[%s199 + $0x34] sm:$0xf]
      %v214 = vld [vmem:[%s199 + $0x38] sm:$0xf]
      %v215 = vld [vmem:[%s199 + $0x3c] sm:$0xf]
      %v216 = vld [vmem:[%s199 + $0x40] sm:$0xf]
      %v217 = vld [vmem:[%s199 + $0x44] sm:$0xf]
      %v218 = vld [vmem:[%s199 + $0x48] sm:$0xf]
      %v219 = vld [vmem:[%s199 + $0x4c] sm:$0xf]
      %v220 = vld [vmem:[%s199 + $0x50] sm:$0xf]
      %v221 = vld [vmem:[%s199 + $0x54] sm:$0xf]
      %v222 = vld [vmem:[%s199 + $0x58] sm:$0xf]
      %v223 = vld [vmem:[%s199 + $0x5c] sm:$0xf]
      %v224 = vld [vmem:[%s199 + $0x60] sm:$0xf]
      %v225 = vld [vmem:[%s199 + $0x64] sm:$0xf]
      %v226 = vld [vmem:[%s199 + $0x68] sm:$0xf]
      %v227 = vld [vmem:[%s199 + $0x6c] sm:$0xf]
      %v228 = vld [vmem:[%s199 + $0x70] sm:$0xf]
      %v229 = vld [vmem:[%s199 + $0x74] sm:$0xf]
      %v230 = vld [vmem:[%s199 + $0x78] sm:$0xf]
      %v231 = vld [vmem:[%s199 + $0x7c] sm:$0xf]
      %v232 = vld [vmem:[%s1] sm:$0xf]
      %v233 = vld [vmem:[%s1 + $0x4] sm:$0xf]
      %v234 = vld [vmem:[%s1 + $0x8] sm:$0xf]
      %s235 = sadd.s32 %s195, 16
      %s236 = sshra.s32 %s235, 3
      %s237 = sand.u32 %s235, 7
      %s238 = smul.addr %s236, 4
      %s239 = scalar_lea.vmem %s183, %s238
      %v240 = vld [vmem:[%s239] sm:$0xf]
      %v241 = vld [vmem:[%s239 + $0x4] sm:$0xf]
      %v242 = vld [vmem:[%s239 + $0x8] sm:$0xf]
      %v243 = vld [vmem:[%s239 + $0xc] sm:$0xf]
      %v244 = vld [vmem:[%s239 + $0x10] sm:$0xf]
      %v245 = vld [vmem:[%s239 + $0x14] sm:$0xf]
      %v246 = vld [vmem:[%s239 + $0x18] sm:$0xf]
      %v247 = vld [vmem:[%s239 + $0x1c] sm:$0xf]
      %v248 = vld [vmem:[%s239 + $0x20] sm:$0xf]
      %v249 = vld [vmem:[%s239 + $0x24] sm:$0xf]
      %v250 = vld [vmem:[%s239 + $0x28] sm:$0xf]
      %v251 = vld [vmem:[%s239 + $0x2c] sm:$0xf]
      %v252 = vld [vmem:[%s239 + $0x30] sm:$0xf]
      %v253 = vld [vmem:[%s239 + $0x34] sm:$0xf]
      %v254 = vld [vmem:[%s239 + $0x38] sm:$0xf]
      %v255 = vld [vmem:[%s239 + $0x3c] sm:$0xf]
      %v256 = vld [vmem:[%s239 + $0x40] sm:$0xf]
      %v257 = vld [vmem:[%s239 + $0x44] sm:$0xf]
      %v258 = vld [vmem:[%s239 + $0x48] sm:$0xf]
      %v259 = vld [vmem:[%s239 + $0x4c] sm:$0xf]
      %v260 = vld [vmem:[%s239 + $0x50] sm:$0xf]
      %v261 = vld [vmem:[%s239 + $0x54] sm:$0xf]
      %v262 = vld [vmem:[%s239 + $0x58] sm:$0xf]
      %v263 = vld [vmem:[%s239 + $0x5c] sm:$0xf]
      %v264 = vld [vmem:[%s239 + $0x60] sm:$0xf]
      %v265 = vld [vmem:[%s239 + $0x64] sm:$0xf]
      %v266 = vld [vmem:[%s239 + $0x68] sm:$0xf]
      %v267 = vld [vmem:[%s239 + $0x6c] sm:$0xf]
      %v268 = vld [vmem:[%s239 + $0x70] sm:$0xf]
      %v269 = vld [vmem:[%s239 + $0x74] sm:$0xf]
      %v270 = vld [vmem:[%s239 + $0x78] sm:$0xf]
      %v271 = vld [vmem:[%s239 + $0x7c] sm:$0xf]
      %s272 = scalar_lea.vmem %s1, 12
      %v273 = vld [vmem:[%s272] sm:$0xf]
      %v274 = vld [vmem:[%s272 + $0x4] sm:$0xf]
      %v275 = vld [vmem:[%s272 + $0x8] sm:$0xf]
      %v308 = vunpack.c.l.b16 %v240
      %v309 = vunpack.c.l.b16 %v241
      %v310 = vunpack.c.l.b16 %v242
      %v311 = vunpack.c.l.b16 %v243
      %v312 = vunpack.c.l.b16 %v244
      %v313 = vunpack.c.l.b16 %v245
      %v314 = vunpack.c.l.b16 %v246
      %v315 = vunpack.c.l.b16 %v247
      %v316 = vunpack.c.l.b16 %v248
      %v317 = vunpack.c.l.b16 %v249
      %v318 = vunpack.c.l.b16 %v250
      %v319 = vunpack.c.l.b16 %v251
      %v320 = vunpack.c.l.b16 %v252
      %v321 = vunpack.c.l.b16 %v253
      %v322 = vunpack.c.l.b16 %v254
      %v323 = vunpack.c.l.b16 %v255
      %v324 = vunpack.c.l.b16 %v256
      %v325 = vunpack.c.l.b16 %v257
      %v326 = vunpack.c.l.b16 %v258
      %v327 = vunpack.c.l.b16 %v259
      %v328 = vunpack.c.l.b16 %v260
      %v329 = vunpack.c.l.b16 %v261
      %v330 = vunpack.c.l.b16 %v262
      %v331 = vunpack.c.l.b16 %v263
      %v332 = vunpack.c.l.b16 %v264
      %v333 = vunpack.c.l.b16 %v265
      %v334 = vunpack.c.l.b16 %v266
      %v335 = vunpack.c.l.b16 %v267
      %v336 = vunpack.c.l.b16 %v268
      %v337 = vunpack.c.l.b16 %v269
      %v338 = vunpack.c.l.b16 %v270
      %v339 = vunpack.c.l.b16 %v271
      %v340 = vpack.c.b16 %v309, %v308
      %v341 = vpack.c.b16 %v311, %v310
      %v342 = vpack.c.b16 %v313, %v312
      %v343 = vpack.c.b16 %v315, %v314
      %v344 = vpack.c.b16 %v317, %v316
      %v345 = vpack.c.b16 %v319, %v318
      %v346 = vpack.c.b16 %v321, %v320
      %v347 = vpack.c.b16 %v323, %v322
      %v348 = vpack.c.b16 %v325, %v324
      %v349 = vpack.c.b16 %v327, %v326
      %v350 = vpack.c.b16 %v329, %v328
      %v351 = vpack.c.b16 %v331, %v330
      %v352 = vpack.c.b16 %v333, %v332
      %v353 = vpack.c.b16 %v335, %v334
      %v354 = vpack.c.b16 %v337, %v336
      %v355 = vpack.c.b16 %v339, %v338
      %v359 = vunpack.c.l.b16 %v273
      %v360 = vunpack.c.l.b16 %v274
      %v361 = vunpack.c.l.b16 %v275
      %v362 = vpack.c.b16 %v360, %v359
      %v363 = vpack.c.b16 %v361, %v361
      %vm365 = vcmask 195584
      %v367 = vsel %vm365, %v340, 0
      %v370 = vsel %vm365, %v341, 0
      %v373 = vsel %vm365, %v342, 0
      %v376 = vsel %vm365, %v343, 0
      %v379 = vsel %vm365, %v344, 0
      %v382 = vsel %vm365, %v345, 0
      %v385 = vsel %vm365, %v346, 0
      %v388 = vsel %vm365, %v347, 0
      %v391 = vsel %vm365, %v348, 0
      %v394 = vsel %vm365, %v349, 0
      %v397 = vsel %vm365, %v350, 0
      %v400 = vsel %vm365, %v351, 0
      %v403 = vsel %vm365, %v352, 0
      %v406 = vsel %vm365, %v353, 0
      %v409 = vsel %vm365, %v354, 0
      %v412 = vsel %vm365, %v355, 0
      %vm414 = vcmask 1043456
      %v416 = vsel %vm414, %v363, 0
      %418 = vmatprep.subr.bf16.mxu0 0
      %419 = vmatpush1.bf16.msra.mxu0 %v362
      %420 = vmatprep.subr.bf16.mxu0 0
      %421 = vmatpush1.bf16.msra.mxu0 %v416
      %422 = vmatprep.subr.bf16.mxu0 0
      %423 = vmatpush1.bf16.msra.mxu0 0
      %424 = vmatprep.subr.bf16.mxu0 0
      %425 = vmatpush1.bf16.msra.mxu0 0
      %426 = vmatprep.subr.bf16.mxu0 0
      %427 = vmatpush1.bf16.msra.mxu0 0
      %428 = vmatprep.subr.bf16.mxu0 0
      %429 = vmatpush1.bf16.msra.mxu0 0
      %430 = vmatprep.subr.bf16.mxu0 0
      %431 = vmatpush1.bf16.msra.mxu0 0
      %432 = vmatprep.subr.bf16.mxu0 0
      %433 = vmatpush1.bf16.msra.mxu0 0
      %434 = vmatprep.subr.bf16.mxu0 0
      %435 = vmatpush1.bf16.msra.mxu0 0
      %436 = vmatprep.subr.bf16.mxu0 0
      %437 = vmatpush1.bf16.msra.mxu0 0
      %438 = vmatprep.subr.bf16.mxu0 0
      %439 = vmatpush1.bf16.msra.mxu0 0
      %440 = vmatprep.subr.bf16.mxu0 0
      %441 = vmatpush1.bf16.msra.mxu0 0
      %442 = vmatprep.subr.bf16.mxu0 0
      %443 = vmatpush1.bf16.msra.mxu0 0
      %444 = vmatprep.subr.bf16.mxu0 0
      %445 = vmatpush1.bf16.msra.mxu0 0
      %446 = vmatprep.subr.bf16.mxu0 0
      %447 = vmatpush1.bf16.msra.mxu0 0
      %448 = vmatprep.subr.bf16.mxu0 0
      %449 = vmatpush1.bf16.msra.mxu0 0
      %450 = vmatprep.mubr.bf16.mxu0 0
      %451 = vmatmul.mubr.bf16.gmra.mrb[0].mxu0 %v367
      %v452 = vpop.f32.mrb[0].mxu0
      %v453 = vadd.f32 0.0, %v452
      %v454 = vpop.f32.mrb[0].mxu0
      %v455 = vpop.f32.mrb[0].mxu0
      %v456 = vadd.f32 0.0, %v455
      %v457 = vpop.f32.mrb[0].mxu0
      %458 = vmatprep.mubr.bf16.mxu0 0
      %459 = vmatmul.mubr.bf16.gmra.mrb[0].mxu0 %v370
      %v460 = vpop.f32.mrb[0].mxu0
      %v461 = vadd.f32 0.0, %v460
      %v462 = vpop.f32.mrb[0].mxu0
      %v463 = vpop.f32.mrb[0].mxu0
      %v464 = vadd.f32 0.0, %v463
      %v465 = vpop.f32.mrb[0].mxu0
      %466 = vmatprep.mubr.bf16.mxu0 0
      %467 = vmatmul.mubr.bf16.gmra.mrb[0].mxu0 %v373
      %v468 = vpop.f32.mrb[0].mxu0
      %v469 = vadd.f32 0.0, %v468
      %v470 = vpop.f32.mrb[0].mxu0
      %v471 = vpop.f32.mrb[0].mxu0
      %v472 = vadd.f32 0.0, %v471
      %v473 = vpop.f32.mrb[0].mxu0
      %474 = vmatprep.mubr.bf16.mxu0 0
      %475 = vmatmul.mubr.bf16.gmra.mrb[0].mxu0 %v376
      %v476 = vpop.f32.mrb[0].mxu0
      %v477 = vadd.f32 0.0, %v476
      %v478 = vpop.f32.mrb[0].mxu0
      %v479 = vpop.f32.mrb[0].mxu0
      %v480 = vadd.f32 0.0, %v479
      %v481 = vpop.f32.mrb[0].mxu0
      %482 = vmatprep.mubr.bf16.mxu0 0
      %483 = vmatmul.mubr.bf16.gmra.mrb[0].mxu0 %v379
      %v484 = vpop.f32.mrb[0].mxu0
      %v485 = vadd.f32 0.0, %v484
      %v486 = vpop.f32.mrb[0].mxu0
      %v487 = vpop.f32.mrb[0].mxu0
      %v488 = vadd.f32 0.0, %v487
      %v489 = vpop.f32.mrb[0].mxu0
      %490 = vmatprep.mubr.bf16.mxu0 0
      %491 = vmatmul.mubr.bf16.gmra.mrb[0].mxu0 %v382
      %v492 = vpop.f32.mrb[0].mxu0
      %v493 = vadd.f32 0.0, %v492
      %v494 = vpop.f32.mrb[0].mxu0
      %v495 = vpop.f32.mrb[0].mxu0
      %v496 = vadd.f32 0.0, %v495
      %v497 = vpop.f32.mrb[0].mxu0
      %498 = vmatprep.mubr.bf16.mxu0 0
      %499 = vmatmul.mubr.bf16.gmra.mrb[0].mxu0 %v385
      %v500 = vpop.f32.mrb[0].mxu0
      %v501 = vadd.f32 0.0, %v500
      %v502 = vpop.f32.mrb[0].mxu0
      %v503 = vpop.f32.mrb[0].mxu0
      %v504 = vadd.f32 0.0, %v503
      %v505 = vpop.f32.mrb[0].mxu0
      %506 = vmatprep.mubr.bf16.mxu0 0
      %507 = vmatmul.mubr.bf16.gmra.mrb[0].mxu0 %v388
      %v508 = vpop.f32.mrb[0].mxu0
      %v509 = vadd.f32 0.0, %v508
      %v510 = vpop.f32.mrb[0].mxu0
      %v511 = vpop.f32.mrb[0].mxu0
      %v512 = vadd.f32 0.0, %v511
      %v513 = vpop.f32.mrb[0].mxu0
      %514 = vmatprep.mubr.bf16.mxu0 0
      %515 = vmatmul.mubr.bf16.gmra.mrb[0].mxu0 %v391
      %v516 = vpop.f32.mrb[0].mxu0
      %v517 = vadd.f32 0.0, %v516
      %v518 = vpop.f32.mrb[0].mxu0
      %v519 = vpop.f32.mrb[0].mxu0
      %v520 = vadd.f32 0.0, %v519
      %v521 = vpop.f32.mrb[0].mxu0
      %522 = vmatprep.mubr.bf16.mxu0 0
      %523 = vmatmul.mubr.bf16.gmra.mrb[0].mxu0 %v394
      %v524 = vpop.f32.mrb[0].mxu0
      %v525 = vadd.f32 0.0, %v524
      %v526 = vpop.f32.mrb[0].mxu0
      %v527 = vpop.f32.mrb[0].mxu0
      %v528 = vadd.f32 0.0, %v527
      %v529 = vpop.f32.mrb[0].mxu0
      %530 = vmatprep.mubr.bf16.mxu0 0
      %531 = vmatmul.mubr.bf16.gmra.mrb[0].mxu0 %v397
      %v532 = vpop.f32.mrb[0].mxu0
      %v533 = vadd.f32 0.0, %v532
      %v534 = vpop.f32.mrb[0].mxu0
      %v535 = vpop.f32.mrb[0].mxu0
      %v536 = vadd.f32 0.0, %v535
      %v537 = vpop.f32.mrb[0].mxu0
      %538 = vmatprep.mubr.bf16.mxu0 0
      %539 = vmatmul.mubr.bf16.gmra.mrb[0].mxu0 %v400
      %v540 = vpop.f32.mrb[0].mxu0
      %v541 = vadd.f32 0.0, %v540
      %v542 = vpop.f32.mrb[0].mxu0
      %v543 = vpop.f32.mrb[0].mxu0
      %v544 = vadd.f32 0.0, %v543
      %v545 = vpop.f32.mrb[0].mxu0
      %546 = vmatprep.mubr.bf16.mxu0 0
      %547 = vmatmul.mubr.bf16.gmra.mrb[0].mxu0 %v403
      %v548 = vpop.f32.mrb[0].mxu0
      %v549 = vadd.f32 0.0, %v548
      %v550 = vpop.f32.mrb[0].mxu0
      %v551 = vpop.f32.mrb[0].mxu0
      %v552 = vadd.f32 0.0, %v551
      %v553 = vpop.f32.mrb[0].mxu0
      %554 = vmatprep.mubr.bf16.mxu0 0
      %555 = vmatmul.mubr.bf16.gmra.mrb[0].mxu0 %v406
      %v556 = vpop.f32.mrb[0].mxu0
      %v557 = vadd.f32 0.0, %v556
      %v558 = vpop.f32.mrb[0].mxu0
      %v559 = vpop.f32.mrb[0].mxu0
      %v560 = vadd.f32 0.0, %v559
      %v561 = vpop.f32.mrb[0].mxu0
      %562 = vmatprep.mubr.bf16.mxu0 0
      %563 = vmatmul.mubr.bf16.gmra.mrb[0].mxu0 %v409
      %v564 = vpop.f32.mrb[0].mxu0
      %v565 = vadd.f32 0.0, %v564
      %v566 = vpop.f32.mrb[0].mxu0
      %v567 = vpop.f32.mrb[0].mxu0
      %v568 = vadd.f32 0.0, %v567
      %v569 = vpop.f32.mrb[0].mxu0
      %570 = vmatprep.mubr.bf16.mxu0 0
      %571 = vmatmul.mubr.bf16.gmra.mrb[0].mxu0 %v412
      %v572 = vpop.f32.mrb[0].mxu0
      %v573 = vadd.f32 0.0, %v572
      %v574 = vpop.f32.mrb[0].mxu0
      %v575 = vpop.f32.mrb[0].mxu0
      %v576 = vadd.f32 0.0, %v575
      %v577 = vpop.f32.mrb[0].mxu0
      %578 = vdwg.mxu0
      %v611 = vunpack.c.l.b16 %v200
      %v612 = vunpack.c.l.b16 %v201
      %v613 = vunpack.c.l.b16 %v202
      %v614 = vunpack.c.l.b16 %v203
      %v615 = vunpack.c.l.b16 %v204
      %v616 = vunpack.c.l.b16 %v205
      %v617 = vunpack.c.l.b16 %v206
      %v618 = vunpack.c.l.b16 %v207
      %v619 = vunpack.c.l.b16 %v208
      %v620 = vunpack.c.l.b16 %v209
      %v621 = vunpack.c.l.b16 %v210
      %v622 = vunpack.c.l.b16 %v211
      %v623 = vunpack.c.l.b16 %v212
      %v624 = vunpack.c.l.b16 %v213
      %v625 = vunpack.c.l.b16 %v214
      %v626 = vunpack.c.l.b16 %v215
      %v627 = vunpack.c.l.b16 %v216
      %v628 = vunpack.c.l.b16 %v217
      %v629 = vunpack.c.l.b16 %v218
      %v630 = vunpack.c.l.b16 %v219
      %v631 = vunpack.c.l.b16 %v220
      %v632 = vunpack.c.l.b16 %v221
      %v633 = vunpack.c.l.b16 %v222
      %v634 = vunpack.c.l.b16 %v223
      %v635 = vunpack.c.l.b16 %v224
      %v636 = vunpack.c.l.b16 %v225
      %v637 = vunpack.c.l.b16 %v226
      %v638 = vunpack.c.l.b16 %v227
      %v639 = vunpack.c.l.b16 %v228
      %v640 = vunpack.c.l.b16 %v229
      %v641 = vunpack.c.l.b16 %v230
      %v642 = vunpack.c.l.b16 %v231
      %v643 = vpack.c.b16 %v612, %v611
      %v644 = vpack.c.b16 %v614, %v613
      %v645 = vpack.c.b16 %v616, %v615
      %v646 = vpack.c.b16 %v618, %v617
      %v647 = vpack.c.b16 %v620, %v619
      %v648 = vpack.c.b16 %v622, %v621
      %v649 = vpack.c.b16 %v624, %v623
      %v650 = vpack.c.b16 %v626, %v625
      %v651 = vpack.c.b16 %v628, %v627
      %v652 = vpack.c.b16 %v630, %v629
      %v653 = vpack.c.b16 %v632, %v631
      %v654 = vpack.c.b16 %v634, %v633
      %v655 = vpack.c.b16 %v636, %v635
      %v656 = vpack.c.b16 %v638, %v637
      %v657 = vpack.c.b16 %v640, %v639
      %v658 = vpack.c.b16 %v642, %v641
      %v662 = vunpack.c.l.b16 %v232
      %v663 = vunpack.c.l.b16 %v233
      %v664 = vunpack.c.l.b16 %v234
      %v665 = vpack.c.b16 %v663, %v662
      %v666 = vpack.c.b16 %v664, %v664
      %v669 = vsel %vm365, %v643, 0
      %v672 = vsel %vm365, %v644, 0
      %v675 = vsel %vm365, %v645, 0
      %v678 = vsel %vm365, %v646, 0
      %v681 = vsel %vm365, %v647, 0
      %v684 = vsel %vm365, %v648, 0
      %v687 = vsel %vm365, %v649, 0
      %v690 = vsel %vm365, %v650, 0
      %v693 = vsel %vm365, %v651, 0
      %v696 = vsel %vm365, %v652, 0
      %v699 = vsel %vm365, %v653, 0
      %v702 = vsel %vm365, %v654, 0
      %v705 = vsel %vm365, %v655, 0
      %v708 = vsel %vm365, %v656, 0
      %v711 = vsel %vm365, %v657, 0
      %v714 = vsel %vm365, %v658, 0
      %v717 = vsel %vm414, %v666, 0
      %719 = vmatprep.subr.bf16.mxu0 0
      %720 = vmatpush1.bf16.msra.mxu0 %v665
      %721 = vmatprep.subr.bf16.mxu0 0
      %722 = vmatpush1.bf16.msra.mxu0 %v717
      %723 = vmatprep.subr.bf16.mxu0 0
      %724 = vmatpush1.bf16.msra.mxu0 0
      %725 = vmatprep.subr.bf16.mxu0 0
      %726 = vmatpush1.bf16.msra.mxu0 0
      %727 = vmatprep.subr.bf16.mxu0 0
      %728 = vmatpush1.bf16.msra.mxu0 0
      %729 = vmatprep.subr.bf16.mxu0 0
      %730 = vmatpush1.bf16.msra.mxu0 0
      %731 = vmatprep.subr.bf16.mxu0 0
      %732 = vmatpush1.bf16.msra.mxu0 0
      %733 = vmatprep.subr.bf16.mxu0 0
      %734 = vmatpush1.bf16.msra.mxu0 0
      %735 = vmatprep.subr.bf16.mxu0 0
      %736 = vmatpush1.bf16.msra.mxu0 0
      %737 = vmatprep.subr.bf16.mxu0 0
      %738 = vmatpush1.bf16.msra.mxu0 0
      %739 = vmatprep.subr.bf16.mxu0 0
      %740 = vmatpush1.bf16.msra.mxu0 0
      %741 = vmatprep.subr.bf16.mxu0 0
      %742 = vmatpush1.bf16.msra.mxu0 0
      %743 = vmatprep.subr.bf16.mxu0 0
      %744 = vmatpush1.bf16.msra.mxu0 0
      %745 = vmatprep.subr.bf16.mxu0 0
      %746 = vmatpush1.bf16.msra.mxu0 0
      %747 = vmatprep.subr.bf16.mxu0 0
      %748 = vmatpush1.bf16.msra.mxu0 0
      %749 = vmatprep.subr.bf16.mxu0 0
      %750 = vmatpush1.bf16.msra.mxu0 0
      %751 = vmatprep.mubr.bf16.mxu0 0
      %752 = vmatmul.mubr.bf16.gmra.mrb[0].mxu0 %v669
      %v753 = vpop.f32.mrb[0].mxu0
      %v754 = vadd.f32 %v453, %v753
      %v755 = vpop.f32.mrb[0].mxu0
      %v756 = vpop.f32.mrb[0].mxu0
      %v757 = vadd.f32 %v456, %v756
      %v758 = vpop.f32.mrb[0].mxu0
      %759 = vmatprep.mubr.bf16.mxu0 0
      %760 = vmatmul.mubr.bf16.gmra.mrb[0].mxu0 %v672
      %v761 = vpop.f32.mrb[0].mxu0
      %v762 = vadd.f32 %v461, %v761
      %v763 = vpop.f32.mrb[0].mxu0
      %v764 = vpop.f32.mrb[0].mxu0
      %v765 = vadd.f32 %v464, %v764
      %v766 = vpop.f32.mrb[0].mxu0
      %767 = vmatprep.mubr.bf16.mxu0 0
      %768 = vmatmul.mubr.bf16.gmra.mrb[0].mxu0 %v675
      %v769 = vpop.f32.mrb[0].mxu0
      %v770 = vadd.f32 %v469, %v769
      %v771 = vpop.f32.mrb[0].mxu0
      %v772 = vpop.f32.mrb[0].mxu0
      %v773 = vadd.f32 %v472, %v772
      %v774 = vpop.f32.mrb[0].mxu0
      %775 = vmatprep.mubr.bf16.mxu0 0
      %776 = vmatmul.mubr.bf16.gmra.mrb[0].mxu0 %v678
      %v777 = vpop.f32.mrb[0].mxu0
      %v778 = vadd.f32 %v477, %v777
      %v779 = vpop.f32.mrb[0].mxu0
      %v780 = vpop.f32.mrb[0].mxu0
      %v781 = vadd.f32 %v480, %v780
      %v782 = vpop.f32.mrb[0].mxu0
      %783 = vmatprep.mubr.bf16.mxu0 0
      %784 = vmatmul.mubr.bf16.gmra.mrb[0].mxu0 %v681
      %v785 = vpop.f32.mrb[0].mxu0
      %v786 = vadd.f32 %v485, %v785
      %v787 = vpop.f32.mrb[0].mxu0
      %v788 = vpop.f32.mrb[0].mxu0
      %v789 = vadd.f32 %v488, %v788
      %v790 = vpop.f32.mrb[0].mxu0
      %791 = vmatprep.mubr.bf16.mxu0 0
      %792 = vmatmul.mubr.bf16.gmra.mrb[0].mxu0 %v684
      %v793 = vpop.f32.mrb[0].mxu0
      %v794 = vadd.f32 %v493, %v793
      %v795 = vpop.f32.mrb[0].mxu0
      %v796 = vpop.f32.mrb[0].mxu0
      %v797 = vadd.f32 %v496, %v796
      %v798 = vpop.f32.mrb[0].mxu0
      %799 = vmatprep.mubr.bf16.mxu0 0
      %800 = vmatmul.mubr.bf16.gmra.mrb[0].mxu0 %v687
      %v801 = vpop.f32.mrb[0].mxu0
      %v802 = vadd.f32 %v501, %v801
      %v803 = vpop.f32.mrb[0].mxu0
      %v804 = vpop.f32.mrb[0].mxu0
      %v805 = vadd.f32 %v504, %v804
      %v806 = vpop.f32.mrb[0].mxu0
      %807 = vmatprep.mubr.bf16.mxu0 0
      %808 = vmatmul.mubr.bf16.gmra.mrb[0].mxu0 %v690
      %v809 = vpop.f32.mrb[0].mxu0
      %v810 = vadd.f32 %v509, %v809
      %v811 = vpop.f32.mrb[0].mxu0
      %v812 = vpop.f32.mrb[0].mxu0
      %v813 = vadd.f32 %v512, %v812
      %v814 = vpop.f32.mrb[0].mxu0
      %815 = vmatprep.mubr.bf16.mxu0 0
      %816 = vmatmul.mubr.bf16.gmra.mrb[0].mxu0 %v693
      %v817 = vpop.f32.mrb[0].mxu0
      %v818 = vadd.f32 %v517, %v817
      %v819 = vpop.f32.mrb[0].mxu0
      %v820 = vpop.f32.mrb[0].mxu0
      %v821 = vadd.f32 %v520, %v820
      %v822 = vpop.f32.mrb[0].mxu0
      %823 = vmatprep.mubr.bf16.mxu0 0
      %824 = vmatmul.mubr.bf16.gmra.mrb[0].mxu0 %v696
      %v825 = vpop.f32.mrb[0].mxu0
      %v826 = vadd.f32 %v525, %v825
      %v827 = vpop.f32.mrb[0].mxu0
      %v828 = vpop.f32.mrb[0].mxu0
      %v829 = vadd.f32 %v528, %v828
      %v830 = vpop.f32.mrb[0].mxu0
      %831 = vmatprep.mubr.bf16.mxu0 0
      %832 = vmatmul.mubr.bf16.gmra.mrb[0].mxu0 %v699
      %v833 = vpop.f32.mrb[0].mxu0
      %v834 = vadd.f32 %v533, %v833
      %v835 = vpop.f32.mrb[0].mxu0
      %v836 = vpop.f32.mrb[0].mxu0
      %v837 = vadd.f32 %v536, %v836
      %v838 = vpop.f32.mrb[0].mxu0
      %839 = vmatprep.mubr.bf16.mxu0 0
      %840 = vmatmul.mubr.bf16.gmra.mrb[0].mxu0 %v702
      %v841 = vpop.f32.mrb[0].mxu0
      %v842 = vadd.f32 %v541, %v841
      %v843 = vpop.f32.mrb[0].mxu0
      %v844 = vpop.f32.mrb[0].mxu0
      %v845 = vadd.f32 %v544, %v844
      %v846 = vpop.f32.mrb[0].mxu0
      %847 = vmatprep.mubr.bf16.mxu0 0
      %848 = vmatmul.mubr.bf16.gmra.mrb[0].mxu0 %v705
      %v849 = vpop.f32.mrb[0].mxu0
      %v850 = vadd.f32 %v549, %v849
      %v851 = vpop.f32.mrb[0].mxu0
      %v852 = vpop.f32.mrb[0].mxu0
      %v853 = vadd.f32 %v552, %v852
      %v854 = vpop.f32.mrb[0].mxu0
      %855 = vmatprep.mubr.bf16.mxu0 0
      %856 = vmatmul.mubr.bf16.gmra.mrb[0].mxu0 %v708
      %v857 = vpop.f32.mrb[0].mxu0
      %v858 = vadd.f32 %v557, %v857
      %v859 = vpop.f32.mrb[0].mxu0
      %v860 = vpop.f32.mrb[0].mxu0
      %v861 = vadd.f32 %v560, %v860
      %v862 = vpop.f32.mrb[0].mxu0
      %863 = vmatprep.mubr.bf16.mxu0 0
      %864 = vmatmul.mubr.bf16.gmra.mrb[0].mxu0 %v711
      %v865 = vpop.f32.mrb[0].mxu0
      %v866 = vadd.f32 %v565, %v865
      %v867 = vpop.f32.mrb[0].mxu0
      %v868 = vpop.f32.mrb[0].mxu0
      %v869 = vadd.f32 %v568, %v868
      %v870 = vpop.f32.mrb[0].mxu0
      %871 = vmatprep.mubr.bf16.mxu0 0
      %872 = vmatmul.mubr.bf16.gmra.mrb[0].mxu0 %v714
      %v873 = vpop.f32.mrb[0].mxu0
      %v874 = vadd.f32 %v573, %v873
      %v875 = vpop.f32.mrb[0].mxu0
      %v876 = vpop.f32.mrb[0].mxu0
      %v877 = vadd.f32 %v576, %v876
      %v878 = vpop.f32.mrb[0].mxu0
      %879 = vdwg.mxu0
      %s880 = sadd.s32 %s195, 32
      %s881 = sshra.s32 %s880, 3
      %s882 = sand.u32 %s880, 7
      %s883 = smul.addr %s881, 4
      %s884 = scalar_lea.vmem %s183, %s883
      %v885 = vld [vmem:[%s884] sm:$0xf]
      %v886 = vld [vmem:[%s884 + $0x4] sm:$0xf]
      %v887 = vld [vmem:[%s884 + $0x8] sm:$0xf]
      %v888 = vld [vmem:[%s884 + $0xc] sm:$0xf]
      %v889 = vld [vmem:[%s884 + $0x10] sm:$0xf]
      %v890 = vld [vmem:[%s884 + $0x14] sm:$0xf]
      %v891 = vld [vmem:[%s884 + $0x18] sm:$0xf]
      %v892 = vld [vmem:[%s884 + $0x1c] sm:$0xf]
      %v893 = vld [vmem:[%s884 + $0x20] sm:$0xf]
      %v894 = vld [vmem:[%s884 + $0x24] sm:$0xf]
      %v895 = vld [vmem:[%s884 + $0x28] sm:$0xf]
      %v896 = vld [vmem:[%s884 + $0x2c] sm:$0xf]
      %v897 = vld [vmem:[%s884 + $0x30] sm:$0xf]
      %v898 = vld [vmem:[%s884 + $0x34] sm:$0xf]
      %v899 = vld [vmem:[%s884 + $0x38] sm:$0xf]
      %v900 = vld [vmem:[%s884 + $0x3c] sm:$0xf]
      %v901 = vld [vmem:[%s884 + $0x40] sm:$0xf]
      %v902 = vld [vmem:[%s884 + $0x44] sm:$0xf]
      %v903 = vld [vmem:[%s884 + $0x48] sm:$0xf]
      %v904 = vld [vmem:[%s884 + $0x4c] sm:$0xf]
      %v905 = vld [vmem:[%s884 + $0x50] sm:$0xf]
      %v906 = vld [vmem:[%s884 + $0x54] sm:$0xf]
      %v907 = vld [vmem:[%s884 + $0x58] sm:$0xf]
      %v908 = vld [vmem:[%s884 + $0x5c] sm:$0xf]
      %v909 = vld [vmem:[%s884 + $0x60] sm:$0xf]
      %v910 = vld [vmem:[%s884 + $0x64] sm:$0xf]
      %v911 = vld [vmem:[%s884 + $0x68] sm:$0xf]
      %v912 = vld [vmem:[%s884 + $0x6c] sm:$0xf]
      %v913 = vld [vmem:[%s884 + $0x70] sm:$0xf]
      %v914 = vld [vmem:[%s884 + $0x74] sm:$0xf]
      %v915 = vld [vmem:[%s884 + $0x78] sm:$0xf]
      %v916 = vld [vmem:[%s884 + $0x7c] sm:$0xf]
      %s917 = scalar_lea.vmem %s1, 24
      %v918 = vld [vmem:[%s917] sm:$0xf]
      %v919 = vld [vmem:[%s917 + $0x4] sm:$0xf]
      %v920 = vld [vmem:[%s917 + $0x8] sm:$0xf]
      %v953 = vunpack.c.l.b16 %v885
      %v954 = vunpack.c.l.b16 %v886
      %v955 = vunpack.c.l.b16 %v887
      %v956 = vunpack.c.l.b16 %v888
      %v957 = vunpack.c.l.b16 %v889
      %v958 = vunpack.c.l.b16 %v890
      %v959 = vunpack.c.l.b16 %v891
      %v960 = vunpack.c.l.b16 %v892
      %v961 = vunpack.c.l.b16 %v893
      %v962 = vunpack.c.l.b16 %v894
      %v963 = vunpack.c.l.b16 %v895
      %v964 = vunpack.c.l.b16 %v896
      %v965 = vunpack.c.l.b16 %v897
      %v966 = vunpack.c.l.b16 %v898
      %v967 = vunpack.c.l.b16 %v899
      %v968 = vunpack.c.l.b16 %v900
      %v969 = vunpack.c.l.b16 %v901
      %v970 = vunpack.c.l.b16 %v902
      %v971 = vunpack.c.l.b16 %v903
      %v972 = vunpack.c.l.b16 %v904
      %v973 = vunpack.c.l.b16 %v905
      %v974 = vunpack.c.l.b16 %v906
      %v975 = vunpack.c.l.b16 %v907
      %v976 = vunpack.c.l.b16 %v908
      %v977 = vunpack.c.l.b16 %v909
      %v978 = vunpack.c.l.b16 %v910
      %v979 = vunpack.c.l.b16 %v911
      %v980 = vunpack.c.l.b16 %v912
      %v981 = vunpack.c.l.b16 %v913
      %v982 = vunpack.c.l.b16 %v914
      %v983 = vunpack.c.l.b16 %v915
      %v984 = vunpack.c.l.b16 %v916
      %v985 = vpack.c.b16 %v954, %v953
      %v986 = vpack.c.b16 %v956, %v955
      %v987 = vpack.c.b16 %v958, %v957
      %v988 = vpack.c.b16 %v960, %v959
      %v989 = vpack.c.b16 %v962, %v961
      %v990 = vpack.c.b16 %v964, %v963
      %v991 = vpack.c.b16 %v966, %v965
      %v992 = vpack.c.b16 %v968, %v967
      %v993 = vpack.c.b16 %v970, %v969
      %v994 = vpack.c.b16 %v972, %v971
      %v995 = vpack.c.b16 %v974, %v973
      %v996 = vpack.c.b16 %v976, %v975
      %v997 = vpack.c.b16 %v978, %v977
      %v998 = vpack.c.b16 %v980, %v979
      %v999 = vpack.c.b16 %v982, %v981
      %v1000 = vpack.c.b16 %v984, %v983
      %v1004 = vunpack.c.l.b16 %v918
      %v1005 = vunpack.c.l.b16 %v919
      %v1006 = vunpack.c.l.b16 %v920
      %v1007 = vpack.c.b16 %v1005, %v1004
      %v1008 = vpack.c.b16 %v1006, %v1006
      %v1011 = vsel %vm365, %v985, 0
      %v1014 = vsel %vm365, %v986, 0
      %v1017 = vsel %vm365, %v987, 0
      %v1020 = vsel %vm365, %v988, 0
      %v1023 = vsel %vm365, %v989, 0
      %v1026 = vsel %vm365, %v990, 0
      %v1029 = vsel %vm365, %v991, 0
      %v1032 = vsel %vm365, %v992, 0
      %v1035 = vsel %vm365, %v993, 0
      %v1038 = vsel %vm365, %v994, 0
      %v1041 = vsel %vm365, %v995, 0
      %v1044 = vsel %vm365, %v996, 0
      %v1047 = vsel %vm365, %v997, 0
      %v1050 = vsel %vm365, %v998, 0
      %v1053 = vsel %vm365, %v999, 0
      %v1056 = vsel %vm365, %v1000, 0
      %v1059 = vsel %vm414, %v1008, 0
      %1061 = vmatprep.subr.bf16.mxu0 0
      %1062 = vmatpush1.bf16.msra.mxu0 %v1007
      %1063 = vmatprep.subr.bf16.mxu0 0
      %1064 = vmatpush1.bf16.msra.mxu0 %v1059
      %1065 = vmatprep.subr.bf16.mxu0 0
      %1066 = vmatpush1.bf16.msra.mxu0 0
      %1067 = vmatprep.subr.bf16.mxu0 0
      %1068 = vmatpush1.bf16.msra.mxu0 0
      %1069 = vmatprep.subr.bf16.mxu0 0
      %1070 = vmatpush1.bf16.msra.mxu0 0
      %1071 = vmatprep.subr.bf16.mxu0 0
      %1072 = vmatpush1.bf16.msra.mxu0 0
      %1073 = vmatprep.subr.bf16.mxu0 0
      %1074 = vmatpush1.bf16.msra.mxu0 0
      %1075 = vmatprep.subr.bf16.mxu0 0
      %1076 = vmatpush1.bf16.msra.mxu0 0
      %1077 = vmatprep.subr.bf16.mxu0 0
      %1078 = vmatpush1.bf16.msra.mxu0 0
      %1079 = vmatprep.subr.bf16.mxu0 0
      %1080 = vmatpush1.bf16.msra.mxu0 0
      %1081 = vmatprep.subr.bf16.mxu0 0
      %1082 = vmatpush1.bf16.msra.mxu0 0
      %1083 = vmatprep.subr.bf16.mxu0 0
      %1084 = vmatpush1.bf16.msra.mxu0 0
      %1085 = vmatprep.subr.bf16.mxu0 0
      %1086 = vmatpush1.bf16.msra.mxu0 0
      %1087 = vmatprep.subr.bf16.mxu0 0
      %1088 = vmatpush1.bf16.msra.mxu0 0
      %1089 = vmatprep.subr.bf16.mxu0 0
      %1090 = vmatpush1.bf16.msra.mxu0 0
      %1091 = vmatprep.subr.bf16.mxu0 0
      %1092 = vmatpush1.bf16.msra.mxu0 0
      %1093 = vmatprep.mubr.bf16.mxu0 0
      %1094 = vmatmul.mubr.bf16.gmra.mrb[0].mxu0 %v1011
      %v1095 = vpop.f32.mrb[0].mxu0
      %v1096 = vadd.f32 0.0, %v1095
      %v1097 = vpop.f32.mrb[0].mxu0
      %v1098 = vpop.f32.mrb[0].mxu0
      %v1099 = vadd.f32 0.0, %v1098
      %v1100 = vpop.f32.mrb[0].mxu0
      %1101 = vmatprep.mubr.bf16.mxu0 0
      %1102 = vmatmul.mubr.bf16.gmra.mrb[0].mxu0 %v1014
      %v1103 = vpop.f32.mrb[0].mxu0
      %v1104 = vadd.f32 0.0, %v1103
      %v1105 = vpop.f32.mrb[0].mxu0
      %v1106 = vpop.f32.mrb[0].mxu0
      %v1107 = vadd.f32 0.0, %v1106
      %v1108 = vpop.f32.mrb[0].mxu0
      %1109 = vmatprep.mubr.bf16.mxu0 0
      %1110 = vmatmul.mubr.bf16.gmra.mrb[0].mxu0 %v1017
      %v1111 = vpop.f32.mrb[0].mxu0
      %v1112 = vadd.f32 0.0, %v1111
      %v1113 = vpop.f32.mrb[0].mxu0
      %v1114 = vpop.f32.mrb[0].mxu0
      %v1115 = vadd.f32 0.0, %v1114
      %v1116 = vpop.f32.mrb[0].mxu0
      %1117 = vmatprep.mubr.bf16.mxu0 0
      %1118 = vmatmul.mubr.bf16.gmra.mrb[0].mxu0 %v1020
      %v1119 = vpop.f32.mrb[0].mxu0
      %v1120 = vadd.f32 0.0, %v1119
      %v1121 = vpop.f32.mrb[0].mxu0
      %v1122 = vpop.f32.mrb[0].mxu0
      %v1123 = vadd.f32 0.0, %v1122
      %v1124 = vpop.f32.mrb[0].mxu0
      %1125 = vmatprep.mubr.bf16.mxu0 0
      %1126 = vmatmul.mubr.bf16.gmra.mrb[0].mxu0 %v1023
      %v1127 = vpop.f32.mrb[0].mxu0
      %v1128 = vadd.f32 0.0, %v1127
      %v1129 = vpop.f32.mrb[0].mxu0
      %v1130 = vpop.f32.mrb[0].mxu0
      %v1131 = vadd.f32 0.0, %v1130
      %v1132 = vpop.f32.mrb[0].mxu0
      %1133 = vmatprep.mubr.bf16.mxu0 0
      %1134 = vmatmul.mubr.bf16.gmra.mrb[0].mxu0 %v1026
      %v1135 = vpop.f32.mrb[0].mxu0
      %v1136 = vadd.f32 0.0, %v1135
      %v1137 = vpop.f32.mrb[0].mxu0
      %v1138 = vpop.f32.mrb[0].mxu0
      %v1139 = vadd.f32 0.0, %v1138
      %v1140 = vpop.f32.mrb[0].mxu0
      %1141 = vmatprep.mubr.bf16.mxu0 0
      %1142 = vmatmul.mubr.bf16.gmra.mrb[0].mxu0 %v1029
      %v1143 = vpop.f32.mrb[0].mxu0
      %v1144 = vadd.f32 0.0, %v1143
      %v1145 = vpop.f32.mrb[0].mxu0
      %v1146 = vpop.f32.mrb[0].mxu0
      %v1147 = vadd.f32 0.0, %v1146
      %v1148 = vpop.f32.mrb[0].mxu0
      %1149 = vmatprep.mubr.bf16.mxu0 0
      %1150 = vmatmul.mubr.bf16.gmra.mrb[0].mxu0 %v1032
      %v1151 = vpop.f32.mrb[0].mxu0
      %v1152 = vadd.f32 0.0, %v1151
      %v1153 = vpop.f32.mrb[0].mxu0
      %v1154 = vpop.f32.mrb[0].mxu0
      %v1155 = vadd.f32 0.0, %v1154
      %v1156 = vpop.f32.mrb[0].mxu0
      %1157 = vmatprep.mubr.bf16.mxu0 0
      %1158 = vmatmul.mubr.bf16.gmra.mrb[0].mxu0 %v1035
      %v1159 = vpop.f32.mrb[0].mxu0
      %v1160 = vadd.f32 0.0, %v1159
      %v1161 = vpop.f32.mrb[0].mxu0
      %v1162 = vpop.f32.mrb[0].mxu0
      %v1163 = vadd.f32 0.0, %v1162
      %v1164 = vpop.f32.mrb[0].mxu0
      %1165 = vmatprep.mubr.bf16.mxu0 0
      %1166 = vmatmul.mubr.bf16.gmra.mrb[0].mxu0 %v1038
      %v1167 = vpop.f32.mrb[0].mxu0
      %v1168 = vadd.f32 0.0, %v1167
      %v1169 = vpop.f32.mrb[0].mxu0
      %v1170 = vpop.f32.mrb[0].mxu0
      %v1171 = vadd.f32 0.0, %v1170
      %v1172 = vpop.f32.mrb[0].mxu0
      %1173 = vmatprep.mubr.bf16.mxu0 0
      %1174 = vmatmul.mubr.bf16.gmra.mrb[0].mxu0 %v1041
      %v1175 = vpop.f32.mrb[0].mxu0
      %v1176 = vadd.f32 0.0, %v1175
      %v1177 = vpop.f32.mrb[0].mxu0
      %v1178 = vpop.f32.mrb[0].mxu0
      %v1179 = vadd.f32 0.0, %v1178
      %v1180 = vpop.f32.mrb[0].mxu0
      %1181 = vmatprep.mubr.bf16.mxu0 0
      %1182 = vmatmul.mubr.bf16.gmra.mrb[0].mxu0 %v1044
      %v1183 = vpop.f32.mrb[0].mxu0
      %v1184 = vadd.f32 0.0, %v1183
      %v1185 = vpop.f32.mrb[0].mxu0
      %v1186 = vpop.f32.mrb[0].mxu0
      %v1187 = vadd.f32 0.0, %v1186
      %v1188 = vpop.f32.mrb[0].mxu0
      %1189 = vmatprep.mubr.bf16.mxu0 0
      %1190 = vmatmul.mubr.bf16.gmra.mrb[0].mxu0 %v1047
      %v1191 = vpop.f32.mrb[0].mxu0
      %v1192 = vadd.f32 0.0, %v1191
      %v1193 = vpop.f32.mrb[0].mxu0
      %v1194 = vpop.f32.mrb[0].mxu0
      %v1195 = vadd.f32 0.0, %v1194
      %v1196 = vpop.f32.mrb[0].mxu0
      %1197 = vmatprep.mubr.bf16.mxu0 0
      %1198 = vmatmul.mubr.bf16.gmra.mrb[0].mxu0 %v1050
      %v1199 = vpop.f32.mrb[0].mxu0
      %v1200 = vadd.f32 0.0, %v1199
      %v1201 = vpop.f32.mrb[0].mxu0
      %v1202 = vpop.f32.mrb[0].mxu0
      %v1203 = vadd.f32 0.0, %v1202
      %v1204 = vpop.f32.mrb[0].mxu0
      %1205 = vmatprep.mubr.bf16.mxu0 0
      %1206 = vmatmul.mubr.bf16.gmra.mrb[0].mxu0 %v1053
      %v1207 = vpop.f32.mrb[0].mxu0
      %v1208 = vadd.f32 0.0, %v1207
      %v1209 = vpop.f32.mrb[0].mxu0
      %v1210 = vpop.f32.mrb[0].mxu0
      %v1211 = vadd.f32 0.0, %v1210
      %v1212 = vpop.f32.mrb[0].mxu0
      %1213 = vmatprep.mubr.bf16.mxu0 0
      %1214 = vmatmul.mubr.bf16.gmra.mrb[0].mxu0 %v1056
      %v1215 = vpop.f32.mrb[0].mxu0
      %v1216 = vadd.f32 0.0, %v1215
      %v1217 = vpop.f32.mrb[0].mxu0
      %v1218 = vpop.f32.mrb[0].mxu0
      %v1219 = vadd.f32 0.0, %v1218
      %v1220 = vpop.f32.mrb[0].mxu0
      %1221 = vdwg.mxu0
      %v1222 = vadd.f32 %v754, %v1096
      %v1223 = vadd.f32 %v757, %v1099
      %v1224 = vadd.f32 %v762, %v1104
      %v1225 = vadd.f32 %v765, %v1107
      %v1226 = vadd.f32 %v770, %v1112
      %v1227 = vadd.f32 %v773, %v1115
      %v1228 = vadd.f32 %v778, %v1120
      %v1229 = vadd.f32 %v781, %v1123
      %v1230 = vadd.f32 %v786, %v1128
      %v1231 = vadd.f32 %v789, %v1131
      %v1232 = vadd.f32 %v794, %v1136
      %v1233 = vadd.f32 %v797, %v1139
      %v1234 = vadd.f32 %v802, %v1144
      %v1235 = vadd.f32 %v805, %v1147
      %v1236 = vadd.f32 %v810, %v1152
      %v1237 = vadd.f32 %v813, %v1155
      %v1238 = vadd.f32 %v818, %v1160
      %v1239 = vadd.f32 %v821, %v1163
      %v1240 = vadd.f32 %v826, %v1168
      %v1241 = vadd.f32 %v829, %v1171
      %v1242 = vadd.f32 %v834, %v1176
      %v1243 = vadd.f32 %v837, %v1179
      %v1244 = vadd.f32 %v842, %v1184
      %v1245 = vadd.f32 %v845, %v1187
      %v1246 = vadd.f32 %v850, %v1192
      %v1247 = vadd.f32 %v853, %v1195
      %v1248 = vadd.f32 %v858, %v1200
      %v1249 = vadd.f32 %v861, %v1203
      %v1250 = vadd.f32 %v866, %v1208
      %v1251 = vadd.f32 %v869, %v1211
      %v1252 = vadd.f32 %v874, %v1216
      %v1253 = vadd.f32 %v877, %v1219
      %v1254 = vld [vmem:[%s2] sm:$0x1]
      %v1256 = vlaneseq
      %v1257 = vshrl.u32 %v1256, 7
      %v1258 = vsub.s32 0, %v1257
      %v1259 = vrot.slane %v1254, %v1258
      %v1261 = vadd.f32 %v1222, %v1259
      %v1262 = vadd.f32 %v1223, %v1259
      %v1263 = vadd.f32 %v1224, %v1259
      %v1264 = vadd.f32 %v1225, %v1259
      %v1265 = vadd.f32 %v1226, %v1259
      %v1266 = vadd.f32 %v1227, %v1259
      %v1267 = vadd.f32 %v1228, %v1259
      %v1268 = vadd.f32 %v1229, %v1259
      %v1269 = vadd.f32 %v1230, %v1259
      %v1270 = vadd.f32 %v1231, %v1259
      %v1271 = vadd.f32 %v1232, %v1259
      %v1272 = vadd.f32 %v1233, %v1259
      %v1273 = vadd.f32 %v1234, %v1259
      %v1274 = vadd.f32 %v1235, %v1259
      %v1275 = vadd.f32 %v1236, %v1259
      %v1276 = vadd.f32 %v1237, %v1259
      %v1277 = vadd.f32 %v1238, %v1259
      %v1278 = vadd.f32 %v1239, %v1259
      %v1279 = vadd.f32 %v1240, %v1259
      %v1280 = vadd.f32 %v1241, %v1259
      %v1281 = vadd.f32 %v1242, %v1259
      %v1282 = vadd.f32 %v1243, %v1259
      %v1283 = vadd.f32 %v1244, %v1259
      %v1284 = vadd.f32 %v1245, %v1259
      %v1285 = vadd.f32 %v1246, %v1259
      %v1286 = vadd.f32 %v1247, %v1259
      %v1287 = vadd.f32 %v1248, %v1259
      %v1288 = vadd.f32 %v1249, %v1259
      %v1289 = vadd.f32 %v1250, %v1259
      %v1290 = vadd.f32 %v1251, %v1259
      %v1291 = vadd.f32 %v1252, %v1259
      %v1292 = vadd.f32 %v1253, %v1259
      %v1293 = vmax.f32 %v1261, 0.0
      %v1294 = vmax.f32 %v1262, 0.0
      %v1295 = vmax.f32 %v1263, 0.0
      %v1296 = vmax.f32 %v1264, 0.0
      %v1297 = vmax.f32 %v1265, 0.0
      %v1298 = vmax.f32 %v1266, 0.0
      %v1299 = vmax.f32 %v1267, 0.0
      %v1300 = vmax.f32 %v1268, 0.0
      %v1301 = vmax.f32 %v1269, 0.0
      %v1302 = vmax.f32 %v1270, 0.0
      %v1303 = vmax.f32 %v1271, 0.0
      %v1304 = vmax.f32 %v1272, 0.0
      %v1305 = vmax.f32 %v1273, 0.0
      %v1306 = vmax.f32 %v1274, 0.0
      %v1307 = vmax.f32 %v1275, 0.0
      %v1308 = vmax.f32 %v1276, 0.0
      %v1309 = vmax.f32 %v1277, 0.0
      %v1310 = vmax.f32 %v1278, 0.0
      %v1311 = vmax.f32 %v1279, 0.0
      %v1312 = vmax.f32 %v1280, 0.0
      %v1313 = vmax.f32 %v1281, 0.0
      %v1314 = vmax.f32 %v1282, 0.0
      %v1315 = vmax.f32 %v1283, 0.0
      %v1316 = vmax.f32 %v1284, 0.0
      %v1317 = vmax.f32 %v1285, 0.0
      %v1318 = vmax.f32 %v1286, 0.0
      %v1319 = vmax.f32 %v1287, 0.0
      %v1320 = vmax.f32 %v1288, 0.0
      %v1321 = vmax.f32 %v1289, 0.0
      %v1322 = vmax.f32 %v1290, 0.0
      %v1323 = vmax.f32 %v1291, 0.0
      %v1324 = vmax.f32 %v1292, 0.0
      %vm1325 = vcmask 64512
      %1326 = vst.msk [vmem:[%s192] sm:$0xff] %vm1325, %v1293
      %1327 = vst.msk [vmem:[%s192 + $0x8] sm:$0xff] %vm1325, %v1294
      %1328 = vst.msk [vmem:[%s192 + $0x10] sm:$0xff] %vm1325, %v1295
      %1329 = vst.msk [vmem:[%s192 + $0x18] sm:$0xff] %vm1325, %v1296
      %1330 = vst.msk [vmem:[%s192 + $0x20] sm:$0xff] %vm1325, %v1297
      %1331 = vst.msk [vmem:[%s192 + $0x28] sm:$0xff] %vm1325, %v1298
      %1332 = vst.msk [vmem:[%s192 + $0x30] sm:$0xff] %vm1325, %v1299
      %1333 = vst.msk [vmem:[%s192 + $0x38] sm:$0xff] %vm1325, %v1300
      %1334 = vst.msk [vmem:[%s192 + $0x40] sm:$0xff] %vm1325, %v1301
      %1335 = vst.msk [vmem:[%s192 + $0x48] sm:$0xff] %vm1325, %v1302
      %1336 = vst.msk [vmem:[%s192 + $0x50] sm:$0xff] %vm1325, %v1303
      %1337 = vst.msk [vmem:[%s192 + $0x58] sm:$0xff] %vm1325, %v1304
      %1338 = vst.msk [vmem:[%s192 + $0x60] sm:$0xff] %vm1325, %v1305
      %1339 = vst.msk [vmem:[%s192 + $0x68] sm:$0xff] %vm1325, %v1306
      %1340 = vst.msk [vmem:[%s192 + $0x70] sm:$0xff] %vm1325, %v1307
      %1341 = vst.msk [vmem:[%s192 + $0x78] sm:$0xff] %vm1325, %v1308
      %1342 = vst.msk [vmem:[%s192 + $0x80] sm:$0xff] %vm1325, %v1309
      %1343 = vst.msk [vmem:[%s192 + $0x88] sm:$0xff] %vm1325, %v1310
      %1344 = vst.msk [vmem:[%s192 + $0x90] sm:$0xff] %vm1325, %v1311
      %1345 = vst.msk [vmem:[%s192 + $0x98] sm:$0xff] %vm1325, %v1312
      %1346 = vst.msk [vmem:[%s192 + $0xa0] sm:$0xff] %vm1325, %v1313
      %1347 = vst.msk [vmem:[%s192 + $0xa8] sm:$0xff] %vm1325, %v1314
      %1348 = vst.msk [vmem:[%s192 + $0xb0] sm:$0xff] %vm1325, %v1315
      %1349 = vst.msk [vmem:[%s192 + $0xb8] sm:$0xff] %vm1325, %v1316
      %1350 = vst.msk [vmem:[%s192 + $0xc0] sm:$0xff] %vm1325, %v1317
      %1351 = vst.msk [vmem:[%s192 + $0xc8] sm:$0xff] %vm1325, %v1318
      %1352 = vst.msk [vmem:[%s192 + $0xd0] sm:$0xff] %vm1325, %v1319
      %1353 = vst.msk [vmem:[%s192 + $0xd8] sm:$0xff] %vm1325, %v1320
      %1354 = vst.msk [vmem:[%s192 + $0xe0] sm:$0xff] %vm1325, %v1321
      %1355 = vst.msk [vmem:[%s192 + $0xe8] sm:$0xff] %vm1325, %v1322
      %1356 = vst.msk [vmem:[%s192 + $0xf0] sm:$0xff] %vm1325, %v1323
      %1357 = vst.msk [vmem:[%s192 + $0xf8] sm:$0xff] %vm1325, %v1324
      %s1358 = smul.u32 32, %s19
      %p1359 = scmp.lt.s32.totalorder %s18, 1
      %s1360 = scalar_select %p1359, %s18, 1
      %p1361 = scmp.lt.s32.totalorder %s1358, 31
      %s1362 = scalar_select %p1361, %s1358, 31
      %s1363 = smul.addr %s1360, 32
      %s1364 = sadd.s32 %s1362, %s1363
      %s1365 = smul.addr %s1364, 8
      %s1366 = scalar_lea.vmem %s3, %s1365
      // Predicated region
      $region33: #{downsample_layer_forward.4} parent=31 // pred_check
        %p1367 = pneg %p114
      $region34: #{downsample_layer_forward.4} parent=31 // pred_check_branch
        %1369 = sbr.rel (%p1367) target = $region36
      $region35: #{downsample_layer_forward.4} parent=31 // pred_region
        %s1370 = smul.u32 32, %s19
      $region36: #{downsample_layer_forward.4} parent=31 // pred_fallthru
        _
    $region32: #{downsample_layer_forward.4} parent=5 // pred_fallthru
      _
    %p1371 = scmp.le.s32.totalorder 2, %s9
    // Predicated region
    $region37: #{downsample_layer_forward.4} parent=5 // pred_check
      %p1372 = pneg %p1371
    $region38: #{downsample_layer_forward.4} parent=5 // pred_check_branch
      %1374 = sbr.rel (%p1372) target = $region40
    $region39: #{downsample_layer_forward.4} parent=5 // pred_region
      %s1375 = ssub.s32 %s9, 2
      // Predicated region
      $region41: #{downsample_layer_forward.4} parent=39 // pred_check
        %p1376 = pneg %p120
      $region42: #{downsample_layer_forward.4} parent=39 // pred_check_branch
        %1378 = sbr.rel (%p1376) target = $region44
      $region43: #{downsample_layer_forward.4} parent=39 // pred_region
        %s1379 = smul.u32 32, %s21
        %p1380 = scmp.lt.s32.totalorder %s20, 1
        %s1381 = scalar_select %p1380, %s20, 1
        %p1382 = scmp.lt.s32.totalorder %s1379, 31
        %s1383 = scalar_select %p1382, %s1379, 31
        %s1384 = smul.addr %s1381, 32
        %s1385 = sadd.s32 %s1383, %s1384
        %s1386 = smul.addr %s1385, 8
        %s1387 = scalar_lea.vmem %s3, %s1386
      $region44: #{downsample_layer_forward.4} parent=39 // pred_fallthru
        _
    $region40: #{downsample_layer_forward.4} parent=5 // pred_fallthru
      _
  $region6: #{downsample_layer_forward.4} parent=0 // loop_footer
    %s13 = sadd.s32 1, %s9
  $region7: #{downsample_layer_forward.4} parent=0 // loop_footer_branch
    %8 = sbr.rel target = $region3
  $region8: #{downsample_layer_forward.4} parent=0 // loop_exit
    _

// kernel: downsample_layer_forward.5
$region0: #{downsample_layer_forward.5}
  #allocation0 [shape = 'u32[]', space=smem, size = 0x4, offset = 0x4, fixed_abs, tag = 'smem constant byte address 0x4 - core index']
  #allocation1 [shape = 'u32[144,128]{1,0:T(1,128)}', space=vmem, size = 0x12000, scoped, tag = 'internal scratch']
  %s0 = inlined_call_operand.vmem [shape: bf16[2,64,72], index: 0, kind: input, shape index: {}]
  %s1 = inlined_call_operand.vmem [shape: bf16[1,72,8], index: 1, kind: input, shape index: {}]
  %s2 = inlined_call_operand.vmem [shape: f32[1,8], index: 2, kind: input, shape index: {}]
  %s3 = inlined_call_operand.vmem [shape: f32[2,64,8], index: 3, kind: output, shape index: {}]
  %s4 = sld [smem:[#allocation0]]
  $region45: #{downsample_layer_forward.5} parent=0
    _
  %s6 = ssub.s32 1, %s4
  %s7 = scalar_select 0, %s6, %s4
  loop: start=0, step=1, limit=4
  $region2: #{downsample_layer_forward.5} parent=0 // loop_pre_header
    _
  $region3: #{downsample_layer_forward.5} parent=0 // loop_header
    %s9 = sphi 0, %s13
    %p10 = scmp.ge.s32.totalorder %s9, 4
    %s16 = sphi 0, %s28
    %s17 = sphi 0, %s24
    %s18 = sphi 0, %s16
    %s19 = sphi 0, %s17
    %s20 = sphi 0, %s18
    %s21 = sphi 0, %s19
    %s31 = sphi 0, %s33
    %s34 = sphi 0, %s31
    %s35 = sphi 0, %s34
    %s51 = sphi 0, %s35
    %s55 = sphi 0, %s55
    %s57 = sphi 0, %s55
    %s58 = sphi 0, %s57
    %s72 = sphi 0, %s58
    %s76 = sphi 0, %s76
    %s78 = sphi 0, %s76
    %s79 = sphi 0, %s78
    %s93 = sphi 0, %s79
    %s101 = sphi 0, %s103
    %s104 = sphi 0, %s101
    %s105 = sphi 0, %s104
    %s121 = sphi 0, %s105
  $region4: #{downsample_layer_forward.5} parent=0 // loop_header_branch
    %12 = sbr.rel (%p10) target = $region8
  $region5: #{downsample_layer_forward.5} parent=0 // loop_body
    %s14 = ssub.s32 %s9, 1
    %s15 = ssub.s32 %s9, 2
    %s22 = sadd.s32 1, %s17
    %p23 = scmp.ge.s32.totalorder %s22, 1
    %s24 = scalar_select %p23, 0, %s22
    %s25 = sadd.s32 1, %s16
    %s26 = scalar_select %p23, %s25, %s16
    %p27 = scmp.ge.s32.totalorder %s26, 2
    %s28 = scalar_select %p27, 0, %s26
    %s29 = ssub.s32 %s16, %s28
    %p30 = scmp.eq.s32.totalorder %s29, 0
    %s32 = sadd.s32 %s31, 1
    %s33 = scalar_select %p30, %s31, %s32
    %p36 = pneg %p30
    %p37 = scmp.eq.s32.totalorder %s9, 1
    %p38 = por %p36, %p37
    %p39 = scmp.ne.s32.totalorder %s31, %s34
    %p40 = scmp.eq.s32.totalorder %s9, 0
    %p41 = por %p39, %p40
    %p42 = scmp.ne.s32.totalorder %s31, %s34
    %p43 = scmp.eq.s32.totalorder %s14, 1
    %p44 = por %p42, %p43
    %p45 = scmp.ne.s32.totalorder %s34, %s35
    %p46 = scmp.eq.s32.totalorder %s14, 0
    %p47 = por %p45, %p46
    %p48 = scmp.ne.s32.totalorder %s34, %s35
    %p49 = scmp.eq.s32.totalorder %s15, 1
    %p50 = por %p48, %p49
    %p52 = scmp.ne.s32.totalorder %s35, %s51
    %p53 = scmp.eq.s32.totalorder %s15, 0
    %p54 = por %p52, %p53
    %s56 = sadd.s32 %s55, 1
    %p59 = scmp.eq.s32.totalorder %s9, 1
    %p60 = scmp.ne.s32.totalorder %s55, %s57
    %p61 = scmp.eq.s32.totalorder %s9, 0
    %p62 = por %p60, %p61
    %p63 = scmp.ne.s32.totalorder %s55, %s57
    %p64 = scmp.eq.s32.totalorder %s14, 1
    %p65 = por %p63, %p64
    %p66 = scmp.ne.s32.totalorder %s57, %s58
    %p67 = scmp.eq.s32.totalorder %s14, 0
    %p68 = por %p66, %p67
    %p69 = scmp.ne.s32.totalorder %s57, %s58
    %p70 = scmp.eq.s32.totalorder %s15, 1
    %p71 = por %p69, %p70
    %p73 = scmp.ne.s32.totalorder %s58, %s72
    %p74 = scmp.eq.s32.totalorder %s15, 0
    %p75 = por %p73, %p74
    %s77 = sadd.s32 %s76, 1
    %p80 = scmp.eq.s32.totalorder %s9, 1
    %p81 = scmp.ne.s32.totalorder %s76, %s78
    %p82 = scmp.eq.s32.totalorder %s9, 0
    %p83 = por %p81, %p82
    %p84 = scmp.ne.s32.totalorder %s76, %s78
    %p85 = scmp.eq.s32.totalorder %s14, 1
    %p86 = por %p84, %p85
    %p87 = scmp.ne.s32.totalorder %s78, %s79
    %p88 = scmp.eq.s32.totalorder %s14, 0
    %p89 = por %p87, %p88
    %p90 = scmp.ne.s32.totalorder %s78, %s79
    %p91 = scmp.eq.s32.totalorder %s15, 1
    %p92 = por %p90, %p91
    %p94 = scmp.ne.s32.totalorder %s79, %s93
    %p95 = scmp.eq.s32.totalorder %s15, 0
    %p96 = por %p94, %p95
    %s97 = ssub.s32 %s16, %s28
    %s98 = ssub.s32 %s17, %s24
    %s99 = sor.u32 %s97, %s98
    %p100 = scmp.eq.s32.totalorder %s99, 0
    %s102 = sadd.s32 %s101, 1
    %s103 = scalar_select %p100, %s101, %s102
    %p106 = pneg %p100
    %p107 = scmp.eq.s32.totalorder %s9, 1
    %p108 = por %p106, %p107
    %p109 = scmp.ne.s32.totalorder %s101, %s104
    %p110 = scmp.eq.s32.totalorder %s9, 0
    %p111 = por %p109, %p110
    %p112 = scmp.ne.s32.totalorder %s101, %s104
    %p113 = scmp.eq.s32.totalorder %s14, 1
    %p114 = por %p112, %p113
    %p115 = scmp.ne.s32.totalorder %s104, %s105
    %p116 = scmp.eq.s32.totalorder %s14, 0
    %p117 = por %p115, %p116
    %p118 = scmp.ne.s32.totalorder %s104, %s105
    %p119 = scmp.eq.s32.totalorder %s15, 1
    %p120 = por %p118, %p119
    %p122 = scmp.ne.s32.totalorder %s105, %s121
    %p123 = scmp.eq.s32.totalorder %s15, 0
    %p124 = por %p122, %p123
    %p125 = scmp.le.s32.totalorder 1, %s9
    %p126 = scmp.lt.s32.totalorder %s9, 3
    %p127 = pnand %p125, %p126
    %p128 = pneg %p127
    // Predicated region
    $region9: #{downsample_layer_forward.5} parent=5 // pred_check
      _
    $region10: #{downsample_layer_forward.5} parent=5 // pred_check_branch
      %130 = sbr.rel (%p127) target = $region12
    $region11: #{downsample_layer_forward.5} parent=5 // pred_region
      %s131 = ssub.s32 %s9, 1
      // Predicated region
      $region13: #{downsample_layer_forward.5} parent=11 // pred_check
        %p132 = pneg %p68
      $region14: #{downsample_layer_forward.5} parent=11 // pred_check_branch
        %134 = sbr.rel (%p132) target = $region16
      $region15: #{downsample_layer_forward.5} parent=11 // pred_region
        _
      $region16: #{downsample_layer_forward.5} parent=11 // pred_fallthru
        _
      // Predicated region
      $region17: #{downsample_layer_forward.5} parent=11 // pred_check
        %p135 = pneg %p89
      $region18: #{downsample_layer_forward.5} parent=11 // pred_check_branch
        %137 = sbr.rel (%p135) target = $region20
      $region19: #{downsample_layer_forward.5} parent=11 // pred_region
        _
      $region20: #{downsample_layer_forward.5} parent=11 // pred_fallthru
        _
    $region12: #{downsample_layer_forward.5} parent=5 // pred_fallthru
      _
    %p138 = scmp.lt.s32.totalorder %s9, 2
    // Predicated region
    $region21: #{downsample_layer_forward.5} parent=5 // pred_check
      %p139 = pneg %p138
    $region22: #{downsample_layer_forward.5} parent=5 // pred_check_branch
      %141 = sbr.rel (%p139) target = $region24
    $region23: #{downsample_layer_forward.5} parent=5 // pred_region
      // Predicated region
      $region25: #{downsample_layer_forward.5} parent=23 // pred_check
        %p142 = pneg %p41
      $region26: #{downsample_layer_forward.5} parent=23 // pred_check_branch
        %144 = sbr.rel (%p142) target = $region28
      $region27: #{downsample_layer_forward.5} parent=23 // pred_region
        %p145 = scmp.lt.s32.totalorder %s16, 1
        %s146 = scalar_select %p145, %s16, 1
        %s147 = smul.addr %s146, 8
        %s148 = smul.addr %s147, 4
        %s149 = scalar_lea.vmem %s0, %s148
      $region28: #{downsample_layer_forward.5} parent=23 // pred_fallthru
        _
    $region24: #{downsample_layer_forward.5} parent=5 // pred_fallthru
      _
    %p150 = scmp.le.s32.totalorder 1, %s9
    %p151 = scmp.lt.s32.totalorder %s9, 3
    %p152 = pnand %p150, %p151
    %p153 = pneg %p152
    // Predicated region
    $region29: #{downsample_layer_forward.5} parent=5 // pred_check
      _
    $region30: #{downsample_layer_forward.5} parent=5 // pred_check_branch
      %155 = sbr.rel (%p152) target = $region32
    $region31: #{downsample_layer_forward.5} parent=5 // pred_region
      %s156 = ssub.s32 %s9, 1
      %p157 = scmp.lt.s32.totalorder %s18, 1
      %s158 = scalar_select %p157, %s18, 1
      %s159 = smul.addr %s158, 8
      %s160 = smul.addr %s159, 4
      %s161 = scalar_lea.vmem %s0, %s160
      %p162 = pneg %p47
      %p163 = pneg %p44
      %p164 = pneg %p68
      %p165 = pneg %p65
      %p166 = pneg %p89
      %p167 = pneg %p86
      %p168 = pneg %p117
      %p169 = pneg %p114
      %s170 = smul.u32 8, %s19
      %p171 = scmp.lt.s32.totalorder %s18, 1
      %s172 = scalar_select %p171, %s18, 1
      %p173 = scmp.lt.s32.totalorder %s170, 7
      %s174 = scalar_select %p173, %s170, 7
      %s175 = smul.addr %s172, 8
      %s176 = sadd.s32 %s174, %s175
      %s177 = smul.addr %s176, 8
      %s178 = scalar_lea.vmem %s3, %s177
      %p179 = scmp.lt.s32.totalorder %s18, 1
      %s180 = scalar_select %p179, %s18, 1
      %s181 = smul.addr %s180, 8
      %s182 = smul.addr %s181, 4
      %s183 = scalar_lea.vmem %s0, %s182
      %s184 = smul.u32 8, %s19
      %p185 = scmp.lt.s32.totalorder %s18, 1
      %s186 = scalar_select %p185, %s18, 1
      %p187 = scmp.lt.s32.totalorder %s184, 7
      %s188 = scalar_select %p187, %s184, 7
      %s189 = smul.addr %s186, 8
      %s190 = sadd.s32 %s188, %s189
      %s191 = smul.addr %s190, 8
      %s192 = scalar_lea.vmem %s3, %s191
      %s193 = smul.u32 8, %s19
      %s195 = smul.u32 %s19, 64
      %s196 = sshra.s32 %s195, 3
      %s197 = sand.u32 %s195, 7
      %s198 = smul.addr %s196, 4
      %s199 = scalar_lea.vmem %s183, %s198
      %v200 = vld [vmem:[%s199] sm:$0xf]
      %v201 = vld [vmem:[%s199 + $0x4] sm:$0xf]
      %v202 = vld [vmem:[%s199 + $0x8] sm:$0xf]
      %v203 = vld [vmem:[%s199 + $0xc] sm:$0xf]
      %v204 = vld [vmem:[%s199 + $0x10] sm:$0xf]
      %v205 = vld [vmem:[%s199 + $0x14] sm:$0xf]
      %v206 = vld [vmem:[%s199 + $0x18] sm:$0xf]
      %v207 = vld [vmem:[%s199 + $0x1c] sm:$0xf]
      %v208 = vld [vmem:[%s1] sm:$0xf]
      %v209 = vld [vmem:[%s1 + $0x4] sm:$0xf]
      %v210 = vld [vmem:[%s1 + $0x8] sm:$0xf]
      %v211 = vld [vmem:[%s1 + $0xc] sm:$0xf]
      %v212 = vld [vmem:[%s1 + $0x10] sm:$0xf]
      %v213 = vld [vmem:[%s1 + $0x14] sm:$0xf]
      %v214 = vld [vmem:[%s1 + $0x18] sm:$0xf]
      %v215 = vld [vmem:[%s1 + $0x1c] sm:$0xf]
      %v216 = vld [vmem:[%s1 + $0x20] sm:$0xf]
      %v217 = vld [vmem:[%s2] sm:$0x1]
      %v219 = vlaneseq
      %v220 = vshrl.u32 %v219, 7
      %v221 = vsub.s32 0, %v220
      %v222 = vrot.slane %v217, %v221
      %v232 = vunpack.c.l.b16 %v200
      %v233 = vunpack.c.l.b16 %v201
      %v234 = vunpack.c.l.b16 %v202
      %v235 = vunpack.c.l.b16 %v203
      %v236 = vunpack.c.l.b16 %v204
      %v237 = vunpack.c.l.b16 %v205
      %v238 = vunpack.c.l.b16 %v206
      %v239 = vunpack.c.l.b16 %v207
      %v240 = vpack.c.b16 %v233, %v232
      %v241 = vpack.c.b16 %v235, %v234
      %v242 = vpack.c.b16 %v237, %v236
      %v243 = vpack.c.b16 %v239, %v238
      %v253 = vunpack.c.l.b16 %v208
      %v254 = vunpack.c.l.b16 %v209
      %v255 = vunpack.c.l.b16 %v210
      %v256 = vunpack.c.l.b16 %v211
      %v257 = vunpack.c.l.b16 %v212
      %v258 = vunpack.c.l.b16 %v213
      %v259 = vunpack.c.l.b16 %v214
      %v260 = vunpack.c.l.b16 %v215
      %v261 = vunpack.c.l.b16 %v216
      %v262 = vpack.c.b16 %v254, %v253
      %v263 = vpack.c.b16 %v256, %v255
      %v264 = vpack.c.b16 %v258, %v257
      %v265 = vpack.c.b16 %v260, %v259
      %v266 = vpack.c.b16 %v261, %v261
      %vm271 = vcmask 588800
      %v273 = vsel %vm271, %v240, 0
      %v276 = vsel %vm271, %v241, 0
      %v279 = vsel %vm271, %v242, 0
      %v282 = vsel %vm271, %v243, 0
      %vm284 = vcmask 1043456
      %v286 = vsel %vm284, %v266, 0
      %288 = vmatprep.subr.bf16.mxu0 0
      %289 = vmatpush1.bf16.msra.mxu0 %v262
      %290 = vmatprep.subr.bf16.mxu0 0
      %291 = vmatpush1.bf16.msra.mxu0 %v263
      %292 = vmatprep.subr.bf16.mxu0 0
      %293 = vmatpush1.bf16.msra.mxu0 %v264
      %294 = vmatprep.subr.bf16.mxu0 0
      %295 = vmatpush1.bf16.msra.mxu0 %v265
      %296 = vmatprep.subr.bf16.mxu0 0
      %297 = vmatpush1.bf16.msra.mxu0 %v286
      %298 = vmatprep.subr.bf16.mxu0 0
      %299 = vmatpush1.bf16.msra.mxu0 0
      %300 = vmatprep.subr.bf16.mxu0 0
      %301 = vmatpush1.bf16.msra.mxu0 0
      %302 = vmatprep.subr.bf16.mxu0 0
      %303 = vmatpush1.bf16.msra.mxu0 0
      %304 = vmatprep.subr.bf16.mxu0 0
      %305 = vmatpush1.bf16.msra.mxu0 0
      %306 = vmatprep.subr.bf16.mxu0 0
      %307 = vmatpush1.bf16.msra.mxu0 0
      %308 = vmatprep.subr.bf16.mxu0 0
      %309 = vmatpush1.bf16.msra.mxu0 0
      %310 = vmatprep.subr.bf16.mxu0 0
      %311 = vmatpush1.bf16.msra.mxu0 0
      %312 = vmatprep.subr.bf16.mxu0 0
      %313 = vmatpush1.bf16.msra.mxu0 0
      %314 = vmatprep.subr.bf16.mxu0 0
      %315 = vmatpush1.bf16.msra.mxu0 0
      %316 = vmatprep.subr.bf16.mxu0 0
      %317 = vmatpush1.bf16.msra.mxu0 0
      %318 = vmatprep.subr.bf16.mxu0 0
      %319 = vmatpush1.bf16.msra.mxu0 0
      %320 = vmatprep.mubr.bf16.mxu0 0
      %321 = vmatmul.mubr.bf16.gmra.mrb[0].mxu0 %v273
      %v322 = vpop.f32.mrb[0].mxu0
      %v323 = vadd.f32 %v222, %v322
      %v324 = vpop.f32.mrb[0].mxu0
      %v325 = vpop.f32.mrb[0].mxu0
      %v326 = vadd.f32 %v222, %v325
      %v327 = vpop.f32.mrb[0].mxu0
      %328 = vmatprep.mubr.bf16.mxu0 0
      %329 = vmatmul.mubr.bf16.gmra.mrb[0].mxu0 %v276
      %v330 = vpop.f32.mrb[0].mxu0
      %v331 = vadd.f32 %v222, %v330
      %v332 = vpop.f32.mrb[0].mxu0
      %v333 = vpop.f32.mrb[0].mxu0
      %v334 = vadd.f32 %v222, %v333
      %v335 = vpop.f32.mrb[0].mxu0
      %336 = vmatprep.mubr.bf16.mxu0 0
      %337 = vmatmul.mubr.bf16.gmra.mrb[0].mxu0 %v279
      %v338 = vpop.f32.mrb[0].mxu0
      %v339 = vadd.f32 %v222, %v338
      %v340 = vpop.f32.mrb[0].mxu0
      %v341 = vpop.f32.mrb[0].mxu0
      %v342 = vadd.f32 %v222, %v341
      %v343 = vpop.f32.mrb[0].mxu0
      %344 = vmatprep.mubr.bf16.mxu0 0
      %345 = vmatmul.mubr.bf16.gmra.mrb[0].mxu0 %v282
      %v346 = vpop.f32.mrb[0].mxu0
      %v347 = vadd.f32 %v222, %v346
      %v348 = vpop.f32.mrb[0].mxu0
      %v349 = vpop.f32.mrb[0].mxu0
      %v350 = vadd.f32 %v222, %v349
      %v351 = vpop.f32.mrb[0].mxu0
      %352 = vdwg.mxu0
      %v353 = vmax.f32 %v323, 0.0
      %v354 = vmax.f32 %v326, 0.0
      %v355 = vmax.f32 %v331, 0.0
      %v356 = vmax.f32 %v334, 0.0
      %v357 = vmax.f32 %v339, 0.0
      %v358 = vmax.f32 %v342, 0.0
      %v359 = vmax.f32 %v347, 0.0
      %v360 = vmax.f32 %v350, 0.0
      %vm361 = vcmask 64512
      %362 = vst.msk [vmem:[%s192] sm:$0xff] %vm361, %v353
      %363 = vst.msk [vmem:[%s192 + $0x8] sm:$0xff] %vm361, %v354
      %364 = vst.msk [vmem:[%s192 + $0x10] sm:$0xff] %vm361, %v355
      %365 = vst.msk [vmem:[%s192 + $0x18] sm:$0xff] %vm361, %v356
      %366 = vst.msk [vmem:[%s192 + $0x20] sm:$0xff] %vm361, %v357
      %367 = vst.msk [vmem:[%s192 + $0x28] sm:$0xff] %vm361, %v358
      %368 = vst.msk [vmem:[%s192 + $0x30] sm:$0xff] %vm361, %v359
      %369 = vst.msk [vmem:[%s192 + $0x38] sm:$0xff] %vm361, %v360
      %s370 = smul.u32 8, %s19
      %p371 = scmp.lt.s32.totalorder %s18, 1
      %s372 = scalar_select %p371, %s18, 1
      %p373 = scmp.lt.s32.totalorder %s370, 7
      %s374 = scalar_select %p373, %s370, 7
      %s375 = smul.addr %s372, 8
      %s376 = sadd.s32 %s374, %s375
      %s377 = smul.addr %s376, 8
      %s378 = scalar_lea.vmem %s3, %s377
      // Predicated region
      $region33: #{downsample_layer_forward.5} parent=31 // pred_check
        %p379 = pneg %p114
      $region34: #{downsample_layer_forward.5} parent=31 // pred_check_branch
        %381 = sbr.rel (%p379) target = $region36
      $region35: #{downsample_layer_forward.5} parent=31 // pred_region
        %s382 = smul.u32 8, %s19
      $region36: #{downsample_layer_forward.5} parent=31 // pred_fallthru
        _
    $region32: #{downsample_layer_forward.5} parent=5 // pred_fallthru
      _
    %p383 = scmp.le.s32.totalorder 2, %s9
    // Predicated region
    $region37: #{downsample_layer_forward.5} parent=5 // pred_check
      %p384 = pneg %p383
    $region38: #{downsample_layer_forward.5} parent=5 // pred_check_branch
      %386 = sbr.rel (%p384) target = $region40
    $region39: #{downsample_layer_forward.5} parent=5 // pred_region
      %s387 = ssub.s32 %s9, 2
      // Predicated region
      $region41: #{downsample_layer_forward.5} parent=39 // pred_check
        %p388 = pneg %p120
      $region42: #{downsample_layer_forward.5} parent=39 // pred_check_branch
        %390 = sbr.rel (%p388) target = $region44
      $region43: #{downsample_layer_forward.5} parent=39 // pred_region
        %s391 = smul.u32 8, %s21
        %p392 = scmp.lt.s32.totalorder %s20, 1
        %s393 = scalar_select %p392, %s20, 1
        %p394 = scmp.lt.s32.totalorder %s391, 7
        %s395 = scalar_select %p394, %s391, 7
        %s396 = smul.addr %s393, 8
        %s397 = sadd.s32 %s395, %s396
        %s398 = smul.addr %s397, 8
        %s399 = scalar_lea.vmem %s3, %s398
      $region44: #{downsample_layer_forward.5} parent=39 // pred_fallthru
        _
    $region40: #{downsample_layer_forward.5} parent=5 // pred_fallthru
      _
  $region6: #{downsample_layer_forward.5} parent=0 // loop_footer
    %s13 = sadd.s32 1, %s9
  $region7: #{downsample_layer_forward.5} parent=0 // loop_footer_branch
    %8 = sbr.rel target = $region3
  $region8: #{downsample_layer_forward.5} parent=0 // loop_exit
    _

</llo_original>
